<compile_context>
chip_gen: v7x
topology: tpu7x:2x2x1
jax: 0.10.0
libtpu: 0.0.40
codegen_flags: <defaults>
</compile_context>

<pallas_src>
import functools

import jax
import jax.numpy as jnp
from jax.experimental import pallas as pl
from jax.experimental.pallas import tpu as pltpu


# ----------------------------------------------------------------------------
# Helpers
# ----------------------------------------------------------------------------
def _round_up(n, m):
    return (n + m - 1) // m * m


def _default_max_chunk(bp):
    """Timesteps per grid step: target t_chunk*Bp rows for the chunk matmul.

    256 rows fills the 256-wide MXU on v6e/v7x; 128 is enough on v5e (and
    larger chunks there only add VMEM pressure).
    """
    target_rows = 256
    try:
        kind = jax.devices()[0].device_kind.lower()
        if ("v5 lite" in kind) or ("v5e" in kind) or ("v5lite" in kind):
            target_rows = 128
    except Exception:
        pass
    return max(1, min(32, target_rows // bp))


def _pick_time_chunk(t, max_chunk):
    if t <= max_chunk:
        return t
    # Prefer a divisor of T (no padded timesteps); otherwise pad + mask tail.
    for c in range(max_chunk, max_chunk // 2, -1):
        if t % c == 0:
            return c
    return max_chunk


def _vmem_limit_bytes(layers, wfc, t_chunk, bp, ip0, hp, op, wbytes):
    h4 = 4 * hp
    need = 2 * t_chunk * bp * ip0 * 4                 # x chunk, double-buffered
    for lp in layers:
        need += (lp["wih_t"].size + lp["whh_t"].size) * wbytes   # Buffered(1)
        need += h4 * 4                                            # bias
    need += 2 * h4 * 4                                # gate scale / offset
    need += wfc.size * wbytes + op * 4                # fc weight + bias
    need += 2 * bp * op * 4                           # output block
    need += 2 * len(layers) * bp * hp * 4             # h/c state scratch
    need += t_chunk * bp * h4 * 4                     # gx scratch
    need += t_chunk * bp * hp * 4                     # inter-layer hidden chunk
    # 50% headroom; clamp.  (On v7x, 64 MiB/TC physical: re-derive at prod H.)
    return int(min(max(int(need * 1.5), 32 * 1024 * 1024), 100 * 1024 * 1024))


# ----------------------------------------------------------------------------
# Fused multi-layer LSTM + FC kernel
# ----------------------------------------------------------------------------
def _fused_lstm_fc_kernel(num_layers, t_chunk, bp, hp, t_true, needs_mask,
                          unroll, *refs):
    """Process one time chunk through all LSTM layers; fuse FC on last step.

    refs layout:
      x_ref                              (t_chunk*bp, Ip0)  f32
      [wih_l (Ipl,4Hp), whh_l (Hp,4Hp), b_l (1,4Hp)] * num_layers
      gscale (1,4Hp), goff (1,4Hp), wfc (Hp,Op), bfc (1,Op)
      out_ref (bp, Op)
      scratch: h_sc (L,bp,Hp), c_sc (L,bp,Hp), gx_sc (t_chunk*bp,4Hp),
               hbuf (t_chunk*bp,Hp)
    """
    n_in = 1 + 3 * num_layers + 4
    x_ref = refs[0]
    layer_refs = refs[1:1 + 3 * num_layers]
    gscale_ref, goff_ref, wfc_ref, bfc_ref = refs[1 + 3 * num_layers:n_in]
    out_ref = refs[n_in]
    h_sc, c_sc, gx_sc, hbuf = refs[n_in + 1:]

    chunk = pl.program_id(0)

    @pl.when(chunk == 0)
    def _():
        h_sc[...] = jnp.zeros_like(h_sc)
        c_sc[...] = jnp.zeros_like(c_sc)

    # Hoisted broadcasts (JAX does not CSE broadcast_in_dim inside the loop).
    gscale = jnp.broadcast_to(gscale_ref[...], (bp, 4 * hp))
    goff = jnp.broadcast_to(goff_ref[...], (bp, 4 * hp))

    h_last = None
    for l in range(num_layers):
        wih_ref, whh_ref, b_ref = layer_refs[3 * l:3 * l + 3]
        wih = wih_ref[...]
        whh = whh_ref[...]
        inp = x_ref[...] if l == 0 else hbuf[...]

        # Input projection for the whole chunk: one big MXU matmul per layer,
        # hoisted out of the sequential recurrence, staged into VMEM scratch.
        gx_sc[...] = jnp.dot(inp.astype(wih.dtype), wih,
                             preferred_element_type=jnp.float32) + b_ref[...]

        last_layer = (l == num_layers - 1)

        def step(t, carry, whh=whh, last_layer=last_layer):
            h, c = carry
            row = pl.multiple_of(t * bp, bp)
            g = gx_sc[pl.ds(row, bp), :] + jnp.dot(
                h.astype(whh.dtype), whh, preferred_element_type=jnp.float32)
            # 0.5 was folded into the i/f/o weight columns + bias, so one wide
            # tanh + per-lane affine yields sigmoid for i/f/o and tanh for g.
            gt = jnp.tanh(g) * gscale + goff
            c_new = gt[:, hp:2 * hp] * c + gt[:, :hp] * gt[:, 2 * hp:3 * hp]
            h_new = gt[:, 3 * hp:] * jnp.tanh(c_new)
            if needs_mask:
                valid = chunk * t_chunk + t < t_true
                h_new = jnp.where(valid, h_new, h)
                c_new = jnp.where(valid, c_new, c)
            if not last_layer:
                hbuf[pl.ds(row, bp), :] = h_new   # feeds layer l+1 (stays in VMEM)
            return (h_new, c_new)

        h, c = jax.lax.fori_loop(0, t_chunk, step, (h_sc[l], c_sc[l]),
                                 unroll=unroll)
        h_sc[l] = h
        c_sc[l] = c
        h_last = h

    @pl.when(chunk == pl.num_programs(0) - 1)
    def _():
        wfc = wfc_ref[...]
        out_ref[...] = jnp.dot(h_last.astype(wfc.dtype), wfc,
                               preferred_element_type=jnp.float32) + bfc_ref[...]


# ----------------------------------------------------------------------------
# One-time parameter preparation (transpose, pad, fuse biases, fold sigmoid
# scale, cast weights) — hoisted out of the forward pass.
# ----------------------------------------------------------------------------
def prepare_params(params, hidden_size, output_size, matmul_dtype=jnp.bfloat16):
    H = hidden_size
    Hp = _round_up(H, 128)
    Op = _round_up(output_size, 128)
    # Gate order in PyTorch: i, f, g, o.  sigmoid(x) = 0.5*tanh(0.5*x) + 0.5,
    # so fold the 0.5 argument scale into the i/f/o weight columns + bias.
    gate_pre = (0.5, 0.5, 1.0, 0.5)
    gate_scale_v = (0.5, 0.5, 1.0, 0.5)
    gate_off_v = (0.5, 0.5, 0.0, 0.5)

    layers = []
    for p in params["lstm"]:
        in_sz = p["w_ih"].shape[1]
        Ip = _round_up(in_sz, 128)
        wih_t = jnp.zeros((Ip, 4 * Hp), jnp.float32)
        whh_t = jnp.zeros((Hp, 4 * Hp), jnp.float32)
        bias = jnp.zeros((1, 4 * Hp), jnp.float32)
        for g in range(4):   # gate-major: each gate owns a full Hp lane slice
            s = gate_pre[g]
            wih_t = wih_t.at[:in_sz, g * Hp:g * Hp + H].set(
                s * p["w_ih"][g * H:(g + 1) * H, :].T)
            whh_t = whh_t.at[:H, g * Hp:g * Hp + H].set(
                s * p["w_hh"][g * H:(g + 1) * H, :].T)
            bias = bias.at[0, g * Hp:g * Hp + H].set(
                s * (p["b_ih"][g * H:(g + 1) * H]
                     + p["b_hh"][g * H:(g + 1) * H]))
        layers.append({"wih_t": wih_t.astype(matmul_dtype),
                       "whh_t": whh_t.astype(matmul_dtype),
                       "bias": bias})

    gate_scale = jnp.repeat(jnp.array(gate_scale_v, jnp.float32),
                            Hp).reshape(1, 4 * Hp)
    gate_offset = jnp.repeat(jnp.array(gate_off_v, jnp.float32),
                             Hp).reshape(1, 4 * Hp)
    wfc = jnp.zeros((Hp, Op), jnp.float32).at[:H, :output_size].set(
        params["fc_w"].T)
    bfc = jnp.zeros((1, Op), jnp.float32).at[0, :output_size].set(
        params["fc_b"])
    return {"layers": layers, "gate_scale": gate_scale,
            "gate_offset": gate_offset,
            "wfc": wfc.astype(matmul_dtype), "bfc": bfc}


# ----------------------------------------------------------------------------
# Forward pass (equivalent of LSTMModel.forward)
# ----------------------------------------------------------------------------
def lstm_model_forward(x_btf, prepped, output_size):
    """x_btf: (B, T, input_size) batch_first.  Returns (B, output_size)."""
    B, T, I = x_btf.shape
    layers = prepped["layers"]
    num_layers = len(layers)
    Ip0 = layers[0]["wih_t"].shape[0]
    Hp = layers[0]["whh_t"].shape[0]
    Op = prepped["wfc"].shape[1]
    H4 = 4 * Hp
    Bp = _round_up(B, 8)

    t_chunk = _pick_time_chunk(T, _default_max_chunk(Bp))
    n_chunks = pl.cdiv(T, t_chunk)
    Tp = n_chunks * t_chunk

    # Time-major, padded, flattened to (Tp*Bp, Ip0) so every block / slice is
    # sublane-aligned and lane-dense (no in-kernel reshape).
    x = jnp.transpose(x_btf, (1, 0, 2)).astype(jnp.float32)     # (T, B, I)
    x = jnp.pad(x, ((0, Tp - T), (0, Bp - B), (0, Ip0 - I)))
    x = x.reshape(Tp * Bp, Ip0)

    wbytes = jnp.dtype(layers[0]["wih_t"].dtype).itemsize
    vmem_limit = _vmem_limit_bytes(layers, prepped["wfc"], t_chunk, Bp, Ip0,
                                   Hp, Op, wbytes)

    const = lambda c: (0, 0)
    in_specs = [pl.BlockSpec((t_chunk * Bp, Ip0), lambda c: (c, 0))]
    args = [x]
    for lp in layers:
        ip_l = lp["wih_t"].shape[0]
        in_specs += [
            pl.BlockSpec((ip_l, H4), const, pipeline_mode=pl.Buffered(1)),
            pl.BlockSpec((Hp, H4), const, pipeline_mode=pl.Buffered(1)),
            pl.BlockSpec((1, H4), const, pipeline_mode=pl.Buffered(1)),
        ]
        args += [lp["wih_t"], lp["whh_t"], lp["bias"]]
    in_specs += [
        pl.BlockSpec((1, H4), const, pipeline_mode=pl.Buffered(1)),
        pl.BlockSpec((1, H4), const, pipeline_mode=pl.Buffered(1)),
        pl.BlockSpec((Hp, Op), const, pipeline_mode=pl.Buffered(1)),
        pl.BlockSpec((1, Op), const, pipeline_mode=pl.Buffered(1)),
    ]
    args += [prepped["gate_scale"], prepped["gate_offset"],
             prepped["wfc"], prepped["bfc"]]

    flops = 2 * Bp * Hp * Op
    for lp in layers:
        flops += 2 * Tp * Bp * (lp["wih_t"].shape[0] + Hp) * H4
    cost = pl.CostEstimate(
        flops=int(flops),
        transcendentals=int(num_layers * Tp * Bp * 5 * Hp),
        bytes_accessed=int(
            x.size * 4 + Bp * Op * 4
            + sum(lp["wih_t"].size + lp["whh_t"].size for lp in layers) * wbytes
            + (num_layers + 2) * H4 * 4
            + prepped["wfc"].size * wbytes + Op * 4))

    kernel = functools.partial(_fused_lstm_fc_kernel, num_layers, t_chunk,
                               Bp, Hp, T, Tp != T, min(8, t_chunk))

    out = pl.pallas_call(
        kernel,
        out_shape=jax.ShapeDtypeStruct((Bp, Op), jnp.float32),
        grid_spec=pltpu.PrefetchScalarGridSpec(
            num_scalar_prefetch=0,
            grid=(n_chunks,),
            in_specs=in_specs,
            out_specs=pl.BlockSpec((Bp, Op), const),
            scratch_shapes=[
                pltpu.VMEM((num_layers, Bp, Hp), jnp.float32),   # h state
                pltpu.VMEM((num_layers, Bp, Hp), jnp.float32),   # c state
                pltpu.VMEM((t_chunk * Bp, H4), jnp.float32),     # gx chunk
                pltpu.VMEM((t_chunk * Bp, Hp), jnp.float32),     # layer->layer h
            ]),
        compiler_params=pltpu.CompilerParams(
            # Time axis must stay sequential: h/c carries across grid steps.
            dimension_semantics=("arbitrary",),
            vmem_limit_bytes=vmem_limit),
        cost_estimate=cost,
    )(*args)
    return out[:B, :output_size]


# ----------------------------------------------------------------------------
# Deterministic parameter init (PyTorch-style uniform(-1/sqrt(H), 1/sqrt(H)))
# ----------------------------------------------------------------------------
def init_params(key, input_size, hidden_size, num_layers, output_size):
    bound = 1.0 / float(hidden_size) ** 0.5
    lstm_params = []
    for layer in range(num_layers):
        in_sz = input_size if layer == 0 else hidden_size
        key, k1, k2, k3, k4 = jax.random.split(key, 5)
        lstm_params.append({
            "w_ih": jax.random.uniform(k1, (4 * hidden_size, in_sz),
                                       jnp.float32, -bound, bound),
            "w_hh": jax.random.uniform(k2, (4 * hidden_size, hidden_size),
                                       jnp.float32, -bound, bound),
            "b_ih": jax.random.uniform(k3, (4 * hidden_size,),
                                       jnp.float32, -bound, bound),
            "b_hh": jax.random.uniform(k4, (4 * hidden_size,),
                                       jnp.float32, -bound, bound),
        })
    key, k5, k6 = jax.random.split(key, 3)
    return {
        "lstm": lstm_params,
        "fc_w": jax.random.uniform(k5, (output_size, hidden_size),
                                   jnp.float32, -bound, bound),
        "fc_b": jax.random.uniform(k6, (output_size,),
                                   jnp.float32, -bound, bound),
    }


# ----------------------------------------------------------------------------
# Pure-JAX reference (same math as nn.LSTM + nn.Linear) for sanity checking
# ----------------------------------------------------------------------------
def reference_forward(x_btf, params):
    x = jnp.transpose(x_btf, (1, 0, 2))
    for p in params["lstm"]:
        H = p["w_hh"].shape[1]
        B = x.shape[1]
        h = jnp.zeros((B, H), jnp.float32)
        c = jnp.zeros((B, H), jnp.float32)
        outs = []
        for t in range(x.shape[0]):
            g = x[t] @ p["w_ih"].T + h @ p["w_hh"].T + p["b_ih"] + p["b_hh"]
            i = jax.nn.sigmoid(g[:, 0 * H:1 * H])
            f = jax.nn.sigmoid(g[:, 1 * H:2 * H])
            gg = jnp.tanh(g[:, 2 * H:3 * H])
            o = jax.nn.sigmoid(g[:, 3 * H:4 * H])
            c = f * c + i * gg
            h = o * jnp.tanh(c)
            outs.append(h)
        x = jnp.stack(outs, axis=0)
    return x[-1] @ params["fc_w"].T + params["fc_b"]


if __name__ == "__main__":
    B, T = 2, 8
    input_size, hidden_size, num_layers, output_size = 4, 32, 2, 4

    key = jax.random.PRNGKey(0)
    key, kx = jax.random.split(key)
    x = jax.random.normal(kx, (B, T, input_size), jnp.float32)
    params = init_params(key, input_size, hidden_size, num_layers, output_size)
    ref = reference_forward(x, params)

    fwd = jax.jit(functools.partial(lstm_model_forward,
                                    output_size=output_size))

    # 1) f32-weight path: exact numerics check against the f32 reference.
    prepped_f32 = prepare_params(params, hidden_size, output_size,
                                 matmul_dtype=jnp.float32)
    out_f32 = jax.block_until_ready(fwd(x, prepped_f32))
    assert out_f32.shape == (B, output_size)
    assert jnp.allclose(out_f32, ref, atol=1e-4, rtol=1e-4), (out_f32, ref)

    # 2) bf16-weight path (native MXU / production default): looser tolerance
    #    accounts for bf16 weight + operand rounding through the recurrence.
    prepped_bf16 = prepare_params(params, hidden_size, output_size,
                                  matmul_dtype=jnp.bfloat16)
    out_bf16 = jax.block_until_ready(fwd(x, prepped_bf16))
    assert out_bf16.shape == (B, output_size)
    assert jnp.allclose(out_bf16, ref, atol=5e-2, rtol=5e-2), (out_bf16, ref)

    print("KERNEL_OK")
</pallas_src>

<mosaic_0001>
module attributes {stable_mosaic.version = 11 : i64} {
  func.func @_fused_lstm_fc_kernel(%arg0: i32, %arg1: memref<64x128xf32, #tpu.memory_space<vmem>>, %arg2: memref<128x512xf32, #tpu.memory_space<vmem>>, %arg3: memref<128x512xf32, #tpu.memory_space<vmem>>, %arg4: memref<1x512xf32, #tpu.memory_space<vmem>>, %arg5: memref<128x512xf32, #tpu.memory_space<vmem>>, %arg6: memref<128x512xf32, #tpu.memory_space<vmem>>, %arg7: memref<1x512xf32, #tpu.memory_space<vmem>>, %arg8: memref<1x512xf32, #tpu.memory_space<vmem>>, %arg9: memref<1x512xf32, #tpu.memory_space<vmem>>, %arg10: memref<128x128xf32, #tpu.memory_space<vmem>>, %arg11: memref<1x128xf32, #tpu.memory_space<vmem>>, %arg12: memref<8x128xf32, #tpu.memory_space<vmem>>, %arg13: memref<2x8x128xf32, #tpu.memory_space<vmem>>, %arg14: memref<2x8x128xf32, #tpu.memory_space<vmem>>, %arg15: memref<64x512xf32, #tpu.memory_space<vmem>>, %arg16: memref<64x128xf32, #tpu.memory_space<vmem>>) attributes {dimension_semantics = [#tpu.dimension_semantics<arbitrary>], iteration_bounds = array<i64: 1>, scalar_prefetch = 0 : i64, scratch_operands = 4 : i64, tpu.core_type = #tpu.core_type<tc>, window_params = [{transform_indices = @transform_0, window_bounds = array<i64: 64, 128>}, {pipeline_mode = #tpu.pipeline_mode<synchronous>, transform_indices = @transform_1, window_bounds = array<i64: 128, 512>}, {pipeline_mode = #tpu.pipeline_mode<synchronous>, transform_indices = @transform_2, window_bounds = array<i64: 128, 512>}, {pipeline_mode = #tpu.pipeline_mode<synchronous>, transform_indices = @transform_3, window_bounds = array<i64: 1, 512>}, {pipeline_mode = #tpu.pipeline_mode<synchronous>, transform_indices = @transform_4, window_bounds = array<i64: 128, 512>}, {pipeline_mode = #tpu.pipeline_mode<synchronous>, transform_indices = @transform_5, window_bounds = array<i64: 128, 512>}, {pipeline_mode = #tpu.pipeline_mode<synchronous>, transform_indices = @transform_6, window_bounds = array<i64: 1, 512>}, {pipeline_mode = #tpu.pipeline_mode<synchronous>, transform_indices = @transform_7, window_bounds = array<i64: 1, 512>}, {pipeline_mode = #tpu.pipeline_mode<synchronous>, transform_indices = @transform_8, window_bounds = array<i64: 1, 512>}, {pipeline_mode = #tpu.pipeline_mode<synchronous>, transform_indices = @transform_9, window_bounds = array<i64: 128, 128>}, {pipeline_mode = #tpu.pipeline_mode<synchronous>, transform_indices = @transform_10, window_bounds = array<i64: 1, 128>}, {pipeline_mode = #tpu.pipeline_mode<synchronous>, transform_indices = @transform_11, window_bounds = array<i64: 8, 128>}]} {
    %c0_i32 = arith.constant 0 : i32
    %0 = arith.cmpi eq, %arg0, %c0_i32 : i32
    %1 = arith.extui %0 : i1 to i32
    %c0_i32_0 = arith.constant 0 : i32
    %2 = arith.cmpi ne, %1, %c0_i32_0 : i32
    scf.if %2 {
      %cst_116 = arith.constant 0.000000e+00 : f32
      %352 = vector.broadcast %cst_116 : f32 to vector<2x8x128xf32>
      %c0_117 = arith.constant 0 : index
      %c0_118 = arith.constant 0 : index
      %c0_119 = arith.constant 0 : index
      %353 = vector.load %arg13[%c0_117, %c0_118, %c0_119] : memref<2x8x128xf32, #tpu.memory_space<vmem>>, vector<2x8x128xf32>
      tpu.vector_store %arg13[%c0_117, %c0_118, %c0_119], %352 {strides = array<i32>} : memref<2x8x128xf32, #tpu.memory_space<vmem>>, vector<2x8x128xf32>,
      %cst_120 = arith.constant 0.000000e+00 : f32
      %354 = vector.broadcast %cst_120 : f32 to vector<2x8x128xf32>
      %c0_121 = arith.constant 0 : index
      %c0_122 = arith.constant 0 : index
      %c0_123 = arith.constant 0 : index
      %355 = vector.load %arg14[%c0_121, %c0_122, %c0_123] : memref<2x8x128xf32, #tpu.memory_space<vmem>>, vector<2x8x128xf32>
      tpu.vector_store %arg14[%c0_121, %c0_122, %c0_123], %354 {strides = array<i32>} : memref<2x8x128xf32, #tpu.memory_space<vmem>>, vector<2x8x128xf32>,
    } else {
    }
    %c0 = arith.constant 0 : index
    %c0_1 = arith.constant 0 : index
    %3 = vector.load %arg8[%c0, %c0_1] : memref<1x512xf32, #tpu.memory_space<vmem>>, vector<1x512xf32>
    %4 = vector.shape_cast %3 : vector<1x512xf32> to vector<1x512xf32>
    %5 = vector.broadcast %4 : vector<1x512xf32> to vector<8x512xf32>
    %c0_2 = arith.constant 0 : index
    %c0_3 = arith.constant 0 : index
    %6 = vector.load %arg9[%c0_2, %c0_3] : memref<1x512xf32, #tpu.memory_space<vmem>>, vector<1x512xf32>
    %7 = vector.shape_cast %6 : vector<1x512xf32> to vector<1x512xf32>
    %8 = vector.broadcast %7 : vector<1x512xf32> to vector<8x512xf32>
    %c0_4 = arith.constant 0 : index
    %c0_5 = arith.constant 0 : index
    %9 = vector.load %arg2[%c0_4, %c0_5] : memref<128x512xf32, #tpu.memory_space<vmem>>, vector<128x512xf32>
    %c0_6 = arith.constant 0 : index
    %c0_7 = arith.constant 0 : index
    %10 = vector.load %arg3[%c0_6, %c0_7] : memref<128x512xf32, #tpu.memory_space<vmem>>, vector<128x512xf32>
    %c0_8 = arith.constant 0 : index
    %c0_9 = arith.constant 0 : index
    %11 = vector.load %arg1[%c0_8, %c0_9] : memref<64x128xf32, #tpu.memory_space<vmem>>, vector<64x128xf32>
    %cst = arith.constant dense<0.000000e+00> : vector<64x512xf32>
    %12 = tpu.matmul %11, %9, %cst {dimension_numbers = #tpu.dot_dimension_numbers<[1], [0], [0], [1], [0, 0, 1, 1], [], []>} : vector<64x128xf32>, vector<128x512xf32>, vector<64x512xf32> -> vector<64x512xf32>
    %c0_10 = arith.constant 0 : index
    %c0_11 = arith.constant 0 : index
    %13 = vector.load %arg4[%c0_10, %c0_11] : memref<1x512xf32, #tpu.memory_space<vmem>>, vector<1x512xf32>
    %14 = vector.broadcast %13 : vector<1x512xf32> to vector<64x512xf32>
    %15 = arith.addf %12, %14 : vector<64x512xf32>
    %c0_12 = arith.constant 0 : index
    %c0_13 = arith.constant 0 : index
    %16 = vector.load %arg15[%c0_12, %c0_13] : memref<64x512xf32, #tpu.memory_space<vmem>>, vector<64x512xf32>
    tpu.vector_store %arg15[%c0_12, %c0_13], %15 {strides = array<i32>} : memref<64x512xf32, #tpu.memory_space<vmem>>, vector<64x512xf32>,
    %c0_14 = arith.constant 0 : index
    %c0_15 = arith.constant 0 : index
    %c0_16 = arith.constant 0 : index
    %17 = vector.load %arg13[%c0_14, %c0_15, %c0_16] : memref<2x8x128xf32, #tpu.memory_space<vmem>>, vector<1x8x128xf32>
    %18 = vector.shape_cast %17 : vector<1x8x128xf32> to vector<8x128xf32>
    %c0_17 = arith.constant 0 : index
    %c0_18 = arith.constant 0 : index
    %c0_19 = arith.constant 0 : index
    %19 = vector.load %arg14[%c0_17, %c0_18, %c0_19] : memref<2x8x128xf32, #tpu.memory_space<vmem>>, vector<1x8x128xf32>
    %20 = vector.shape_cast %19 : vector<1x8x128xf32> to vector<8x128xf32>
    %c0_i32_20 = arith.constant 0 : i32
    %c8_i32 = arith.constant 8 : i32
    %21 = arith.muli %c0_i32_20, %c8_i32 : i32
    %22 = tpu.assume_multiple %21, 8 : i32
    %23 = arith.index_cast %22 : i32 to index
    %c0_21 = arith.constant 0 : index
    %24 = vector.load %arg15[%23, %c0_21] : memref<64x512xf32, #tpu.memory_space<vmem>>, vector<8x512xf32>
    %cst_22 = arith.constant dense<0.000000e+00> : vector<8x512xf32>
    %25 = tpu.matmul %18, %10, %cst_22 {dimension_numbers = #tpu.dot_dimension_numbers<[1], [0], [0], [1], [0, 0, 1, 1], [], []>} : vector<8x128xf32>, vector<128x512xf32>, vector<8x512xf32> -> vector<8x512xf32>
    %26 = arith.addf %24, %25 : vector<8x512xf32>
    %27 = math.tanh %26 : vector<8x512xf32>
    %28 = arith.mulf %27, %5 : vector<8x512xf32>
    %29 = arith.addf %28, %8 : vector<8x512xf32>
    %30 = vector.extract_strided_slice %29 {offsets = [0, 128], sizes = [8, 128], strides = [1, 1]} : vector<8x512xf32> to vector<8x128xf32>
    %31 = arith.mulf %30, %20 : vector<8x128xf32>
    %32 = vector.extract_strided_slice %29 {offsets = [0, 0], sizes = [8, 128], strides = [1, 1]} : vector<8x512xf32> to vector<8x128xf32>
    %33 = vector.extract_strided_slice %29 {offsets = [0, 256], sizes = [8, 128], strides = [1, 1]} : vector<8x512xf32> to vector<8x128xf32>
    %34 = arith.mulf %32, %33 : vector<8x128xf32>
    %35 = arith.addf %31, %34 : vector<8x128xf32>
    %36 = vector.extract_strided_slice %29 {offsets = [0, 384], sizes = [8, 128], strides = [1, 1]} : vector<8x512xf32> to vector<8x128xf32>
    %37 = math.tanh %35 : vector<8x128xf32>
    %38 = arith.mulf %36, %37 : vector<8x128xf32>
    %39 = arith.index_cast %22 : i32 to index
    %c0_23 = arith.constant 0 : index
    %40 = vector.load %arg16[%39, %c0_23] : memref<64x128xf32, #tpu.memory_space<vmem>>, vector<8x128xf32>
    tpu.vector_store %arg16[%39, %c0_23], %38 {strides = array<i32>} : memref<64x128xf32, #tpu.memory_space<vmem>>, vector<8x128xf32>,
    %c1_i32 = arith.constant 1 : i32
    %c8_i32_24 = arith.constant 8 : i32
    %41 = arith.muli %c1_i32, %c8_i32_24 : i32
    %42 = tpu.assume_multiple %41, 8 : i32
    %43 = arith.index_cast %42 : i32 to index
    %c0_25 = arith.constant 0 : index
    %44 = vector.load %arg15[%43, %c0_25] : memref<64x512xf32, #tpu.memory_space<vmem>>, vector<8x512xf32>
    %cst_26 = arith.constant dense<0.000000e+00> : vector<8x512xf32>
    %45 = tpu.matmul %38, %10, %cst_26 {dimension_numbers = #tpu.dot_dimension_numbers<[1], [0], [0], [1], [0, 0, 1, 1], [], []>} : vector<8x128xf32>, vector<128x512xf32>, vector<8x512xf32> -> vector<8x512xf32>
    %46 = arith.addf %44, %45 : vector<8x512xf32>
    %47 = math.tanh %46 : vector<8x512xf32>
    %48 = arith.mulf %47, %5 : vector<8x512xf32>
    %49 = arith.addf %48, %8 : vector<8x512xf32>
    %50 = vector.extract_strided_slice %49 {offsets = [0, 128], sizes = [8, 128], strides = [1, 1]} : vector<8x512xf32> to vector<8x128xf32>
    %51 = arith.mulf %50, %35 : vector<8x128xf32>
    %52 = vector.extract_strided_slice %49 {offsets = [0, 0], sizes = [8, 128], strides = [1, 1]} : vector<8x512xf32> to vector<8x128xf32>
    %53 = vector.extract_strided_slice %49 {offsets = [0, 256], sizes = [8, 128], strides = [1, 1]} : vector<8x512xf32> to vector<8x128xf32>
    %54 = arith.mulf %52, %53 : vector<8x128xf32>
    %55 = arith.addf %51, %54 : vector<8x128xf32>
    %56 = vector.extract_strided_slice %49 {offsets = [0, 384], sizes = [8, 128], strides = [1, 1]} : vector<8x512xf32> to vector<8x128xf32>
    %57 = math.tanh %55 : vector<8x128xf32>
    %58 = arith.mulf %56, %57 : vector<8x128xf32>
    %59 = arith.index_cast %42 : i32 to index
    %c0_27 = arith.constant 0 : index
    %60 = vector.load %arg16[%59, %c0_27] : memref<64x128xf32, #tpu.memory_space<vmem>>, vector<8x128xf32>
    tpu.vector_store %arg16[%59, %c0_27], %58 {strides = array<i32>} : memref<64x128xf32, #tpu.memory_space<vmem>>, vector<8x128xf32>,
    %c2_i32 = arith.constant 2 : i32
    %c8_i32_28 = arith.constant 8 : i32
    %61 = arith.muli %c2_i32, %c8_i32_28 : i32
    %62 = tpu.assume_multiple %61, 8 : i32
    %63 = arith.index_cast %62 : i32 to index
    %c0_29 = arith.constant 0 : index
    %64 = vector.load %arg15[%63, %c0_29] : memref<64x512xf32, #tpu.memory_space<vmem>>, vector<8x512xf32>
    %cst_30 = arith.constant dense<0.000000e+00> : vector<8x512xf32>
    %65 = tpu.matmul %58, %10, %cst_30 {dimension_numbers = #tpu.dot_dimension_numbers<[1], [0], [0], [1], [0, 0, 1, 1], [], []>} : vector<8x128xf32>, vector<128x512xf32>, vector<8x512xf32> -> vector<8x512xf32>
    %66 = arith.addf %64, %65 : vector<8x512xf32>
    %67 = math.tanh %66 : vector<8x512xf32>
    %68 = arith.mulf %67, %5 : vector<8x512xf32>
    %69 = arith.addf %68, %8 : vector<8x512xf32>
    %70 = vector.extract_strided_slice %69 {offsets = [0, 128], sizes = [8, 128], strides = [1, 1]} : vector<8x512xf32> to vector<8x128xf32>
    %71 = arith.mulf %70, %55 : vector<8x128xf32>
    %72 = vector.extract_strided_slice %69 {offsets = [0, 0], sizes = [8, 128], strides = [1, 1]} : vector<8x512xf32> to vector<8x128xf32>
    %73 = vector.extract_strided_slice %69 {offsets = [0, 256], sizes = [8, 128], strides = [1, 1]} : vector<8x512xf32> to vector<8x128xf32>
    %74 = arith.mulf %72, %73 : vector<8x128xf32>
    %75 = arith.addf %71, %74 : vector<8x128xf32>
    %76 = vector.extract_strided_slice %69 {offsets = [0, 384], sizes = [8, 128], strides = [1, 1]} : vector<8x512xf32> to vector<8x128xf32>
    %77 = math.tanh %75 : vector<8x128xf32>
    %78 = arith.mulf %76, %77 : vector<8x128xf32>
    %79 = arith.index_cast %62 : i32 to index
    %c0_31 = arith.constant 0 : index
    %80 = vector.load %arg16[%79, %c0_31] : memref<64x128xf32, #tpu.memory_space<vmem>>, vector<8x128xf32>
    tpu.vector_store %arg16[%79, %c0_31], %78 {strides = array<i32>} : memref<64x128xf32, #tpu.memory_space<vmem>>, vector<8x128xf32>,
    %c3_i32 = arith.constant 3 : i32
    %c8_i32_32 = arith.constant 8 : i32
    %81 = arith.muli %c3_i32, %c8_i32_32 : i32
    %82 = tpu.assume_multiple %81, 8 : i32
    %83 = arith.index_cast %82 : i32 to index
    %c0_33 = arith.constant 0 : index
    %84 = vector.load %arg15[%83, %c0_33] : memref<64x512xf32, #tpu.memory_space<vmem>>, vector<8x512xf32>
    %cst_34 = arith.constant dense<0.000000e+00> : vector<8x512xf32>
    %85 = tpu.matmul %78, %10, %cst_34 {dimension_numbers = #tpu.dot_dimension_numbers<[1], [0], [0], [1], [0, 0, 1, 1], [], []>} : vector<8x128xf32>, vector<128x512xf32>, vector<8x512xf32> -> vector<8x512xf32>
    %86 = arith.addf %84, %85 : vector<8x512xf32>
    %87 = math.tanh %86 : vector<8x512xf32>
    %88 = arith.mulf %87, %5 : vector<8x512xf32>
    %89 = arith.addf %88, %8 : vector<8x512xf32>
    %90 = vector.extract_strided_slice %89 {offsets = [0, 128], sizes = [8, 128], strides = [1, 1]} : vector<8x512xf32> to vector<8x128xf32>
    %91 = arith.mulf %90, %75 : vector<8x128xf32>
    %92 = vector.extract_strided_slice %89 {offsets = [0, 0], sizes = [8, 128], strides = [1, 1]} : vector<8x512xf32> to vector<8x128xf32>
    %93 = vector.extract_strided_slice %89 {offsets = [0, 256], sizes = [8, 128], strides = [1, 1]} : vector<8x512xf32> to vector<8x128xf32>
    %94 = arith.mulf %92, %93 : vector<8x128xf32>
    %95 = arith.addf %91, %94 : vector<8x128xf32>
    %96 = vector.extract_strided_slice %89 {offsets = [0, 384], sizes = [8, 128], strides = [1, 1]} : vector<8x512xf32> to vector<8x128xf32>
    %97 = math.tanh %95 : vector<8x128xf32>
    %98 = arith.mulf %96, %97 : vector<8x128xf32>
    %99 = arith.index_cast %82 : i32 to index
    %c0_35 = arith.constant 0 : index
    %100 = vector.load %arg16[%99, %c0_35] : memref<64x128xf32, #tpu.memory_space<vmem>>, vector<8x128xf32>
    tpu.vector_store %arg16[%99, %c0_35], %98 {strides = array<i32>} : memref<64x128xf32, #tpu.memory_space<vmem>>, vector<8x128xf32>,
    %c4_i32 = arith.constant 4 : i32
    %c8_i32_36 = arith.constant 8 : i32
    %101 = arith.muli %c4_i32, %c8_i32_36 : i32
    %102 = tpu.assume_multiple %101, 8 : i32
    %103 = arith.index_cast %102 : i32 to index
    %c0_37 = arith.constant 0 : index
    %104 = vector.load %arg15[%103, %c0_37] : memref<64x512xf32, #tpu.memory_space<vmem>>, vector<8x512xf32>
    %cst_38 = arith.constant dense<0.000000e+00> : vector<8x512xf32>
    %105 = tpu.matmul %98, %10, %cst_38 {dimension_numbers = #tpu.dot_dimension_numbers<[1], [0], [0], [1], [0, 0, 1, 1], [], []>} : vector<8x128xf32>, vector<128x512xf32>, vector<8x512xf32> -> vector<8x512xf32>
    %106 = arith.addf %104, %105 : vector<8x512xf32>
    %107 = math.tanh %106 : vector<8x512xf32>
    %108 = arith.mulf %107, %5 : vector<8x512xf32>
    %109 = arith.addf %108, %8 : vector<8x512xf32>
    %110 = vector.extract_strided_slice %109 {offsets = [0, 128], sizes = [8, 128], strides = [1, 1]} : vector<8x512xf32> to vector<8x128xf32>
    %111 = arith.mulf %110, %95 : vector<8x128xf32>
    %112 = vector.extract_strided_slice %109 {offsets = [0, 0], sizes = [8, 128], strides = [1, 1]} : vector<8x512xf32> to vector<8x128xf32>
    %113 = vector.extract_strided_slice %109 {offsets = [0, 256], sizes = [8, 128], strides = [1, 1]} : vector<8x512xf32> to vector<8x128xf32>
    %114 = arith.mulf %112, %113 : vector<8x128xf32>
    %115 = arith.addf %111, %114 : vector<8x128xf32>
    %116 = vector.extract_strided_slice %109 {offsets = [0, 384], sizes = [8, 128], strides = [1, 1]} : vector<8x512xf32> to vector<8x128xf32>
    %117 = math.tanh %115 : vector<8x128xf32>
    %118 = arith.mulf %116, %117 : vector<8x128xf32>
    %119 = arith.index_cast %102 : i32 to index
    %c0_39 = arith.constant 0 : index
    %120 = vector.load %arg16[%119, %c0_39] : memref<64x128xf32, #tpu.memory_space<vmem>>, vector<8x128xf32>
    tpu.vector_store %arg16[%119, %c0_39], %118 {strides = array<i32>} : memref<64x128xf32, #tpu.memory_space<vmem>>, vector<8x128xf32>,
    %c5_i32 = arith.constant 5 : i32
    %c8_i32_40 = arith.constant 8 : i32
    %121 = arith.muli %c5_i32, %c8_i32_40 : i32
    %122 = tpu.assume_multiple %121, 8 : i32
    %123 = arith.index_cast %122 : i32 to index
    %c0_41 = arith.constant 0 : index
    %124 = vector.load %arg15[%123, %c0_41] : memref<64x512xf32, #tpu.memory_space<vmem>>, vector<8x512xf32>
    %cst_42 = arith.constant dense<0.000000e+00> : vector<8x512xf32>
    %125 = tpu.matmul %118, %10, %cst_42 {dimension_numbers = #tpu.dot_dimension_numbers<[1], [0], [0], [1], [0, 0, 1, 1], [], []>} : vector<8x128xf32>, vector<128x512xf32>, vector<8x512xf32> -> vector<8x512xf32>
    %126 = arith.addf %124, %125 : vector<8x512xf32>
    %127 = math.tanh %126 : vector<8x512xf32>
    %128 = arith.mulf %127, %5 : vector<8x512xf32>
    %129 = arith.addf %128, %8 : vector<8x512xf32>
    %130 = vector.extract_strided_slice %129 {offsets = [0, 128], sizes = [8, 128], strides = [1, 1]} : vector<8x512xf32> to vector<8x128xf32>
    %131 = arith.mulf %130, %115 : vector<8x128xf32>
    %132 = vector.extract_strided_slice %129 {offsets = [0, 0], sizes = [8, 128], strides = [1, 1]} : vector<8x512xf32> to vector<8x128xf32>
    %133 = vector.extract_strided_slice %129 {offsets = [0, 256], sizes = [8, 128], strides = [1, 1]} : vector<8x512xf32> to vector<8x128xf32>
    %134 = arith.mulf %132, %133 : vector<8x128xf32>
    %135 = arith.addf %131, %134 : vector<8x128xf32>
    %136 = vector.extract_strided_slice %129 {offsets = [0, 384], sizes = [8, 128], strides = [1, 1]} : vector<8x512xf32> to vector<8x128xf32>
    %137 = math.tanh %135 : vector<8x128xf32>
    %138 = arith.mulf %136, %137 : vector<8x128xf32>
    %139 = arith.index_cast %122 : i32 to index
    %c0_43 = arith.constant 0 : index
    %140 = vector.load %arg16[%139, %c0_43] : memref<64x128xf32, #tpu.memory_space<vmem>>, vector<8x128xf32>
    tpu.vector_store %arg16[%139, %c0_43], %138 {strides = array<i32>} : memref<64x128xf32, #tpu.memory_space<vmem>>, vector<8x128xf32>,
    %c6_i32 = arith.constant 6 : i32
    %c8_i32_44 = arith.constant 8 : i32
    %141 = arith.muli %c6_i32, %c8_i32_44 : i32
    %142 = tpu.assume_multiple %141, 8 : i32
    %143 = arith.index_cast %142 : i32 to index
    %c0_45 = arith.constant 0 : index
    %144 = vector.load %arg15[%143, %c0_45] : memref<64x512xf32, #tpu.memory_space<vmem>>, vector<8x512xf32>
    %cst_46 = arith.constant dense<0.000000e+00> : vector<8x512xf32>
    %145 = tpu.matmul %138, %10, %cst_46 {dimension_numbers = #tpu.dot_dimension_numbers<[1], [0], [0], [1], [0, 0, 1, 1], [], []>} : vector<8x128xf32>, vector<128x512xf32>, vector<8x512xf32> -> vector<8x512xf32>
    %146 = arith.addf %144, %145 : vector<8x512xf32>
    %147 = math.tanh %146 : vector<8x512xf32>
    %148 = arith.mulf %147, %5 : vector<8x512xf32>
    %149 = arith.addf %148, %8 : vector<8x512xf32>
    %150 = vector.extract_strided_slice %149 {offsets = [0, 128], sizes = [8, 128], strides = [1, 1]} : vector<8x512xf32> to vector<8x128xf32>
    %151 = arith.mulf %150, %135 : vector<8x128xf32>
    %152 = vector.extract_strided_slice %149 {offsets = [0, 0], sizes = [8, 128], strides = [1, 1]} : vector<8x512xf32> to vector<8x128xf32>
    %153 = vector.extract_strided_slice %149 {offsets = [0, 256], sizes = [8, 128], strides = [1, 1]} : vector<8x512xf32> to vector<8x128xf32>
    %154 = arith.mulf %152, %153 : vector<8x128xf32>
    %155 = arith.addf %151, %154 : vector<8x128xf32>
    %156 = vector.extract_strided_slice %149 {offsets = [0, 384], sizes = [8, 128], strides = [1, 1]} : vector<8x512xf32> to vector<8x128xf32>
    %157 = math.tanh %155 : vector<8x128xf32>
    %158 = arith.mulf %156, %157 : vector<8x128xf32>
    %159 = arith.index_cast %142 : i32 to index
    %c0_47 = arith.constant 0 : index
    %160 = vector.load %arg16[%159, %c0_47] : memref<64x128xf32, #tpu.memory_space<vmem>>, vector<8x128xf32>
    tpu.vector_store %arg16[%159, %c0_47], %158 {strides = array<i32>} : memref<64x128xf32, #tpu.memory_space<vmem>>, vector<8x128xf32>,
    %c7_i32 = arith.constant 7 : i32
    %c8_i32_48 = arith.constant 8 : i32
    %161 = arith.muli %c7_i32, %c8_i32_48 : i32
    %162 = tpu.assume_multiple %161, 8 : i32
    %163 = arith.index_cast %162 : i32 to index
    %c0_49 = arith.constant 0 : index
    %164 = vector.load %arg15[%163, %c0_49] : memref<64x512xf32, #tpu.memory_space<vmem>>, vector<8x512xf32>
    %cst_50 = arith.constant dense<0.000000e+00> : vector<8x512xf32>
    %165 = tpu.matmul %158, %10, %cst_50 {dimension_numbers = #tpu.dot_dimension_numbers<[1], [0], [0], [1], [0, 0, 1, 1], [], []>} : vector<8x128xf32>, vector<128x512xf32>, vector<8x512xf32> -> vector<8x512xf32>
    %166 = arith.addf %164, %165 : vector<8x512xf32>
    %167 = math.tanh %166 : vector<8x512xf32>
    %168 = arith.mulf %167, %5 : vector<8x512xf32>
    %169 = arith.addf %168, %8 : vector<8x512xf32>
    %170 = vector.extract_strided_slice %169 {offsets = [0, 128], sizes = [8, 128], strides = [1, 1]} : vector<8x512xf32> to vector<8x128xf32>
    %171 = arith.mulf %170, %155 : vector<8x128xf32>
    %172 = vector.extract_strided_slice %169 {offsets = [0, 0], sizes = [8, 128], strides = [1, 1]} : vector<8x512xf32> to vector<8x128xf32>
    %173 = vector.extract_strided_slice %169 {offsets = [0, 256], sizes = [8, 128], strides = [1, 1]} : vector<8x512xf32> to vector<8x128xf32>
    %174 = arith.mulf %172, %173 : vector<8x128xf32>
    %175 = arith.addf %171, %174 : vector<8x128xf32>
    %176 = vector.extract_strided_slice %169 {offsets = [0, 384], sizes = [8, 128], strides = [1, 1]} : vector<8x512xf32> to vector<8x128xf32>
    %177 = math.tanh %175 : vector<8x128xf32>
    %178 = arith.mulf %176, %177 : vector<8x128xf32>
    %179 = arith.index_cast %162 : i32 to index
    %c0_51 = arith.constant 0 : index
    %180 = vector.load %arg16[%179, %c0_51] : memref<64x128xf32, #tpu.memory_space<vmem>>, vector<8x128xf32>
    tpu.vector_store %arg16[%179, %c0_51], %178 {strides = array<i32>} : memref<64x128xf32, #tpu.memory_space<vmem>>, vector<8x128xf32>,
    %c8_i32_52 = arith.constant 8 : i32
    %c0_53 = arith.constant 0 : index
    %c0_54 = arith.constant 0 : index
    %c0_55 = arith.constant 0 : index
    %181 = vector.load %arg13[%c0_53, %c0_54, %c0_55] : memref<2x8x128xf32, #tpu.memory_space<vmem>>, vector<1x8x128xf32>
    %182 = vector.shape_cast %181 : vector<1x8x128xf32> to vector<8x128xf32>
    %183 = vector.shape_cast %178 : vector<8x128xf32> to vector<1x8x128xf32>
    tpu.vector_store %arg13[%c0_53, %c0_54, %c0_55], %183 {strides = array<i32>} : memref<2x8x128xf32, #tpu.memory_space<vmem>>, vector<1x8x128xf32>,
    %c0_56 = arith.constant 0 : index
    %c0_57 = arith.constant 0 : index
    %c0_58 = arith.constant 0 : index
    %184 = vector.load %arg14[%c0_56, %c0_57, %c0_58] : memref<2x8x128xf32, #tpu.memory_space<vmem>>, vector<1x8x128xf32>
    %185 = vector.shape_cast %184 : vector<1x8x128xf32> to vector<8x128xf32>
    %186 = vector.shape_cast %175 : vector<8x128xf32> to vector<1x8x128xf32>
    tpu.vector_store %arg14[%c0_56, %c0_57, %c0_58], %186 {strides = array<i32>} : memref<2x8x128xf32, #tpu.memory_space<vmem>>, vector<1x8x128xf32>,
    %c0_59 = arith.constant 0 : index
    %c0_60 = arith.constant 0 : index
    %187 = vector.load %arg5[%c0_59, %c0_60] : memref<128x512xf32, #tpu.memory_space<vmem>>, vector<128x512xf32>
    %c0_61 = arith.constant 0 : index
    %c0_62 = arith.constant 0 : index
    %188 = vector.load %arg6[%c0_61, %c0_62] : memref<128x512xf32, #tpu.memory_space<vmem>>, vector<128x512xf32>
    %c0_63 = arith.constant 0 : index
    %c0_64 = arith.constant 0 : index
    %189 = vector.load %arg16[%c0_63, %c0_64] : memref<64x128xf32, #tpu.memory_space<vmem>>, vector<64x128xf32>
    %cst_65 = arith.constant dense<0.000000e+00> : vector<64x512xf32>
    %190 = tpu.matmul %189, %187, %cst_65 {dimension_numbers = #tpu.dot_dimension_numbers<[1], [0], [0], [1], [0, 0, 1, 1], [], []>} : vector<64x128xf32>, vector<128x512xf32>, vector<64x512xf32> -> vector<64x512xf32>
    %c0_66 = arith.constant 0 : index
    %c0_67 = arith.constant 0 : index
    %191 = vector.load %arg7[%c0_66, %c0_67] : memref<1x512xf32, #tpu.memory_space<vmem>>, vector<1x512xf32>
    %192 = vector.broadcast %191 : vector<1x512xf32> to vector<64x512xf32>
    %193 = arith.addf %190, %192 : vector<64x512xf32>
    %c0_68 = arith.constant 0 : index
    %c0_69 = arith.constant 0 : index
    %194 = vector.load %arg15[%c0_68, %c0_69] : memref<64x512xf32, #tpu.memory_space<vmem>>, vector<64x512xf32>
    tpu.vector_store %arg15[%c0_68, %c0_69], %193 {strides = array<i32>} : memref<64x512xf32, #tpu.memory_space<vmem>>, vector<64x512xf32>,
    %c1 = arith.constant 1 : index
    %c0_70 = arith.constant 0 : index
    %c0_71 = arith.constant 0 : index
    %195 = vector.load %arg13[%c1, %c0_70, %c0_71] : memref<2x8x128xf32, #tpu.memory_space<vmem>>, vector<1x8x128xf32>
    %196 = vector.shape_cast %195 : vector<1x8x128xf32> to vector<8x128xf32>
    %c1_72 = arith.constant 1 : index
    %c0_73 = arith.constant 0 : index
    %c0_74 = arith.constant 0 : index
    %197 = vector.load %arg14[%c1_72, %c0_73, %c0_74] : memref<2x8x128xf32, #tpu.memory_space<vmem>>, vector<1x8x128xf32>
    %198 = vector.shape_cast %197 : vector<1x8x128xf32> to vector<8x128xf32>
    %c0_i32_75 = arith.constant 0 : i32
    %c8_i32_76 = arith.constant 8 : i32
    %199 = arith.muli %c0_i32_75, %c8_i32_76 : i32
    %200 = tpu.assume_multiple %199, 8 : i32
    %201 = arith.index_cast %200 : i32 to index
    %c0_77 = arith.constant 0 : index
    %202 = vector.load %arg15[%201, %c0_77] : memref<64x512xf32, #tpu.memory_space<vmem>>, vector<8x512xf32>
    %cst_78 = arith.constant dense<0.000000e+00> : vector<8x512xf32>
    %203 = tpu.matmul %196, %188, %cst_78 {dimension_numbers = #tpu.dot_dimension_numbers<[1], [0], [0], [1], [0, 0, 1, 1], [], []>} : vector<8x128xf32>, vector<128x512xf32>, vector<8x512xf32> -> vector<8x512xf32>
    %204 = arith.addf %202, %203 : vector<8x512xf32>
    %205 = math.tanh %204 : vector<8x512xf32>
    %206 = arith.mulf %205, %5 : vector<8x512xf32>
    %207 = arith.addf %206, %8 : vector<8x512xf32>
    %208 = vector.extract_strided_slice %207 {offsets = [0, 128], sizes = [8, 128], strides = [1, 1]} : vector<8x512xf32> to vector<8x128xf32>
    %209 = arith.mulf %208, %198 : vector<8x128xf32>
    %210 = vector.extract_strided_slice %207 {offsets = [0, 0], sizes = [8, 128], strides = [1, 1]} : vector<8x512xf32> to vector<8x128xf32>
    %211 = vector.extract_strided_slice %207 {offsets = [0, 256], sizes = [8, 128], strides = [1, 1]} : vector<8x512xf32> to vector<8x128xf32>
    %212 = arith.mulf %210, %211 : vector<8x128xf32>
    %213 = arith.addf %209, %212 : vector<8x128xf32>
    %214 = vector.extract_strided_slice %207 {offsets = [0, 384], sizes = [8, 128], strides = [1, 1]} : vector<8x512xf32> to vector<8x128xf32>
    %215 = math.tanh %213 : vector<8x128xf32>
    %216 = arith.mulf %214, %215 : vector<8x128xf32>
    %c1_i32_79 = arith.constant 1 : i32
    %c8_i32_80 = arith.constant 8 : i32
    %217 = arith.muli %c1_i32_79, %c8_i32_80 : i32
    %218 = tpu.assume_multiple %217, 8 : i32
    %219 = arith.index_cast %218 : i32 to index
    %c0_81 = arith.constant 0 : index
    %220 = vector.load %arg15[%219, %c0_81] : memref<64x512xf32, #tpu.memory_space<vmem>>, vector<8x512xf32>
    %cst_82 = arith.constant dense<0.000000e+00> : vector<8x512xf32>
    %221 = tpu.matmul %216, %188, %cst_82 {dimension_numbers = #tpu.dot_dimension_numbers<[1], [0], [0], [1], [0, 0, 1, 1], [], []>} : vector<8x128xf32>, vector<128x512xf32>, vector<8x512xf32> -> vector<8x512xf32>
    %222 = arith.addf %220, %221 : vector<8x512xf32>
    %223 = math.tanh %222 : vector<8x512xf32>
    %224 = arith.mulf %223, %5 : vector<8x512xf32>
    %225 = arith.addf %224, %8 : vector<8x512xf32>
    %226 = vector.extract_strided_slice %225 {offsets = [0, 128], sizes = [8, 128], strides = [1, 1]} : vector<8x512xf32> to vector<8x128xf32>
    %227 = arith.mulf %226, %213 : vector<8x128xf32>
    %228 = vector.extract_strided_slice %225 {offsets = [0, 0], sizes = [8, 128], strides = [1, 1]} : vector<8x512xf32> to vector<8x128xf32>
    %229 = vector.extract_strided_slice %225 {offsets = [0, 256], sizes = [8, 128], strides = [1, 1]} : vector<8x512xf32> to vector<8x128xf32>
    %230 = arith.mulf %228, %229 : vector<8x128xf32>
    %231 = arith.addf %227, %230 : vector<8x128xf32>
    %232 = vector.extract_strided_slice %225 {offsets = [0, 384], sizes = [8, 128], strides = [1, 1]} : vector<8x512xf32> to vector<8x128xf32>
    %233 = math.tanh %231 : vector<8x128xf32>
    %234 = arith.mulf %232, %233 : vector<8x128xf32>
    %c2_i32_83 = arith.constant 2 : i32
    %c8_i32_84 = arith.constant 8 : i32
    %235 = arith.muli %c2_i32_83, %c8_i32_84 : i32
    %236 = tpu.assume_multiple %235, 8 : i32
    %237 = arith.index_cast %236 : i32 to index
    %c0_85 = arith.constant 0 : index
    %238 = vector.load %arg15[%237, %c0_85] : memref<64x512xf32, #tpu.memory_space<vmem>>, vector<8x512xf32>
    %cst_86 = arith.constant dense<0.000000e+00> : vector<8x512xf32>
    %239 = tpu.matmul %234, %188, %cst_86 {dimension_numbers = #tpu.dot_dimension_numbers<[1], [0], [0], [1], [0, 0, 1, 1], [], []>} : vector<8x128xf32>, vector<128x512xf32>, vector<8x512xf32> -> vector<8x512xf32>
    %240 = arith.addf %238, %239 : vector<8x512xf32>
    %241 = math.tanh %240 : vector<8x512xf32>
    %242 = arith.mulf %241, %5 : vector<8x512xf32>
    %243 = arith.addf %242, %8 : vector<8x512xf32>
    %244 = vector.extract_strided_slice %243 {offsets = [0, 128], sizes = [8, 128], strides = [1, 1]} : vector<8x512xf32> to vector<8x128xf32>
    %245 = arith.mulf %244, %231 : vector<8x128xf32>
    %246 = vector.extract_strided_slice %243 {offsets = [0, 0], sizes = [8, 128], strides = [1, 1]} : vector<8x512xf32> to vector<8x128xf32>
    %247 = vector.extract_strided_slice %243 {offsets = [0, 256], sizes = [8, 128], strides = [1, 1]} : vector<8x512xf32> to vector<8x128xf32>
    %248 = arith.mulf %246, %247 : vector<8x128xf32>
    %249 = arith.addf %245, %248 : vector<8x128xf32>
    %250 = vector.extract_strided_slice %243 {offsets = [0, 384], sizes = [8, 128], strides = [1, 1]} : vector<8x512xf32> to vector<8x128xf32>
    %251 = math.tanh %249 : vector<8x128xf32>
    %252 = arith.mulf %250, %251 : vector<8x128xf32>
    %c3_i32_87 = arith.constant 3 : i32
    %c8_i32_88 = arith.constant 8 : i32
    %253 = arith.muli %c3_i32_87, %c8_i32_88 : i32
    %254 = tpu.assume_multiple %253, 8 : i32
    %255 = arith.index_cast %254 : i32 to index
    %c0_89 = arith.constant 0 : index
    %256 = vector.load %arg15[%255, %c0_89] : memref<64x512xf32, #tpu.memory_space<vmem>>, vector<8x512xf32>
    %cst_90 = arith.constant dense<0.000000e+00> : vector<8x512xf32>
    %257 = tpu.matmul %252, %188, %cst_90 {dimension_numbers = #tpu.dot_dimension_numbers<[1], [0], [0], [1], [0, 0, 1, 1], [], []>} : vector<8x128xf32>, vector<128x512xf32>, vector<8x512xf32> -> vector<8x512xf32>
    %258 = arith.addf %256, %257 : vector<8x512xf32>
    %259 = math.tanh %258 : vector<8x512xf32>
    %260 = arith.mulf %259, %5 : vector<8x512xf32>
    %261 = arith.addf %260, %8 : vector<8x512xf32>
    %262 = vector.extract_strided_slice %261 {offsets = [0, 128], sizes = [8, 128], strides = [1, 1]} : vector<8x512xf32> to vector<8x128xf32>
    %263 = arith.mulf %262, %249 : vector<8x128xf32>
    %264 = vector.extract_strided_slice %261 {offsets = [0, 0], sizes = [8, 128], strides = [1, 1]} : vector<8x512xf32> to vector<8x128xf32>
    %265 = vector.extract_strided_slice %261 {offsets = [0, 256], sizes = [8, 128], strides = [1, 1]} : vector<8x512xf32> to vector<8x128xf32>
    %266 = arith.mulf %264, %265 : vector<8x128xf32>
    %267 = arith.addf %263, %266 : vector<8x128xf32>
    %268 = vector.extract_strided_slice %261 {offsets = [0, 384], sizes = [8, 128], strides = [1, 1]} : vector<8x512xf32> to vector<8x128xf32>
    %269 = math.tanh %267 : vector<8x128xf32>
    %270 = arith.mulf %268, %269 : vector<8x128xf32>
    %c4_i32_91 = arith.constant 4 : i32
    %c8_i32_92 = arith.constant 8 : i32
    %271 = arith.muli %c4_i32_91, %c8_i32_92 : i32
    %272 = tpu.assume_multiple %271, 8 : i32
    %273 = arith.index_cast %272 : i32 to index
    %c0_93 = arith.constant 0 : index
    %274 = vector.load %arg15[%273, %c0_93] : memref<64x512xf32, #tpu.memory_space<vmem>>, vector<8x512xf32>
    %cst_94 = arith.constant dense<0.000000e+00> : vector<8x512xf32>
    %275 = tpu.matmul %270, %188, %cst_94 {dimension_numbers = #tpu.dot_dimension_numbers<[1], [0], [0], [1], [0, 0, 1, 1], [], []>} : vector<8x128xf32>, vector<128x512xf32>, vector<8x512xf32> -> vector<8x512xf32>
    %276 = arith.addf %274, %275 : vector<8x512xf32>
    %277 = math.tanh %276 : vector<8x512xf32>
    %278 = arith.mulf %277, %5 : vector<8x512xf32>
    %279 = arith.addf %278, %8 : vector<8x512xf32>
    %280 = vector.extract_strided_slice %279 {offsets = [0, 128], sizes = [8, 128], strides = [1, 1]} : vector<8x512xf32> to vector<8x128xf32>
    %281 = arith.mulf %280, %267 : vector<8x128xf32>
    %282 = vector.extract_strided_slice %279 {offsets = [0, 0], sizes = [8, 128], strides = [1, 1]} : vector<8x512xf32> to vector<8x128xf32>
    %283 = vector.extract_strided_slice %279 {offsets = [0, 256], sizes = [8, 128], strides = [1, 1]} : vector<8x512xf32> to vector<8x128xf32>
    %284 = arith.mulf %282, %283 : vector<8x128xf32>
    %285 = arith.addf %281, %284 : vector<8x128xf32>
    %286 = vector.extract_strided_slice %279 {offsets = [0, 384], sizes = [8, 128], strides = [1, 1]} : vector<8x512xf32> to vector<8x128xf32>
    %287 = math.tanh %285 : vector<8x128xf32>
    %288 = arith.mulf %286, %287 : vector<8x128xf32>
    %c5_i32_95 = arith.constant 5 : i32
    %c8_i32_96 = arith.constant 8 : i32
    %289 = arith.muli %c5_i32_95, %c8_i32_96 : i32
    %290 = tpu.assume_multiple %289, 8 : i32
    %291 = arith.index_cast %290 : i32 to index
    %c0_97 = arith.constant 0 : index
    %292 = vector.load %arg15[%291, %c0_97] : memref<64x512xf32, #tpu.memory_space<vmem>>, vector<8x512xf32>
    %cst_98 = arith.constant dense<0.000000e+00> : vector<8x512xf32>
    %293 = tpu.matmul %288, %188, %cst_98 {dimension_numbers = #tpu.dot_dimension_numbers<[1], [0], [0], [1], [0, 0, 1, 1], [], []>} : vector<8x128xf32>, vector<128x512xf32>, vector<8x512xf32> -> vector<8x512xf32>
    %294 = arith.addf %292, %293 : vector<8x512xf32>
    %295 = math.tanh %294 : vector<8x512xf32>
    %296 = arith.mulf %295, %5 : vector<8x512xf32>
    %297 = arith.addf %296, %8 : vector<8x512xf32>
    %298 = vector.extract_strided_slice %297 {offsets = [0, 128], sizes = [8, 128], strides = [1, 1]} : vector<8x512xf32> to vector<8x128xf32>
    %299 = arith.mulf %298, %285 : vector<8x128xf32>
    %300 = vector.extract_strided_slice %297 {offsets = [0, 0], sizes = [8, 128], strides = [1, 1]} : vector<8x512xf32> to vector<8x128xf32>
    %301 = vector.extract_strided_slice %297 {offsets = [0, 256], sizes = [8, 128], strides = [1, 1]} : vector<8x512xf32> to vector<8x128xf32>
    %302 = arith.mulf %300, %301 : vector<8x128xf32>
    %303 = arith.addf %299, %302 : vector<8x128xf32>
    %304 = vector.extract_strided_slice %297 {offsets = [0, 384], sizes = [8, 128], strides = [1, 1]} : vector<8x512xf32> to vector<8x128xf32>
    %305 = math.tanh %303 : vector<8x128xf32>
    %306 = arith.mulf %304, %305 : vector<8x128xf32>
    %c6_i32_99 = arith.constant 6 : i32
    %c8_i32_100 = arith.constant 8 : i32
    %307 = arith.muli %c6_i32_99, %c8_i32_100 : i32
    %308 = tpu.assume_multiple %307, 8 : i32
    %309 = arith.index_cast %308 : i32 to index
    %c0_101 = arith.constant 0 : index
    %310 = vector.load %arg15[%309, %c0_101] : memref<64x512xf32, #tpu.memory_space<vmem>>, vector<8x512xf32>
    %cst_102 = arith.constant dense<0.000000e+00> : vector<8x512xf32>
    %311 = tpu.matmul %306, %188, %cst_102 {dimension_numbers = #tpu.dot_dimension_numbers<[1], [0], [0], [1], [0, 0, 1, 1], [], []>} : vector<8x128xf32>, vector<128x512xf32>, vector<8x512xf32> -> vector<8x512xf32>
    %312 = arith.addf %310, %311 : vector<8x512xf32>
    %313 = math.tanh %312 : vector<8x512xf32>
    %314 = arith.mulf %313, %5 : vector<8x512xf32>
    %315 = arith.addf %314, %8 : vector<8x512xf32>
    %316 = vector.extract_strided_slice %315 {offsets = [0, 128], sizes = [8, 128], strides = [1, 1]} : vector<8x512xf32> to vector<8x128xf32>
    %317 = arith.mulf %316, %303 : vector<8x128xf32>
    %318 = vector.extract_strided_slice %315 {offsets = [0, 0], sizes = [8, 128], strides = [1, 1]} : vector<8x512xf32> to vector<8x128xf32>
    %319 = vector.extract_strided_slice %315 {offsets = [0, 256], sizes = [8, 128], strides = [1, 1]} : vector<8x512xf32> to vector<8x128xf32>
    %320 = arith.mulf %318, %319 : vector<8x128xf32>
    %321 = arith.addf %317, %320 : vector<8x128xf32>
    %322 = vector.extract_strided_slice %315 {offsets = [0, 384], sizes = [8, 128], strides = [1, 1]} : vector<8x512xf32> to vector<8x128xf32>
    %323 = math.tanh %321 : vector<8x128xf32>
    %324 = arith.mulf %322, %323 : vector<8x128xf32>
    %c7_i32_103 = arith.constant 7 : i32
    %c8_i32_104 = arith.constant 8 : i32
    %325 = arith.muli %c7_i32_103, %c8_i32_104 : i32
    %326 = tpu.assume_multiple %325, 8 : i32
    %327 = arith.index_cast %326 : i32 to index
    %c0_105 = arith.constant 0 : index
    %328 = vector.load %arg15[%327, %c0_105] : memref<64x512xf32, #tpu.memory_space<vmem>>, vector<8x512xf32>
    %cst_106 = arith.constant dense<0.000000e+00> : vector<8x512xf32>
    %329 = tpu.matmul %324, %188, %cst_106 {dimension_numbers = #tpu.dot_dimension_numbers<[1], [0], [0], [1], [0, 0, 1, 1], [], []>} : vector<8x128xf32>, vector<128x512xf32>, vector<8x512xf32> -> vector<8x512xf32>
    %330 = arith.addf %328, %329 : vector<8x512xf32>
    %331 = math.tanh %330 : vector<8x512xf32>
    %332 = arith.mulf %331, %5 : vector<8x512xf32>
    %333 = arith.addf %332, %8 : vector<8x512xf32>
    %334 = vector.extract_strided_slice %333 {offsets = [0, 128], sizes = [8, 128], strides = [1, 1]} : vector<8x512xf32> to vector<8x128xf32>
    %335 = arith.mulf %334, %321 : vector<8x128xf32>
    %336 = vector.extract_strided_slice %333 {offsets = [0, 0], sizes = [8, 128], strides = [1, 1]} : vector<8x512xf32> to vector<8x128xf32>
    %337 = vector.extract_strided_slice %333 {offsets = [0, 256], sizes = [8, 128], strides = [1, 1]} : vector<8x512xf32> to vector<8x128xf32>
    %338 = arith.mulf %336, %337 : vector<8x128xf32>
    %339 = arith.addf %335, %338 : vector<8x128xf32>
    %340 = vector.extract_strided_slice %333 {offsets = [0, 384], sizes = [8, 128], strides = [1, 1]} : vector<8x512xf32> to vector<8x128xf32>
    %341 = math.tanh %339 : vector<8x128xf32>
    %342 = arith.mulf %340, %341 : vector<8x128xf32>
    %c8_i32_107 = arith.constant 8 : i32
    %c1_108 = arith.constant 1 : index
    %c0_109 = arith.constant 0 : index
    %c0_110 = arith.constant 0 : index
    %343 = vector.load %arg13[%c1_108, %c0_109, %c0_110] : memref<2x8x128xf32, #tpu.memory_space<vmem>>, vector<1x8x128xf32>
    %344 = vector.shape_cast %343 : vector<1x8x128xf32> to vector<8x128xf32>
    %345 = vector.shape_cast %342 : vector<8x128xf32> to vector<1x8x128xf32>
    tpu.vector_store %arg13[%c1_108, %c0_109, %c0_110], %345 {strides = array<i32>} : memref<2x8x128xf32, #tpu.memory_space<vmem>>, vector<1x8x128xf32>,
    %c1_111 = arith.constant 1 : index
    %c0_112 = arith.constant 0 : index
    %c0_113 = arith.constant 0 : index
    %346 = vector.load %arg14[%c1_111, %c0_112, %c0_113] : memref<2x8x128xf32, #tpu.memory_space<vmem>>, vector<1x8x128xf32>
    %347 = vector.shape_cast %346 : vector<1x8x128xf32> to vector<8x128xf32>
    %348 = vector.shape_cast %339 : vector<8x128xf32> to vector<1x8x128xf32>
    tpu.vector_store %arg14[%c1_111, %c0_112, %c0_113], %348 {strides = array<i32>} : memref<2x8x128xf32, #tpu.memory_space<vmem>>, vector<1x8x128xf32>,
    %c0_i32_114 = arith.constant 0 : i32
    %349 = arith.cmpi eq, %arg0, %c0_i32_114 : i32
    %350 = arith.extui %349 : i1 to i32
    %c0_i32_115 = arith.constant 0 : i32
    %351 = arith.cmpi ne, %350, %c0_i32_115 : i32
    scf.if %351 {
      %c0_116 = arith.constant 0 : index
      %c0_117 = arith.constant 0 : index
      %352 = vector.load %arg10[%c0_116, %c0_117] : memref<128x128xf32, #tpu.memory_space<vmem>>, vector<128x128xf32>
      %cst_118 = arith.constant dense<0.000000e+00> : vector<8x128xf32>
      %353 = tpu.matmul %342, %352, %cst_118 {dimension_numbers = #tpu.dot_dimension_numbers<[1], [0], [0], [1], [0, 0, 1, 1], [], []>} : vector<8x128xf32>, vector<128x128xf32>, vector<8x128xf32> -> vector<8x128xf32>
      %c0_119 = arith.constant 0 : index
      %c0_120 = arith.constant 0 : index
      %354 = vector.load %arg11[%c0_119, %c0_120] : memref<1x128xf32, #tpu.memory_space<vmem>>, vector<1x128xf32>
      %355 = vector.broadcast %354 : vector<1x128xf32> to vector<8x128xf32>
      %356 = arith.addf %353, %355 : vector<8x128xf32>
      %c0_121 = arith.constant 0 : index
      %c0_122 = arith.constant 0 : index
      %357 = vector.load %arg12[%c0_121, %c0_122] : memref<8x128xf32, #tpu.memory_space<vmem>>, vector<8x128xf32>
      tpu.vector_store %arg12[%c0_121, %c0_122], %356 {strides = array<i32>} : memref<8x128xf32, #tpu.memory_space<vmem>>, vector<8x128xf32>,
    } else {
    }
    return
  }
  func.func @transform_0(%arg0: i32) -> (i32, i32) {
    %c0_i32 = arith.constant 0 : i32
    %c0_i32_0 = arith.constant 0 : i32
    return %arg0, %c0_i32 : i32, i32
  }
  func.func @transform_1(%arg0: i32) -> (i32, i32) {
    %c0_i32 = arith.constant 0 : i32
    %c0_i32_0 = arith.constant 0 : i32
    %c0_i32_1 = arith.constant 0 : i32
    return %c0_i32, %c0_i32_0 : i32, i32
  }
  func.func @transform_2(%arg0: i32) -> (i32, i32) {
    %c0_i32 = arith.constant 0 : i32
    %c0_i32_0 = arith.constant 0 : i32
    %c0_i32_1 = arith.constant 0 : i32
    return %c0_i32, %c0_i32_0 : i32, i32
  }
  func.func @transform_3(%arg0: i32) -> (i32, i32) {
    %c0_i32 = arith.constant 0 : i32
    %c0_i32_0 = arith.constant 0 : i32
    %c0_i32_1 = arith.constant 0 : i32
    return %c0_i32, %c0_i32_0 : i32, i32
  }
  func.func @transform_4(%arg0: i32) -> (i32, i32) {
    %c0_i32 = arith.constant 0 : i32
    %c0_i32_0 = arith.constant 0 : i32
    %c0_i32_1 = arith.constant 0 : i32
    return %c0_i32, %c0_i32_0 : i32, i32
  }
  func.func @transform_5(%arg0: i32) -> (i32, i32) {
    %c0_i32 = arith.constant 0 : i32
    %c0_i32_0 = arith.constant 0 : i32
    %c0_i32_1 = arith.constant 0 : i32
    return %c0_i32, %c0_i32_0 : i32, i32
  }
  func.func @transform_6(%arg0: i32) -> (i32, i32) {
    %c0_i32 = arith.constant 0 : i32
    %c0_i32_0 = arith.constant 0 : i32
    %c0_i32_1 = arith.constant 0 : i32
    return %c0_i32, %c0_i32_0 : i32, i32
  }
  func.func @transform_7(%arg0: i32) -> (i32, i32) {
    %c0_i32 = arith.constant 0 : i32
    %c0_i32_0 = arith.constant 0 : i32
    %c0_i32_1 = arith.constant 0 : i32
    return %c0_i32, %c0_i32_0 : i32, i32
  }
  func.func @transform_8(%arg0: i32) -> (i32, i32) {
    %c0_i32 = arith.constant 0 : i32
    %c0_i32_0 = arith.constant 0 : i32
    %c0_i32_1 = arith.constant 0 : i32
    return %c0_i32, %c0_i32_0 : i32, i32
  }
  func.func @transform_9(%arg0: i32) -> (i32, i32) {
    %c0_i32 = arith.constant 0 : i32
    %c0_i32_0 = arith.constant 0 : i32
    %c0_i32_1 = arith.constant 0 : i32
    return %c0_i32, %c0_i32_0 : i32, i32
  }
  func.func @transform_10(%arg0: i32) -> (i32, i32) {
    %c0_i32 = arith.constant 0 : i32
    %c0_i32_0 = arith.constant 0 : i32
    %c0_i32_1 = arith.constant 0 : i32
    return %c0_i32, %c0_i32_0 : i32, i32
  }
  func.func @transform_11(%arg0: i32) -> (i32, i32) {
    %c0_i32 = arith.constant 0 : i32
    %c0_i32_0 = arith.constant 0 : i32
    %c0_i32_1 = arith.constant 0 : i32
    return %c0_i32, %c0_i32_0 : i32, i32
  }
}

</mosaic_0001>

<llo_original>
// kernel: lstm_model_forward.1
$region0: #{lstm_model_forward.1}
  #allocation0 [shape = 'u32[]', space=smem, size = 0x4, offset = 0x4, fixed_abs, tag = 'smem constant byte address 0x4 - core index']
  #allocation1 [shape = 'u32[144,128]{1,0:T(1,128)}', space=vmem, size = 0x12000, scoped, tag = 'internal scratch']
  #allocation2 [shape = 'f32[2,8,128]{2,1,0:T(8,128)}', space=vmem, size = 0x2000, scoped, tag = 'scratch operand']
  #allocation3 [shape = 'f32[2,8,128]{2,1,0:T(8,128)}', space=vmem, size = 0x2000, scoped, tag = 'scratch operand']
  #allocation4 [shape = 'f32[64,512]{1,0:T(8,128)}', space=vmem, size = 0x20000, scoped, tag = 'scratch operand']
  #allocation5 [shape = 'f32[64,128]{1,0:T(8,128)}', space=vmem, size = 0x8000, scoped, tag = 'scratch operand']
  %s0 = inlined_call_operand.vmem [shape: f32[64,128], index: 0, kind: input, shape index: {}]
  %s1 = inlined_call_operand.hbm [shape: f32[128,512], index: 1, kind: input, shape index: {}]
  %s2 = inlined_call_operand.hbm [shape: f32[128,512], index: 2, kind: input, shape index: {}]
  %s3 = inlined_call_operand.vmem [shape: f32[1,512], index: 3, kind: input, shape index: {}]
  %s4 = inlined_call_operand.hbm [shape: f32[128,512], index: 4, kind: input, shape index: {}]
  %s5 = inlined_call_operand.hbm [shape: f32[128,512], index: 5, kind: input, shape index: {}]
  %s6 = inlined_call_operand.vmem [shape: f32[1,512], index: 6, kind: input, shape index: {}]
  %s7 = inlined_call_operand.vmem [shape: f32[1,512], index: 7, kind: input, shape index: {}]
  %s8 = inlined_call_operand.vmem [shape: f32[1,512], index: 8, kind: input, shape index: {}]
  %s9 = inlined_call_operand.vmem [shape: f32[128,128], index: 9, kind: input, shape index: {}]
  %s10 = inlined_call_operand.vmem [shape: f32[1,128], index: 10, kind: input, shape index: {}]
  %s11 = inlined_call_operand.vmem [shape: f32[8,128], index: 11, kind: output, shape index: {}]
  %s12 = sld [smem:[#allocation0]]
  $region78: #{lstm_model_forward.1} parent=0
    _
  %s14 = ssub.s32 1, %s12
  %s15 = scalar_select 0, %s14, %s12
  $region1: #{lstm_model_forward.1} parent=0
    #allocation6 [shape = 'u8[262144]{0}', space=vmem, size = 0x40000, scoped, tag = 'input window, operand 1, single buffered']
    #allocation7 [shape = 's32[1]{0}', space=sflag, size = 0x4, scoped, tag = 'scoped memory for lstm_model_forward.1']
    #allocation8 [shape = 'u8[262144]{0}', space=vmem, size = 0x40000, scoped, tag = 'input window, operand 2, single buffered']
    #allocation9 [shape = 's32[1]{0}', space=sflag, size = 0x4, scoped, tag = 'scoped memory for lstm_model_forward.1']
    #allocation10 [shape = 'u8[262144]{0}', space=vmem, size = 0x40000, scoped, tag = 'input window, operand 4, single buffered']
    #allocation11 [shape = 'u8[262144]{0}', space=vmem, size = 0x40000, scoped, tag = 'input window, operand 5, single buffered']
    #allocation12 [shape = 's32[1]{0}', space=sflag, size = 0x4, scoped, tag = 'scoped memory for lstm_model_forward.1']
    %16 = vsyncpa [#allocation7], 0
    %17 = vsyncpa [#allocation9], 0
    %18 = vsyncpa [#allocation12], 0
    // Predicated region
    $region2: #{lstm_model_forward.1} parent=1 // pred_check
      _
    $region3: #{lstm_model_forward.1} parent=1 // pred_check_branch
      %20 = sbr.rel (0) target = $region5
    $region4: #{lstm_model_forward.1} parent=1 // pred_region
      _
    $region5: #{lstm_model_forward.1} parent=1 // pred_fallthru
      _
    // Predicated region
    $region6: #{lstm_model_forward.1} parent=1 // pred_check
      _
    $region7: #{lstm_model_forward.1} parent=1 // pred_check_branch
      %22 = sbr.rel (0) target = $region9
    $region8: #{lstm_model_forward.1} parent=1 // pred_region
      %s24 = ssub.s32 8192, 8192
      %25 = vsyncadd [#allocation7], %s24
      %s26 = sshll.u32 [#allocation6], 4
      %s27 = int_to_ptr.vmem [resolvable:$true] %s26
      %32 = dma.hbm_to_vmem [thread:$0]  %s1, 8192, %s27, [#allocation7], 512, 512, 32
    $region9: #{lstm_model_forward.1} parent=1 // pred_fallthru
      _
    // Predicated region
    $region10: #{lstm_model_forward.1} parent=1 // pred_check
      _
    $region11: #{lstm_model_forward.1} parent=1 // pred_check_branch
      %34 = sbr.rel (0) target = $region13
    $region12: #{lstm_model_forward.1} parent=1 // pred_region
      %s36 = ssub.s32 8192, 8192
      %37 = vsyncadd [#allocation9], %s36
      %s38 = sshll.u32 [#allocation8], 4
      %s39 = int_to_ptr.vmem [resolvable:$true] %s38
      %44 = dma.hbm_to_vmem [thread:$0]  %s2, 8192, %s39, [#allocation9], 512, 512, 32
    $region13: #{lstm_model_forward.1} parent=1 // pred_fallthru
      _
    // Predicated region
    $region14: #{lstm_model_forward.1} parent=1 // pred_check
      _
    $region15: #{lstm_model_forward.1} parent=1 // pred_check_branch
      %46 = sbr.rel (0) target = $region17
    $region16: #{lstm_model_forward.1} parent=1 // pred_region
      _
    $region17: #{lstm_model_forward.1} parent=1 // pred_fallthru
      _
    // Predicated region
    $region18: #{lstm_model_forward.1} parent=1 // pred_check
      _
    $region19: #{lstm_model_forward.1} parent=1 // pred_check_branch
      %48 = sbr.rel (0) target = $region21
    $region20: #{lstm_model_forward.1} parent=1 // pred_region
      %s50 = ssub.s32 8192, 8192
      %51 = vsyncadd [#allocation9], %s50
      %s52 = sshll.u32 [#allocation10], 4
      %s53 = int_to_ptr.vmem [resolvable:$true] %s52
      %58 = dma.hbm_to_vmem [thread:$0]  %s4, 8192, %s53, [#allocation9], 512, 512, 32
    $region21: #{lstm_model_forward.1} parent=1 // pred_fallthru
      _
    // Predicated region
    $region22: #{lstm_model_forward.1} parent=1 // pred_check
      _
    $region23: #{lstm_model_forward.1} parent=1 // pred_check_branch
      %60 = sbr.rel (0) target = $region25
    $region24: #{lstm_model_forward.1} parent=1 // pred_region
      %s62 = ssub.s32 8192, 8192
      %63 = vsyncadd [#allocation12], %s62
      %s64 = sshll.u32 [#allocation11], 4
      %s65 = int_to_ptr.vmem [resolvable:$true] %s64
      %70 = dma.hbm_to_vmem [thread:$0]  %s5, 8192, %s65, [#allocation12], 512, 512, 32
    $region25: #{lstm_model_forward.1} parent=1 // pred_fallthru
      _
    // Predicated region
    $region26: #{lstm_model_forward.1} parent=1 // pred_check
      _
    $region27: #{lstm_model_forward.1} parent=1 // pred_check_branch
      %72 = sbr.rel (0) target = $region29
    $region28: #{lstm_model_forward.1} parent=1 // pred_region
      _
    $region29: #{lstm_model_forward.1} parent=1 // pred_fallthru
      _
    // Predicated region
    $region30: #{lstm_model_forward.1} parent=1 // pred_check
      _
    $region31: #{lstm_model_forward.1} parent=1 // pred_check_branch
      %74 = sbr.rel (0) target = $region33
    $region32: #{lstm_model_forward.1} parent=1 // pred_region
      _
    $region33: #{lstm_model_forward.1} parent=1 // pred_fallthru
      _
    // Predicated region
    $region34: #{lstm_model_forward.1} parent=1 // pred_check
      _
    $region35: #{lstm_model_forward.1} parent=1 // pred_check_branch
      %76 = sbr.rel (0) target = $region37
    $region36: #{lstm_model_forward.1} parent=1 // pred_region
      _
    $region37: #{lstm_model_forward.1} parent=1 // pred_fallthru
      _
    // Predicated region
    $region38: #{lstm_model_forward.1} parent=1 // pred_check
      _
    $region39: #{lstm_model_forward.1} parent=1 // pred_check_branch
      %78 = sbr.rel (0) target = $region41
    $region40: #{lstm_model_forward.1} parent=1 // pred_region
      _
    $region41: #{lstm_model_forward.1} parent=1 // pred_fallthru
      _
    // Predicated region
    $region42: #{lstm_model_forward.1} parent=1 // pred_check
      _
    $region43: #{lstm_model_forward.1} parent=1 // pred_check_branch
      %80 = sbr.rel (0) target = $region45
    $region44: #{lstm_model_forward.1} parent=1 // pred_region
      _
    $region45: #{lstm_model_forward.1} parent=1 // pred_fallthru
      _
    // Predicated region
    $region46: #{lstm_model_forward.1} parent=1 // pred_check
      _
    $region47: #{lstm_model_forward.1} parent=1 // pred_check_branch
      %82 = sbr.rel (0) target = $region49
    $region48: #{lstm_model_forward.1} parent=1 // pred_region
      %83 = dma.done [#allocation7], 8192
    $region49: #{lstm_model_forward.1} parent=1 // pred_fallthru
      _
    // Predicated region
    $region50: #{lstm_model_forward.1} parent=1 // pred_check
      _
    $region51: #{lstm_model_forward.1} parent=1 // pred_check_branch
      %85 = sbr.rel (0) target = $region53
    $region52: #{lstm_model_forward.1} parent=1 // pred_region
      %86 = dma.done [#allocation9], 8192
    $region53: #{lstm_model_forward.1} parent=1 // pred_fallthru
      _
    // Predicated region
    $region54: #{lstm_model_forward.1} parent=1 // pred_check
      _
    $region55: #{lstm_model_forward.1} parent=1 // pred_check_branch
      %88 = sbr.rel (0) target = $region57
    $region56: #{lstm_model_forward.1} parent=1 // pred_region
      %89 = dma.done [#allocation9], 8192
    $region57: #{lstm_model_forward.1} parent=1 // pred_fallthru
      _
    // Predicated region
    $region58: #{lstm_model_forward.1} parent=1 // pred_check
      _
    $region59: #{lstm_model_forward.1} parent=1 // pred_check_branch
      %91 = sbr.rel (0) target = $region61
    $region60: #{lstm_model_forward.1} parent=1 // pred_region
      %92 = dma.done [#allocation12], 8192
    $region61: #{lstm_model_forward.1} parent=1 // pred_fallthru
      _
    %p93 = scmp.eq.s32.totalorder 0, 0
    // Predicated region
    $region62: #{lstm_model_forward.1} parent=1 // pred_check
      %p94 = pneg %p93
    $region63: #{lstm_model_forward.1} parent=1 // pred_check_branch
      %96 = sbr.rel (%p94) target = $region65
    $region64: #{lstm_model_forward.1} parent=1 // pred_region
      %97 = vst [vmem:[#allocation2] sm:$0xff] 0.0
      %98 = vst [vmem:[#allocation2 + $0x8] sm:$0xff] 0.0
      %99 = vst [vmem:[#allocation3] sm:$0xff] 0.0
      %100 = vst [vmem:[#allocation3 + $0x8] sm:$0xff] 0.0
    $region65: #{lstm_model_forward.1} parent=1 // pred_fallthru
      _
    %v101 = vld [vmem:[%s7] sm:$0xf]
    %v103 = vlaneseq
    %v104 = vshrl.u32 %v103, 7
    %v105 = vsub.s32 0, %v104
    %v106 = vrot.slane %v101, %v105
    %v107 = vlaneseq
    %v108 = vshrl.u32 %v107, 7
    %v109 = vsub.s32 1, %v108
    %v110 = vrot.slane %v101, %v109
    %v111 = vlaneseq
    %v112 = vshrl.u32 %v111, 7
    %v113 = vsub.s32 2, %v112
    %v114 = vrot.slane %v101, %v113
    %v115 = vlaneseq
    %v116 = vshrl.u32 %v115, 7
    %v117 = vsub.s32 3, %v116
    %v118 = vrot.slane %v101, %v117
    %v123 = vld [vmem:[%s8] sm:$0xf]
    %v125 = vlaneseq
    %v126 = vshrl.u32 %v125, 7
    %v127 = vsub.s32 0, %v126
    %v128 = vrot.slane %v123, %v127
    %v129 = vlaneseq
    %v130 = vshrl.u32 %v129, 7
    %v131 = vsub.s32 1, %v130
    %v132 = vrot.slane %v123, %v131
    %v133 = vlaneseq
    %v134 = vshrl.u32 %v133, 7
    %v135 = vsub.s32 2, %v134
    %v136 = vrot.slane %v123, %v135
    %v137 = vlaneseq
    %v138 = vshrl.u32 %v137, 7
    %v139 = vsub.s32 3, %v138
    %v140 = vrot.slane %v123, %v139
    %v145 = vld [vmem:[#allocation6] sm:$0xff]
    %v146 = vld [vmem:[#allocation6 + $0x8] sm:$0xff]
    %v147 = vld [vmem:[#allocation6 + $0x10] sm:$0xff]
    %v148 = vld [vmem:[#allocation6 + $0x18] sm:$0xff]
    %v149 = vld [vmem:[#allocation6 + $0x20] sm:$0xff]
    %v150 = vld [vmem:[#allocation6 + $0x28] sm:$0xff]
    %v151 = vld [vmem:[#allocation6 + $0x30] sm:$0xff]
    %v152 = vld [vmem:[#allocation6 + $0x38] sm:$0xff]
    %v153 = vld [vmem:[#allocation6 + $0x40] sm:$0xff]
    %v154 = vld [vmem:[#allocation6 + $0x48] sm:$0xff]
    %v155 = vld [vmem:[#allocation6 + $0x50] sm:$0xff]
    %v156 = vld [vmem:[#allocation6 + $0x58] sm:$0xff]
    %v157 = vld [vmem:[#allocation6 + $0x60] sm:$0xff]
    %v158 = vld [vmem:[#allocation6 + $0x68] sm:$0xff]
    %v159 = vld [vmem:[#allocation6 + $0x70] sm:$0xff]
    %v160 = vld [vmem:[#allocation6 + $0x78] sm:$0xff]
    %v161 = vld [vmem:[#allocation6 + $0x80] sm:$0xff]
    %v162 = vld [vmem:[#allocation6 + $0x88] sm:$0xff]
    %v163 = vld [vmem:[#allocation6 + $0x90] sm:$0xff]
    %v164 = vld [vmem:[#allocation6 + $0x98] sm:$0xff]
    %v165 = vld [vmem:[#allocation6 + $0xa0] sm:$0xff]
    %v166 = vld [vmem:[#allocation6 + $0xa8] sm:$0xff]
    %v167 = vld [vmem:[#allocation6 + $0xb0] sm:$0xff]
    %v168 = vld [vmem:[#allocation6 + $0xb8] sm:$0xff]
    %v169 = vld [vmem:[#allocation6 + $0xc0] sm:$0xff]
    %v170 = vld [vmem:[#allocation6 + $0xc8] sm:$0xff]
    %v171 = vld [vmem:[#allocation6 + $0xd0] sm:$0xff]
    %v172 = vld [vmem:[#allocation6 + $0xd8] sm:$0xff]
    %v173 = vld [vmem:[#allocation6 + $0xe0] sm:$0xff]
    %v174 = vld [vmem:[#allocation6 + $0xe8] sm:$0xff]
    %v175 = vld [vmem:[#allocation6 + $0xf0] sm:$0xff]
    %v176 = vld [vmem:[#allocation6 + $0xf8] sm:$0xff]
    %v177 = vld [vmem:[#allocation6 + $0x100] sm:$0xff]
    %v178 = vld [vmem:[#allocation6 + $0x108] sm:$0xff]
    %v179 = vld [vmem:[#allocation6 + $0x110] sm:$0xff]
    %v180 = vld [vmem:[#allocation6 + $0x118] sm:$0xff]
    %v181 = vld [vmem:[#allocation6 + $0x120] sm:$0xff]
    %v182 = vld [vmem:[#allocation6 + $0x128] sm:$0xff]
    %v183 = vld [vmem:[#allocation6 + $0x130] sm:$0xff]
    %v184 = vld [vmem:[#allocation6 + $0x138] sm:$0xff]
    %v185 = vld [vmem:[#allocation6 + $0x140] sm:$0xff]
    %v186 = vld [vmem:[#allocation6 + $0x148] sm:$0xff]
    %v187 = vld [vmem:[#allocation6 + $0x150] sm:$0xff]
    %v188 = vld [vmem:[#allocation6 + $0x158] sm:$0xff]
    %v189 = vld [vmem:[#allocation6 + $0x160] sm:$0xff]
    %v190 = vld [vmem:[#allocation6 + $0x168] sm:$0xff]
    %v191 = vld [vmem:[#allocation6 + $0x170] sm:$0xff]
    %v192 = vld [vmem:[#allocation6 + $0x178] sm:$0xff]
    %v193 = vld [vmem:[#allocation6 + $0x180] sm:$0xff]
    %v194 = vld [vmem:[#allocation6 + $0x188] sm:$0xff]
    %v195 = vld [vmem:[#allocation6 + $0x190] sm:$0xff]
    %v196 = vld [vmem:[#allocation6 + $0x198] sm:$0xff]
    %v197 = vld [vmem:[#allocation6 + $0x1a0] sm:$0xff]
    %v198 = vld [vmem:[#allocation6 + $0x1a8] sm:$0xff]
    %v199 = vld [vmem:[#allocation6 + $0x1b0] sm:$0xff]
    %v200 = vld [vmem:[#allocation6 + $0x1b8] sm:$0xff]
    %v201 = vld [vmem:[#allocation6 + $0x1c0] sm:$0xff]
    %v202 = vld [vmem:[#allocation6 + $0x1c8] sm:$0xff]
    %v203 = vld [vmem:[#allocation6 + $0x1d0] sm:$0xff]
    %v204 = vld [vmem:[#allocation6 + $0x1d8] sm:$0xff]
    %v205 = vld [vmem:[#allocation6 + $0x1e0] sm:$0xff]
    %v206 = vld [vmem:[#allocation6 + $0x1e8] sm:$0xff]
    %v207 = vld [vmem:[#allocation6 + $0x1f0] sm:$0xff]
    %v208 = vld [vmem:[#allocation6 + $0x1f8] sm:$0xff]
    %v209 = vld [vmem:[#allocation8] sm:$0xff]
    %v210 = vld [vmem:[#allocation8 + $0x8] sm:$0xff]
    %v211 = vld [vmem:[#allocation8 + $0x10] sm:$0xff]
    %v212 = vld [vmem:[#allocation8 + $0x18] sm:$0xff]
    %v213 = vld [vmem:[#allocation8 + $0x20] sm:$0xff]
    %v214 = vld [vmem:[#allocation8 + $0x28] sm:$0xff]
    %v215 = vld [vmem:[#allocation8 + $0x30] sm:$0xff]
    %v216 = vld [vmem:[#allocation8 + $0x38] sm:$0xff]
    %v217 = vld [vmem:[#allocation8 + $0x40] sm:$0xff]
    %v218 = vld [vmem:[#allocation8 + $0x48] sm:$0xff]
    %v219 = vld [vmem:[#allocation8 + $0x50] sm:$0xff]
    %v220 = vld [vmem:[#allocation8 + $0x58] sm:$0xff]
    %v221 = vld [vmem:[#allocation8 + $0x60] sm:$0xff]
    %v222 = vld [vmem:[#allocation8 + $0x68] sm:$0xff]
    %v223 = vld [vmem:[#allocation8 + $0x70] sm:$0xff]
    %v224 = vld [vmem:[#allocation8 + $0x78] sm:$0xff]
    %v225 = vld [vmem:[#allocation8 + $0x80] sm:$0xff]
    %v226 = vld [vmem:[#allocation8 + $0x88] sm:$0xff]
    %v227 = vld [vmem:[#allocation8 + $0x90] sm:$0xff]
    %v228 = vld [vmem:[#allocation8 + $0x98] sm:$0xff]
    %v229 = vld [vmem:[#allocation8 + $0xa0] sm:$0xff]
    %v230 = vld [vmem:[#allocation8 + $0xa8] sm:$0xff]
    %v231 = vld [vmem:[#allocation8 + $0xb0] sm:$0xff]
    %v232 = vld [vmem:[#allocation8 + $0xb8] sm:$0xff]
    %v233 = vld [vmem:[#allocation8 + $0xc0] sm:$0xff]
    %v234 = vld [vmem:[#allocation8 + $0xc8] sm:$0xff]
    %v235 = vld [vmem:[#allocation8 + $0xd0] sm:$0xff]
    %v236 = vld [vmem:[#allocation8 + $0xd8] sm:$0xff]
    %v237 = vld [vmem:[#allocation8 + $0xe0] sm:$0xff]
    %v238 = vld [vmem:[#allocation8 + $0xe8] sm:$0xff]
    %v239 = vld [vmem:[#allocation8 + $0xf0] sm:$0xff]
    %v240 = vld [vmem:[#allocation8 + $0xf8] sm:$0xff]
    %v241 = vld [vmem:[#allocation8 + $0x100] sm:$0xff]
    %v242 = vld [vmem:[#allocation8 + $0x108] sm:$0xff]
    %v243 = vld [vmem:[#allocation8 + $0x110] sm:$0xff]
    %v244 = vld [vmem:[#allocation8 + $0x118] sm:$0xff]
    %v245 = vld [vmem:[#allocation8 + $0x120] sm:$0xff]
    %v246 = vld [vmem:[#allocation8 + $0x128] sm:$0xff]
    %v247 = vld [vmem:[#allocation8 + $0x130] sm:$0xff]
    %v248 = vld [vmem:[#allocation8 + $0x138] sm:$0xff]
    %v249 = vld [vmem:[#allocation8 + $0x140] sm:$0xff]
    %v250 = vld [vmem:[#allocation8 + $0x148] sm:$0xff]
    %v251 = vld [vmem:[#allocation8 + $0x150] sm:$0xff]
    %v252 = vld [vmem:[#allocation8 + $0x158] sm:$0xff]
    %v253 = vld [vmem:[#allocation8 + $0x160] sm:$0xff]
    %v254 = vld [vmem:[#allocation8 + $0x168] sm:$0xff]
    %v255 = vld [vmem:[#allocation8 + $0x170] sm:$0xff]
    %v256 = vld [vmem:[#allocation8 + $0x178] sm:$0xff]
    %v257 = vld [vmem:[#allocation8 + $0x180] sm:$0xff]
    %v258 = vld [vmem:[#allocation8 + $0x188] sm:$0xff]
    %v259 = vld [vmem:[#allocation8 + $0x190] sm:$0xff]
    %v260 = vld [vmem:[#allocation8 + $0x198] sm:$0xff]
    %v261 = vld [vmem:[#allocation8 + $0x1a0] sm:$0xff]
    %v262 = vld [vmem:[#allocation8 + $0x1a8] sm:$0xff]
    %v263 = vld [vmem:[#allocation8 + $0x1b0] sm:$0xff]
    %v264 = vld [vmem:[#allocation8 + $0x1b8] sm:$0xff]
    %v265 = vld [vmem:[#allocation8 + $0x1c0] sm:$0xff]
    %v266 = vld [vmem:[#allocation8 + $0x1c8] sm:$0xff]
    %v267 = vld [vmem:[#allocation8 + $0x1d0] sm:$0xff]
    %v268 = vld [vmem:[#allocation8 + $0x1d8] sm:$0xff]
    %v269 = vld [vmem:[#allocation8 + $0x1e0] sm:$0xff]
    %v270 = vld [vmem:[#allocation8 + $0x1e8] sm:$0xff]
    %v271 = vld [vmem:[#allocation8 + $0x1f0] sm:$0xff]
    %v272 = vld [vmem:[#allocation8 + $0x1f8] sm:$0xff]
    %v273 = vld [vmem:[%s0] sm:$0xff]
    %v274 = vld [vmem:[%s0 + $0x8] sm:$0xff]
    %v275 = vld [vmem:[%s0 + $0x10] sm:$0xff]
    %v276 = vld [vmem:[%s0 + $0x18] sm:$0xff]
    %v277 = vld [vmem:[%s0 + $0x20] sm:$0xff]
    %v278 = vld [vmem:[%s0 + $0x28] sm:$0xff]
    %v279 = vld [vmem:[%s0 + $0x30] sm:$0xff]
    %v280 = vld [vmem:[%s0 + $0x38] sm:$0xff]
    %v281 = vld [vmem:[%s3] sm:$0xf]
    %v283 = vlaneseq
    %v284 = vshrl.u32 %v283, 7
    %v285 = vsub.s32 0, %v284
    %v286 = vrot.slane %v281, %v285
    %v287 = vlaneseq
    %v288 = vshrl.u32 %v287, 7
    %v289 = vsub.s32 1, %v288
    %v290 = vrot.slane %v281, %v289
    %v291 = vlaneseq
    %v292 = vshrl.u32 %v291, 7
    %v293 = vsub.s32 2, %v292
    %v294 = vrot.slane %v281, %v293
    %v295 = vlaneseq
    %v296 = vshrl.u32 %v295, 7
    %v297 = vsub.s32 3, %v296
    %v298 = vrot.slane %v281, %v297
    %303 = vmatprep.subr.mxu0 %v146
    %304 = vmatpush1.msra.mxu0 %v145
    %305 = vmatprep.subr.mxu0 %v150
    %306 = vmatpush1.msra.mxu0 %v149
    %307 = vmatprep.subr.mxu0 %v154
    %308 = vmatpush1.msra.mxu0 %v153
    %309 = vmatprep.subr.mxu0 %v158
    %310 = vmatpush1.msra.mxu0 %v157
    %311 = vmatprep.subr.mxu0 %v162
    %312 = vmatpush1.msra.mxu0 %v161
    %313 = vmatprep.subr.mxu0 %v166
    %314 = vmatpush1.msra.mxu0 %v165
    %315 = vmatprep.subr.mxu0 %v170
    %316 = vmatpush1.msra.mxu0 %v169
    %317 = vmatprep.subr.mxu0 %v174
    %318 = vmatpush1.msra.mxu0 %v173
    %319 = vmatprep.subr.mxu0 %v178
    %320 = vmatpush1.msra.mxu0 %v177
    %321 = vmatprep.subr.mxu0 %v182
    %322 = vmatpush1.msra.mxu0 %v181
    %323 = vmatprep.subr.mxu0 %v186
    %324 = vmatpush1.msra.mxu0 %v185
    %325 = vmatprep.subr.mxu0 %v190
    %326 = vmatpush1.msra.mxu0 %v189
    %327 = vmatprep.subr.mxu0 %v194
    %328 = vmatpush1.msra.mxu0 %v193
    %329 = vmatprep.subr.mxu0 %v198
    %330 = vmatpush1.msra.mxu0 %v197
    %331 = vmatprep.subr.mxu0 %v202
    %332 = vmatpush1.msra.mxu0 %v201
    %333 = vmatprep.subr.mxu0 %v206
    %334 = vmatpush1.msra.mxu0 %v205
    %335 = vmatprep.subr.mxu0 0.0
    %336 = vmatpush1.msra.mxu0 0.0
    %337 = vmatprep.subr.mxu0 0.0
    %338 = vmatpush1.msra.mxu0 0.0
    %339 = vmatprep.subr.mxu0 0.0
    %340 = vmatpush1.msra.mxu0 0.0
    %341 = vmatprep.subr.mxu0 0.0
    %342 = vmatpush1.msra.mxu0 0.0
    %343 = vmatprep.subr.mxu0 0.0
    %344 = vmatpush1.msra.mxu0 0.0
    %345 = vmatprep.subr.mxu0 0.0
    %346 = vmatpush1.msra.mxu0 0.0
    %347 = vmatprep.subr.mxu0 0.0
    %348 = vmatpush1.msra.mxu0 0.0
    %349 = vmatprep.subr.mxu0 0.0
    %350 = vmatpush1.msra.mxu0 0.0
    %351 = vmatprep.subr.mxu0 0.0
    %352 = vmatpush1.msra.mxu0 0.0
    %353 = vmatprep.subr.mxu0 0.0
    %354 = vmatpush1.msra.mxu0 0.0
    %355 = vmatprep.subr.mxu0 0.0
    %356 = vmatpush1.msra.mxu0 0.0
    %357 = vmatprep.subr.mxu0 0.0
    %358 = vmatpush1.msra.mxu0 0.0
    %359 = vmatprep.subr.mxu0 0.0
    %360 = vmatpush1.msra.mxu0 0.0
    %361 = vmatprep.subr.mxu0 0.0
    %362 = vmatpush1.msra.mxu0 0.0
    %363 = vmatprep.subr.mxu0 0.0
    %364 = vmatpush1.msra.mxu0 0.0
    %365 = vmatprep.subr.mxu0 0.0
    %366 = vmatpush1.msra.mxu0 0.0
    %367 = vmatprep.mubr.f32.mxu0 0.0
    %368 = vmatmul.mubr.f32.gmra.mrb[0].mxu0 %v273
    %v369 = vpop.f32.mrb[0].mxu0
    %v370 = vadd.f32 %v286, %v369
    %v371 = vpop.f32.mrb[0].mxu0
    %v372 = vadd.f32 %v290, %v371
    %373 = vmatprep.mubr.f32.mxu0 0.0
    %374 = vmatmul.mubr.f32.gmra.mrb[0].mxu0 %v274
    %v375 = vpop.f32.mrb[0].mxu0
    %v376 = vadd.f32 %v286, %v375
    %v377 = vpop.f32.mrb[0].mxu0
    %v378 = vadd.f32 %v290, %v377
    %379 = vmatprep.mubr.f32.mxu0 0.0
    %380 = vmatmul.mubr.f32.gmra.mrb[0].mxu0 %v275
    %v381 = vpop.f32.mrb[0].mxu0
    %v382 = vadd.f32 %v286, %v381
    %v383 = vpop.f32.mrb[0].mxu0
    %v384 = vadd.f32 %v290, %v383
    %385 = vmatprep.mubr.f32.mxu0 0.0
    %386 = vmatmul.mubr.f32.gmra.mrb[0].mxu0 %v276
    %v387 = vpop.f32.mrb[0].mxu0
    %v388 = vadd.f32 %v286, %v387
    %v389 = vpop.f32.mrb[0].mxu0
    %v390 = vadd.f32 %v290, %v389
    %391 = vmatprep.mubr.f32.mxu0 0.0
    %392 = vmatmul.mubr.f32.gmra.mrb[0].mxu0 %v277
    %v393 = vpop.f32.mrb[0].mxu0
    %v394 = vadd.f32 %v286, %v393
    %v395 = vpop.f32.mrb[0].mxu0
    %v396 = vadd.f32 %v290, %v395
    %397 = vmatprep.mubr.f32.mxu0 0.0
    %398 = vmatmul.mubr.f32.gmra.mrb[0].mxu0 %v278
    %v399 = vpop.f32.mrb[0].mxu0
    %v400 = vadd.f32 %v286, %v399
    %v401 = vpop.f32.mrb[0].mxu0
    %v402 = vadd.f32 %v290, %v401
    %403 = vmatprep.mubr.f32.mxu0 0.0
    %404 = vmatmul.mubr.f32.gmra.mrb[0].mxu0 %v279
    %v405 = vpop.f32.mrb[0].mxu0
    %v406 = vadd.f32 %v286, %v405
    %v407 = vpop.f32.mrb[0].mxu0
    %v408 = vadd.f32 %v290, %v407
    %409 = vmatprep.mubr.f32.mxu0 0.0
    %410 = vmatmul.mubr.f32.gmra.mrb[0].mxu0 %v280
    %v411 = vpop.f32.mrb[0].mxu0
    %v412 = vadd.f32 %v286, %v411
    %v413 = vpop.f32.mrb[0].mxu0
    %v414 = vadd.f32 %v290, %v413
    %415 = vdwg.mxu0
    %416 = vmatprep.subr.mxu0 %v148
    %417 = vmatpush1.msra.mxu0 %v147
    %418 = vmatprep.subr.mxu0 %v152
    %419 = vmatpush1.msra.mxu0 %v151
    %420 = vmatprep.subr.mxu0 %v156
    %421 = vmatpush1.msra.mxu0 %v155
    %422 = vmatprep.subr.mxu0 %v160
    %423 = vmatpush1.msra.mxu0 %v159
    %424 = vmatprep.subr.mxu0 %v164
    %425 = vmatpush1.msra.mxu0 %v163
    %426 = vmatprep.subr.mxu0 %v168
    %427 = vmatpush1.msra.mxu0 %v167
    %428 = vmatprep.subr.mxu0 %v172
    %429 = vmatpush1.msra.mxu0 %v171
    %430 = vmatprep.subr.mxu0 %v176
    %431 = vmatpush1.msra.mxu0 %v175
    %432 = vmatprep.subr.mxu0 %v180
    %433 = vmatpush1.msra.mxu0 %v179
    %434 = vmatprep.subr.mxu0 %v184
    %435 = vmatpush1.msra.mxu0 %v183
    %436 = vmatprep.subr.mxu0 %v188
    %437 = vmatpush1.msra.mxu0 %v187
    %438 = vmatprep.subr.mxu0 %v192
    %439 = vmatpush1.msra.mxu0 %v191
    %440 = vmatprep.subr.mxu0 %v196
    %441 = vmatpush1.msra.mxu0 %v195
    %442 = vmatprep.subr.mxu0 %v200
    %443 = vmatpush1.msra.mxu0 %v199
    %444 = vmatprep.subr.mxu0 %v204
    %445 = vmatpush1.msra.mxu0 %v203
    %446 = vmatprep.subr.mxu0 %v208
    %447 = vmatpush1.msra.mxu0 %v207
    %448 = vmatprep.subr.mxu0 0.0
    %449 = vmatpush1.msra.mxu0 0.0
    %450 = vmatprep.subr.mxu0 0.0
    %451 = vmatpush1.msra.mxu0 0.0
    %452 = vmatprep.subr.mxu0 0.0
    %453 = vmatpush1.msra.mxu0 0.0
    %454 = vmatprep.subr.mxu0 0.0
    %455 = vmatpush1.msra.mxu0 0.0
    %456 = vmatprep.subr.mxu0 0.0
    %457 = vmatpush1.msra.mxu0 0.0
    %458 = vmatprep.subr.mxu0 0.0
    %459 = vmatpush1.msra.mxu0 0.0
    %460 = vmatprep.subr.mxu0 0.0
    %461 = vmatpush1.msra.mxu0 0.0
    %462 = vmatprep.subr.mxu0 0.0
    %463 = vmatpush1.msra.mxu0 0.0
    %464 = vmatprep.subr.mxu0 0.0
    %465 = vmatpush1.msra.mxu0 0.0
    %466 = vmatprep.subr.mxu0 0.0
    %467 = vmatpush1.msra.mxu0 0.0
    %468 = vmatprep.subr.mxu0 0.0
    %469 = vmatpush1.msra.mxu0 0.0
    %470 = vmatprep.subr.mxu0 0.0
    %471 = vmatpush1.msra.mxu0 0.0
    %472 = vmatprep.subr.mxu0 0.0
    %473 = vmatpush1.msra.mxu0 0.0
    %474 = vmatprep.subr.mxu0 0.0
    %475 = vmatpush1.msra.mxu0 0.0
    %476 = vmatprep.subr.mxu0 0.0
    %477 = vmatpush1.msra.mxu0 0.0
    %478 = vmatprep.subr.mxu0 0.0
    %479 = vmatpush1.msra.mxu0 0.0
    %480 = vmatprep.mubr.f32.mxu0 0.0
    %481 = vmatmul.mubr.f32.gmra.mrb[0].mxu0 %v273
    %v482 = vpop.f32.mrb[0].mxu0
    %v483 = vadd.f32 %v294, %v482
    %v484 = vpop.f32.mrb[0].mxu0
    %v485 = vadd.f32 %v298, %v484
    %486 = vmatprep.mubr.f32.mxu0 0.0
    %487 = vmatmul.mubr.f32.gmra.mrb[0].mxu0 %v274
    %v488 = vpop.f32.mrb[0].mxu0
    %v489 = vadd.f32 %v294, %v488
    %v490 = vpop.f32.mrb[0].mxu0
    %v491 = vadd.f32 %v298, %v490
    %492 = vmatprep.mubr.f32.mxu0 0.0
    %493 = vmatmul.mubr.f32.gmra.mrb[0].mxu0 %v275
    %v494 = vpop.f32.mrb[0].mxu0
    %v495 = vadd.f32 %v294, %v494
    %v496 = vpop.f32.mrb[0].mxu0
    %v497 = vadd.f32 %v298, %v496
    %498 = vmatprep.mubr.f32.mxu0 0.0
    %499 = vmatmul.mubr.f32.gmra.mrb[0].mxu0 %v276
    %v500 = vpop.f32.mrb[0].mxu0
    %v501 = vadd.f32 %v294, %v500
    %v502 = vpop.f32.mrb[0].mxu0
    %v503 = vadd.f32 %v298, %v502
    %504 = vmatprep.mubr.f32.mxu0 0.0
    %505 = vmatmul.mubr.f32.gmra.mrb[0].mxu0 %v277
    %v506 = vpop.f32.mrb[0].mxu0
    %v507 = vadd.f32 %v294, %v506
    %v508 = vpop.f32.mrb[0].mxu0
    %v509 = vadd.f32 %v298, %v508
    %510 = vmatprep.mubr.f32.mxu0 0.0
    %511 = vmatmul.mubr.f32.gmra.mrb[0].mxu0 %v278
    %v512 = vpop.f32.mrb[0].mxu0
    %v513 = vadd.f32 %v294, %v512
    %v514 = vpop.f32.mrb[0].mxu0
    %v515 = vadd.f32 %v298, %v514
    %516 = vmatprep.mubr.f32.mxu0 0.0
    %517 = vmatmul.mubr.f32.gmra.mrb[0].mxu0 %v279
    %v518 = vpop.f32.mrb[0].mxu0
    %v519 = vadd.f32 %v294, %v518
    %v520 = vpop.f32.mrb[0].mxu0
    %v521 = vadd.f32 %v298, %v520
    %522 = vmatprep.mubr.f32.mxu0 0.0
    %523 = vmatmul.mubr.f32.gmra.mrb[0].mxu0 %v280
    %v524 = vpop.f32.mrb[0].mxu0
    %v525 = vadd.f32 %v294, %v524
    %v526 = vpop.f32.mrb[0].mxu0
    %v527 = vadd.f32 %v298, %v526
    %528 = vdwg.mxu0
    %529 = vst [vmem:[#allocation4] sm:$0xff] %v370
    %530 = vst [vmem:[#allocation4 + $0x8] sm:$0xff] %v372
    %531 = vst [vmem:[#allocation4 + $0x10] sm:$0xff] %v483
    %532 = vst [vmem:[#allocation4 + $0x18] sm:$0xff] %v485
    %533 = vst [vmem:[#allocation4 + $0x20] sm:$0xff] %v376
    %534 = vst [vmem:[#allocation4 + $0x28] sm:$0xff] %v378
    %535 = vst [vmem:[#allocation4 + $0x30] sm:$0xff] %v489
    %536 = vst [vmem:[#allocation4 + $0x38] sm:$0xff] %v491
    %537 = vst [vmem:[#allocation4 + $0x40] sm:$0xff] %v382
    %538 = vst [vmem:[#allocation4 + $0x48] sm:$0xff] %v384
    %539 = vst [vmem:[#allocation4 + $0x50] sm:$0xff] %v495
    %540 = vst [vmem:[#allocation4 + $0x58] sm:$0xff] %v497
    %541 = vst [vmem:[#allocation4 + $0x60] sm:$0xff] %v388
    %542 = vst [vmem:[#allocation4 + $0x68] sm:$0xff] %v390
    %543 = vst [vmem:[#allocation4 + $0x70] sm:$0xff] %v501
    %544 = vst [vmem:[#allocation4 + $0x78] sm:$0xff] %v503
    %545 = vst [vmem:[#allocation4 + $0x80] sm:$0xff] %v394
    %546 = vst [vmem:[#allocation4 + $0x88] sm:$0xff] %v396
    %547 = vst [vmem:[#allocation4 + $0x90] sm:$0xff] %v507
    %548 = vst [vmem:[#allocation4 + $0x98] sm:$0xff] %v509
    %549 = vst [vmem:[#allocation4 + $0xa0] sm:$0xff] %v400
    %550 = vst [vmem:[#allocation4 + $0xa8] sm:$0xff] %v402
    %551 = vst [vmem:[#allocation4 + $0xb0] sm:$0xff] %v513
    %552 = vst [vmem:[#allocation4 + $0xb8] sm:$0xff] %v515
    %553 = vst [vmem:[#allocation4 + $0xc0] sm:$0xff] %v406
    %554 = vst [vmem:[#allocation4 + $0xc8] sm:$0xff] %v408
    %555 = vst [vmem:[#allocation4 + $0xd0] sm:$0xff] %v519
    %556 = vst [vmem:[#allocation4 + $0xd8] sm:$0xff] %v521
    %557 = vst [vmem:[#allocation4 + $0xe0] sm:$0xff] %v412
    %558 = vst [vmem:[#allocation4 + $0xe8] sm:$0xff] %v414
    %559 = vst [vmem:[#allocation4 + $0xf0] sm:$0xff] %v525
    %560 = vst [vmem:[#allocation4 + $0xf8] sm:$0xff] %v527
    %v561 = vld [vmem:[#allocation2] sm:$0xff]
    %v562 = vld [vmem:[#allocation3] sm:$0xff]
    %s563 = smul.u32 0, 4
    %s564 = smul.addr %s563, 8
    %s565 = scalar_lea.vmem [#allocation4], %s564
    %v566 = vld [vmem:[%s565] sm:$0xff]
    %v567 = vld [vmem:[%s565 + $0x8] sm:$0xff]
    %v568 = vld [vmem:[%s565 + $0x10] sm:$0xff]
    %v569 = vld [vmem:[%s565 + $0x18] sm:$0xff]
    %570 = vmatprep.subr.mxu0 %v210
    %571 = vmatpush1.msra.mxu0 %v209
    %572 = vmatprep.subr.mxu0 %v214
    %573 = vmatpush1.msra.mxu0 %v213
    %574 = vmatprep.subr.mxu0 %v218
    %575 = vmatpush1.msra.mxu0 %v217
    %576 = vmatprep.subr.mxu0 %v222
    %577 = vmatpush1.msra.mxu0 %v221
    %578 = vmatprep.subr.mxu0 %v226
    %579 = vmatpush1.msra.mxu0 %v225
    %580 = vmatprep.subr.mxu0 %v230
    %581 = vmatpush1.msra.mxu0 %v229
    %582 = vmatprep.subr.mxu0 %v234
    %583 = vmatpush1.msra.mxu0 %v233
    %584 = vmatprep.subr.mxu0 %v238
    %585 = vmatpush1.msra.mxu0 %v237
    %586 = vmatprep.subr.mxu0 %v242
    %587 = vmatpush1.msra.mxu0 %v241
    %588 = vmatprep.subr.mxu0 %v246
    %589 = vmatpush1.msra.mxu0 %v245
    %590 = vmatprep.subr.mxu0 %v250
    %591 = vmatpush1.msra.mxu0 %v249
    %592 = vmatprep.subr.mxu0 %v254
    %593 = vmatpush1.msra.mxu0 %v253
    %594 = vmatprep.subr.mxu0 %v258
    %595 = vmatpush1.msra.mxu0 %v257
    %596 = vmatprep.subr.mxu0 %v262
    %597 = vmatpush1.msra.mxu0 %v261
    %598 = vmatprep.subr.mxu0 %v266
    %599 = vmatpush1.msra.mxu0 %v265
    %600 = vmatprep.subr.mxu0 %v270
    %601 = vmatpush1.msra.mxu0 %v269
    %602 = vmatprep.subr.mxu0 0.0
    %603 = vmatpush1.msra.mxu0 0.0
    %604 = vmatprep.subr.mxu0 0.0
    %605 = vmatpush1.msra.mxu0 0.0
    %606 = vmatprep.subr.mxu0 0.0
    %607 = vmatpush1.msra.mxu0 0.0
    %608 = vmatprep.subr.mxu0 0.0
    %609 = vmatpush1.msra.mxu0 0.0
    %610 = vmatprep.subr.mxu0 0.0
    %611 = vmatpush1.msra.mxu0 0.0
    %612 = vmatprep.subr.mxu0 0.0
    %613 = vmatpush1.msra.mxu0 0.0
    %614 = vmatprep.subr.mxu0 0.0
    %615 = vmatpush1.msra.mxu0 0.0
    %616 = vmatprep.subr.mxu0 0.0
    %617 = vmatpush1.msra.mxu0 0.0
    %618 = vmatprep.subr.mxu0 0.0
    %619 = vmatpush1.msra.mxu0 0.0
    %620 = vmatprep.subr.mxu0 0.0
    %621 = vmatpush1.msra.mxu0 0.0
    %622 = vmatprep.subr.mxu0 0.0
    %623 = vmatpush1.msra.mxu0 0.0
    %624 = vmatprep.subr.mxu0 0.0
    %625 = vmatpush1.msra.mxu0 0.0
    %626 = vmatprep.subr.mxu0 0.0
    %627 = vmatpush1.msra.mxu0 0.0
    %628 = vmatprep.subr.mxu0 0.0
    %629 = vmatpush1.msra.mxu0 0.0
    %630 = vmatprep.subr.mxu0 0.0
    %631 = vmatpush1.msra.mxu0 0.0
    %632 = vmatprep.subr.mxu0 0.0
    %633 = vmatpush1.msra.mxu0 0.0
    %634 = vmatprep.mubr.f32.mxu0 0.0
    %635 = vmatmul.mubr.f32.gmra.mrb[0].mxu0 %v561
    %v636 = vpop.f32.mrb[0].mxu0
    %v637 = vadd.f32 0.0, %v636
    %v638 = vpop.f32.mrb[0].mxu0
    %v639 = vadd.f32 0.0, %v638
    %640 = vdwg.mxu0
    %641 = vmatprep.subr.mxu0 %v212
    %642 = vmatpush1.msra.mxu0 %v211
    %643 = vmatprep.subr.mxu0 %v216
    %644 = vmatpush1.msra.mxu0 %v215
    %645 = vmatprep.subr.mxu0 %v220
    %646 = vmatpush1.msra.mxu0 %v219
    %647 = vmatprep.subr.mxu0 %v224
    %648 = vmatpush1.msra.mxu0 %v223
    %649 = vmatprep.subr.mxu0 %v228
    %650 = vmatpush1.msra.mxu0 %v227
    %651 = vmatprep.subr.mxu0 %v232
    %652 = vmatpush1.msra.mxu0 %v231
    %653 = vmatprep.subr.mxu0 %v236
    %654 = vmatpush1.msra.mxu0 %v235
    %655 = vmatprep.subr.mxu0 %v240
    %656 = vmatpush1.msra.mxu0 %v239
    %657 = vmatprep.subr.mxu0 %v244
    %658 = vmatpush1.msra.mxu0 %v243
    %659 = vmatprep.subr.mxu0 %v248
    %660 = vmatpush1.msra.mxu0 %v247
    %661 = vmatprep.subr.mxu0 %v252
    %662 = vmatpush1.msra.mxu0 %v251
    %663 = vmatprep.subr.mxu0 %v256
    %664 = vmatpush1.msra.mxu0 %v255
    %665 = vmatprep.subr.mxu0 %v260
    %666 = vmatpush1.msra.mxu0 %v259
    %667 = vmatprep.subr.mxu0 %v264
    %668 = vmatpush1.msra.mxu0 %v263
    %669 = vmatprep.subr.mxu0 %v268
    %670 = vmatpush1.msra.mxu0 %v267
    %671 = vmatprep.subr.mxu0 %v272
    %672 = vmatpush1.msra.mxu0 %v271
    %673 = vmatprep.subr.mxu0 0.0
    %674 = vmatpush1.msra.mxu0 0.0
    %675 = vmatprep.subr.mxu0 0.0
    %676 = vmatpush1.msra.mxu0 0.0
    %677 = vmatprep.subr.mxu0 0.0
    %678 = vmatpush1.msra.mxu0 0.0
    %679 = vmatprep.subr.mxu0 0.0
    %680 = vmatpush1.msra.mxu0 0.0
    %681 = vmatprep.subr.mxu0 0.0
    %682 = vmatpush1.msra.mxu0 0.0
    %683 = vmatprep.subr.mxu0 0.0
    %684 = vmatpush1.msra.mxu0 0.0
    %685 = vmatprep.subr.mxu0 0.0
    %686 = vmatpush1.msra.mxu0 0.0
    %687 = vmatprep.subr.mxu0 0.0
    %688 = vmatpush1.msra.mxu0 0.0
    %689 = vmatprep.subr.mxu0 0.0
    %690 = vmatpush1.msra.mxu0 0.0
    %691 = vmatprep.subr.mxu0 0.0
    %692 = vmatpush1.msra.mxu0 0.0
    %693 = vmatprep.subr.mxu0 0.0
    %694 = vmatpush1.msra.mxu0 0.0
    %695 = vmatprep.subr.mxu0 0.0
    %696 = vmatpush1.msra.mxu0 0.0
    %697 = vmatprep.subr.mxu0 0.0
    %698 = vmatpush1.msra.mxu0 0.0
    %699 = vmatprep.subr.mxu0 0.0
    %700 = vmatpush1.msra.mxu0 0.0
    %701 = vmatprep.subr.mxu0 0.0
    %702 = vmatpush1.msra.mxu0 0.0
    %703 = vmatprep.subr.mxu0 0.0
    %704 = vmatpush1.msra.mxu0 0.0
    %705 = vmatprep.mubr.f32.mxu0 0.0
    %706 = vmatmul.mubr.f32.gmra.mrb[0].mxu0 %v561
    %v707 = vpop.f32.mrb[0].mxu0
    %v708 = vadd.f32 0.0, %v707
    %v709 = vpop.f32.mrb[0].mxu0
    %v710 = vadd.f32 0.0, %v709
    %711 = vdwg.mxu0
    %v712 = vadd.f32 %v566, %v637
    %v713 = vadd.f32 %v567, %v639
    %v714 = vadd.f32 %v568, %v708
    %v715 = vadd.f32 %v569, %v710
    %v716 = vtanh.pop %v712
    %v717 = vtanh.pop %v713
    %v718 = vtanh.pop %v714
    %v719 = vtanh.pop %v715
    %v720 = vmul.f32 %v716, %v106
    %v721 = vmul.f32 %v717, %v110
    %v722 = vmul.f32 %v718, %v114
    %v723 = vmul.f32 %v719, %v118
    %v724 = vadd.f32 %v720, %v128
    %v725 = vadd.f32 %v721, %v132
    %v726 = vadd.f32 %v722, %v136
    %v727 = vadd.f32 %v723, %v140
    %v728 = vmul.f32 %v725, %v562
    %v729 = vmul.f32 %v724, %v726
    %v730 = vadd.f32 %v728, %v729
    %v731 = vtanh.pop %v730
    %v732 = vmul.f32 %v727, %v731
    %733 = vst [vmem:[#allocation5] sm:$0xff] %v732
    %s734 = smul.u32 1, 4
    %s735 = smul.addr %s734, 8
    %s736 = scalar_lea.vmem [#allocation4], %s735
    %v737 = vld [vmem:[%s736] sm:$0xff]
    %v738 = vld [vmem:[%s736 + $0x8] sm:$0xff]
    %v739 = vld [vmem:[%s736 + $0x10] sm:$0xff]
    %v740 = vld [vmem:[%s736 + $0x18] sm:$0xff]
    %741 = vmatprep.subr.mxu0 %v210
    %742 = vmatpush1.msra.mxu0 %v209
    %743 = vmatprep.subr.mxu0 %v214
    %744 = vmatpush1.msra.mxu0 %v213
    %745 = vmatprep.subr.mxu0 %v218
    %746 = vmatpush1.msra.mxu0 %v217
    %747 = vmatprep.subr.mxu0 %v222
    %748 = vmatpush1.msra.mxu0 %v221
    %749 = vmatprep.subr.mxu0 %v226
    %750 = vmatpush1.msra.mxu0 %v225
    %751 = vmatprep.subr.mxu0 %v230
    %752 = vmatpush1.msra.mxu0 %v229
    %753 = vmatprep.subr.mxu0 %v234
    %754 = vmatpush1.msra.mxu0 %v233
    %755 = vmatprep.subr.mxu0 %v238
    %756 = vmatpush1.msra.mxu0 %v237
    %757 = vmatprep.subr.mxu0 %v242
    %758 = vmatpush1.msra.mxu0 %v241
    %759 = vmatprep.subr.mxu0 %v246
    %760 = vmatpush1.msra.mxu0 %v245
    %761 = vmatprep.subr.mxu0 %v250
    %762 = vmatpush1.msra.mxu0 %v249
    %763 = vmatprep.subr.mxu0 %v254
    %764 = vmatpush1.msra.mxu0 %v253
    %765 = vmatprep.subr.mxu0 %v258
    %766 = vmatpush1.msra.mxu0 %v257
    %767 = vmatprep.subr.mxu0 %v262
    %768 = vmatpush1.msra.mxu0 %v261
    %769 = vmatprep.subr.mxu0 %v266
    %770 = vmatpush1.msra.mxu0 %v265
    %771 = vmatprep.subr.mxu0 %v270
    %772 = vmatpush1.msra.mxu0 %v269
    %773 = vmatprep.subr.mxu0 0.0
    %774 = vmatpush1.msra.mxu0 0.0
    %775 = vmatprep.subr.mxu0 0.0
    %776 = vmatpush1.msra.mxu0 0.0
    %777 = vmatprep.subr.mxu0 0.0
    %778 = vmatpush1.msra.mxu0 0.0
    %779 = vmatprep.subr.mxu0 0.0
    %780 = vmatpush1.msra.mxu0 0.0
    %781 = vmatprep.subr.mxu0 0.0
    %782 = vmatpush1.msra.mxu0 0.0
    %783 = vmatprep.subr.mxu0 0.0
    %784 = vmatpush1.msra.mxu0 0.0
    %785 = vmatprep.subr.mxu0 0.0
    %786 = vmatpush1.msra.mxu0 0.0
    %787 = vmatprep.subr.mxu0 0.0
    %788 = vmatpush1.msra.mxu0 0.0
    %789 = vmatprep.subr.mxu0 0.0
    %790 = vmatpush1.msra.mxu0 0.0
    %791 = vmatprep.subr.mxu0 0.0
    %792 = vmatpush1.msra.mxu0 0.0
    %793 = vmatprep.subr.mxu0 0.0
    %794 = vmatpush1.msra.mxu0 0.0
    %795 = vmatprep.subr.mxu0 0.0
    %796 = vmatpush1.msra.mxu0 0.0
    %797 = vmatprep.subr.mxu0 0.0
    %798 = vmatpush1.msra.mxu0 0.0
    %799 = vmatprep.subr.mxu0 0.0
    %800 = vmatpush1.msra.mxu0 0.0
    %801 = vmatprep.subr.mxu0 0.0
    %802 = vmatpush1.msra.mxu0 0.0
    %803 = vmatprep.subr.mxu0 0.0
    %804 = vmatpush1.msra.mxu0 0.0
    %805 = vmatprep.mubr.f32.mxu0 0.0
    %806 = vmatmul.mubr.f32.gmra.mrb[0].mxu0 %v732
    %v807 = vpop.f32.mrb[0].mxu0
    %v808 = vadd.f32 0.0, %v807
    %v809 = vpop.f32.mrb[0].mxu0
    %v810 = vadd.f32 0.0, %v809
    %811 = vdwg.mxu0
    %812 = vmatprep.subr.mxu0 %v212
    %813 = vmatpush1.msra.mxu0 %v211
    %814 = vmatprep.subr.mxu0 %v216
    %815 = vmatpush1.msra.mxu0 %v215
    %816 = vmatprep.subr.mxu0 %v220
    %817 = vmatpush1.msra.mxu0 %v219
    %818 = vmatprep.subr.mxu0 %v224
    %819 = vmatpush1.msra.mxu0 %v223
    %820 = vmatprep.subr.mxu0 %v228
    %821 = vmatpush1.msra.mxu0 %v227
    %822 = vmatprep.subr.mxu0 %v232
    %823 = vmatpush1.msra.mxu0 %v231
    %824 = vmatprep.subr.mxu0 %v236
    %825 = vmatpush1.msra.mxu0 %v235
    %826 = vmatprep.subr.mxu0 %v240
    %827 = vmatpush1.msra.mxu0 %v239
    %828 = vmatprep.subr.mxu0 %v244
    %829 = vmatpush1.msra.mxu0 %v243
    %830 = vmatprep.subr.mxu0 %v248
    %831 = vmatpush1.msra.mxu0 %v247
    %832 = vmatprep.subr.mxu0 %v252
    %833 = vmatpush1.msra.mxu0 %v251
    %834 = vmatprep.subr.mxu0 %v256
    %835 = vmatpush1.msra.mxu0 %v255
    %836 = vmatprep.subr.mxu0 %v260
    %837 = vmatpush1.msra.mxu0 %v259
    %838 = vmatprep.subr.mxu0 %v264
    %839 = vmatpush1.msra.mxu0 %v263
    %840 = vmatprep.subr.mxu0 %v268
    %841 = vmatpush1.msra.mxu0 %v267
    %842 = vmatprep.subr.mxu0 %v272
    %843 = vmatpush1.msra.mxu0 %v271
    %844 = vmatprep.subr.mxu0 0.0
    %845 = vmatpush1.msra.mxu0 0.0
    %846 = vmatprep.subr.mxu0 0.0
    %847 = vmatpush1.msra.mxu0 0.0
    %848 = vmatprep.subr.mxu0 0.0
    %849 = vmatpush1.msra.mxu0 0.0
    %850 = vmatprep.subr.mxu0 0.0
    %851 = vmatpush1.msra.mxu0 0.0
    %852 = vmatprep.subr.mxu0 0.0
    %853 = vmatpush1.msra.mxu0 0.0
    %854 = vmatprep.subr.mxu0 0.0
    %855 = vmatpush1.msra.mxu0 0.0
    %856 = vmatprep.subr.mxu0 0.0
    %857 = vmatpush1.msra.mxu0 0.0
    %858 = vmatprep.subr.mxu0 0.0
    %859 = vmatpush1.msra.mxu0 0.0
    %860 = vmatprep.subr.mxu0 0.0
    %861 = vmatpush1.msra.mxu0 0.0
    %862 = vmatprep.subr.mxu0 0.0
    %863 = vmatpush1.msra.mxu0 0.0
    %864 = vmatprep.subr.mxu0 0.0
    %865 = vmatpush1.msra.mxu0 0.0
    %866 = vmatprep.subr.mxu0 0.0
    %867 = vmatpush1.msra.mxu0 0.0
    %868 = vmatprep.subr.mxu0 0.0
    %869 = vmatpush1.msra.mxu0 0.0
    %870 = vmatprep.subr.mxu0 0.0
    %871 = vmatpush1.msra.mxu0 0.0
    %872 = vmatprep.subr.mxu0 0.0
    %873 = vmatpush1.msra.mxu0 0.0
    %874 = vmatprep.subr.mxu0 0.0
    %875 = vmatpush1.msra.mxu0 0.0
    %876 = vmatprep.mubr.f32.mxu0 0.0
    %877 = vmatmul.mubr.f32.gmra.mrb[0].mxu0 %v732
    %v878 = vpop.f32.mrb[0].mxu0
    %v879 = vadd.f32 0.0, %v878
    %v880 = vpop.f32.mrb[0].mxu0
    %v881 = vadd.f32 0.0, %v880
    %882 = vdwg.mxu0
    %v883 = vadd.f32 %v737, %v808
    %v884 = vadd.f32 %v738, %v810
    %v885 = vadd.f32 %v739, %v879
    %v886 = vadd.f32 %v740, %v881
    %v887 = vtanh.pop %v883
    %v888 = vtanh.pop %v884
    %v889 = vtanh.pop %v885
    %v890 = vtanh.pop %v886
    %v891 = vmul.f32 %v887, %v106
    %v892 = vmul.f32 %v888, %v110
    %v893 = vmul.f32 %v889, %v114
    %v894 = vmul.f32 %v890, %v118
    %v895 = vadd.f32 %v891, %v128
    %v896 = vadd.f32 %v892, %v132
    %v897 = vadd.f32 %v893, %v136
    %v898 = vadd.f32 %v894, %v140
    %v899 = vmul.f32 %v896, %v730
    %v900 = vmul.f32 %v895, %v897
    %v901 = vadd.f32 %v899, %v900
    %v902 = vtanh.pop %v901
    %v903 = vmul.f32 %v898, %v902
    %s904 = scalar_lea.vmem [#allocation5], 8
    %905 = vst [vmem:[%s904] sm:$0xff] %v903
    %s906 = smul.u32 2, 4
    %s907 = smul.addr %s906, 8
    %s908 = scalar_lea.vmem [#allocation4], %s907
    %v909 = vld [vmem:[%s908] sm:$0xff]
    %v910 = vld [vmem:[%s908 + $0x8] sm:$0xff]
    %v911 = vld [vmem:[%s908 + $0x10] sm:$0xff]
    %v912 = vld [vmem:[%s908 + $0x18] sm:$0xff]
    %913 = vmatprep.subr.mxu0 %v210
    %914 = vmatpush1.msra.mxu0 %v209
    %915 = vmatprep.subr.mxu0 %v214
    %916 = vmatpush1.msra.mxu0 %v213
    %917 = vmatprep.subr.mxu0 %v218
    %918 = vmatpush1.msra.mxu0 %v217
    %919 = vmatprep.subr.mxu0 %v222
    %920 = vmatpush1.msra.mxu0 %v221
    %921 = vmatprep.subr.mxu0 %v226
    %922 = vmatpush1.msra.mxu0 %v225
    %923 = vmatprep.subr.mxu0 %v230
    %924 = vmatpush1.msra.mxu0 %v229
    %925 = vmatprep.subr.mxu0 %v234
    %926 = vmatpush1.msra.mxu0 %v233
    %927 = vmatprep.subr.mxu0 %v238
    %928 = vmatpush1.msra.mxu0 %v237
    %929 = vmatprep.subr.mxu0 %v242
    %930 = vmatpush1.msra.mxu0 %v241
    %931 = vmatprep.subr.mxu0 %v246
    %932 = vmatpush1.msra.mxu0 %v245
    %933 = vmatprep.subr.mxu0 %v250
    %934 = vmatpush1.msra.mxu0 %v249
    %935 = vmatprep.subr.mxu0 %v254
    %936 = vmatpush1.msra.mxu0 %v253
    %937 = vmatprep.subr.mxu0 %v258
    %938 = vmatpush1.msra.mxu0 %v257
    %939 = vmatprep.subr.mxu0 %v262
    %940 = vmatpush1.msra.mxu0 %v261
    %941 = vmatprep.subr.mxu0 %v266
    %942 = vmatpush1.msra.mxu0 %v265
    %943 = vmatprep.subr.mxu0 %v270
    %944 = vmatpush1.msra.mxu0 %v269
    %945 = vmatprep.subr.mxu0 0.0
    %946 = vmatpush1.msra.mxu0 0.0
    %947 = vmatprep.subr.mxu0 0.0
    %948 = vmatpush1.msra.mxu0 0.0
    %949 = vmatprep.subr.mxu0 0.0
    %950 = vmatpush1.msra.mxu0 0.0
    %951 = vmatprep.subr.mxu0 0.0
    %952 = vmatpush1.msra.mxu0 0.0
    %953 = vmatprep.subr.mxu0 0.0
    %954 = vmatpush1.msra.mxu0 0.0
    %955 = vmatprep.subr.mxu0 0.0
    %956 = vmatpush1.msra.mxu0 0.0
    %957 = vmatprep.subr.mxu0 0.0
    %958 = vmatpush1.msra.mxu0 0.0
    %959 = vmatprep.subr.mxu0 0.0
    %960 = vmatpush1.msra.mxu0 0.0
    %961 = vmatprep.subr.mxu0 0.0
    %962 = vmatpush1.msra.mxu0 0.0
    %963 = vmatprep.subr.mxu0 0.0
    %964 = vmatpush1.msra.mxu0 0.0
    %965 = vmatprep.subr.mxu0 0.0
    %966 = vmatpush1.msra.mxu0 0.0
    %967 = vmatprep.subr.mxu0 0.0
    %968 = vmatpush1.msra.mxu0 0.0
    %969 = vmatprep.subr.mxu0 0.0
    %970 = vmatpush1.msra.mxu0 0.0
    %971 = vmatprep.subr.mxu0 0.0
    %972 = vmatpush1.msra.mxu0 0.0
    %973 = vmatprep.subr.mxu0 0.0
    %974 = vmatpush1.msra.mxu0 0.0
    %975 = vmatprep.subr.mxu0 0.0
    %976 = vmatpush1.msra.mxu0 0.0
    %977 = vmatprep.mubr.f32.mxu0 0.0
    %978 = vmatmul.mubr.f32.gmra.mrb[0].mxu0 %v903
    %v979 = vpop.f32.mrb[0].mxu0
    %v980 = vadd.f32 0.0, %v979
    %v981 = vpop.f32.mrb[0].mxu0
    %v982 = vadd.f32 0.0, %v981
    %983 = vdwg.mxu0
    %984 = vmatprep.subr.mxu0 %v212
    %985 = vmatpush1.msra.mxu0 %v211
    %986 = vmatprep.subr.mxu0 %v216
    %987 = vmatpush1.msra.mxu0 %v215
    %988 = vmatprep.subr.mxu0 %v220
    %989 = vmatpush1.msra.mxu0 %v219
    %990 = vmatprep.subr.mxu0 %v224
    %991 = vmatpush1.msra.mxu0 %v223
    %992 = vmatprep.subr.mxu0 %v228
    %993 = vmatpush1.msra.mxu0 %v227
    %994 = vmatprep.subr.mxu0 %v232
    %995 = vmatpush1.msra.mxu0 %v231
    %996 = vmatprep.subr.mxu0 %v236
    %997 = vmatpush1.msra.mxu0 %v235
    %998 = vmatprep.subr.mxu0 %v240
    %999 = vmatpush1.msra.mxu0 %v239
    %1000 = vmatprep.subr.mxu0 %v244
    %1001 = vmatpush1.msra.mxu0 %v243
    %1002 = vmatprep.subr.mxu0 %v248
    %1003 = vmatpush1.msra.mxu0 %v247
    %1004 = vmatprep.subr.mxu0 %v252
    %1005 = vmatpush1.msra.mxu0 %v251
    %1006 = vmatprep.subr.mxu0 %v256
    %1007 = vmatpush1.msra.mxu0 %v255
    %1008 = vmatprep.subr.mxu0 %v260
    %1009 = vmatpush1.msra.mxu0 %v259
    %1010 = vmatprep.subr.mxu0 %v264
    %1011 = vmatpush1.msra.mxu0 %v263
    %1012 = vmatprep.subr.mxu0 %v268
    %1013 = vmatpush1.msra.mxu0 %v267
    %1014 = vmatprep.subr.mxu0 %v272
    %1015 = vmatpush1.msra.mxu0 %v271
    %1016 = vmatprep.subr.mxu0 0.0
    %1017 = vmatpush1.msra.mxu0 0.0
    %1018 = vmatprep.subr.mxu0 0.0
    %1019 = vmatpush1.msra.mxu0 0.0
    %1020 = vmatprep.subr.mxu0 0.0
    %1021 = vmatpush1.msra.mxu0 0.0
    %1022 = vmatprep.subr.mxu0 0.0
    %1023 = vmatpush1.msra.mxu0 0.0
    %1024 = vmatprep.subr.mxu0 0.0
    %1025 = vmatpush1.msra.mxu0 0.0
    %1026 = vmatprep.subr.mxu0 0.0
    %1027 = vmatpush1.msra.mxu0 0.0
    %1028 = vmatprep.subr.mxu0 0.0
    %1029 = vmatpush1.msra.mxu0 0.0
    %1030 = vmatprep.subr.mxu0 0.0
    %1031 = vmatpush1.msra.mxu0 0.0
    %1032 = vmatprep.subr.mxu0 0.0
    %1033 = vmatpush1.msra.mxu0 0.0
    %1034 = vmatprep.subr.mxu0 0.0
    %1035 = vmatpush1.msra.mxu0 0.0
    %1036 = vmatprep.subr.mxu0 0.0
    %1037 = vmatpush1.msra.mxu0 0.0
    %1038 = vmatprep.subr.mxu0 0.0
    %1039 = vmatpush1.msra.mxu0 0.0
    %1040 = vmatprep.subr.mxu0 0.0
    %1041 = vmatpush1.msra.mxu0 0.0
    %1042 = vmatprep.subr.mxu0 0.0
    %1043 = vmatpush1.msra.mxu0 0.0
    %1044 = vmatprep.subr.mxu0 0.0
    %1045 = vmatpush1.msra.mxu0 0.0
    %1046 = vmatprep.subr.mxu0 0.0
    %1047 = vmatpush1.msra.mxu0 0.0
    %1048 = vmatprep.mubr.f32.mxu0 0.0
    %1049 = vmatmul.mubr.f32.gmra.mrb[0].mxu0 %v903
    %v1050 = vpop.f32.mrb[0].mxu0
    %v1051 = vadd.f32 0.0, %v1050
    %v1052 = vpop.f32.mrb[0].mxu0
    %v1053 = vadd.f32 0.0, %v1052
    %1054 = vdwg.mxu0
    %v1055 = vadd.f32 %v909, %v980
    %v1056 = vadd.f32 %v910, %v982
    %v1057 = vadd.f32 %v911, %v1051
    %v1058 = vadd.f32 %v912, %v1053
    %v1059 = vtanh.pop %v1055
    %v1060 = vtanh.pop %v1056
    %v1061 = vtanh.pop %v1057
    %v1062 = vtanh.pop %v1058
    %v1063 = vmul.f32 %v1059, %v106
    %v1064 = vmul.f32 %v1060, %v110
    %v1065 = vmul.f32 %v1061, %v114
    %v1066 = vmul.f32 %v1062, %v118
    %v1067 = vadd.f32 %v1063, %v128
    %v1068 = vadd.f32 %v1064, %v132
    %v1069 = vadd.f32 %v1065, %v136
    %v1070 = vadd.f32 %v1066, %v140
    %v1071 = vmul.f32 %v1068, %v901
    %v1072 = vmul.f32 %v1067, %v1069
    %v1073 = vadd.f32 %v1071, %v1072
    %v1074 = vtanh.pop %v1073
    %v1075 = vmul.f32 %v1070, %v1074
    %s1076 = scalar_lea.vmem [#allocation5], 16
    %1077 = vst [vmem:[%s1076] sm:$0xff] %v1075
    %s1078 = smul.u32 3, 4
    %s1079 = smul.addr %s1078, 8
    %s1080 = scalar_lea.vmem [#allocation4], %s1079
    %v1081 = vld [vmem:[%s1080] sm:$0xff]
    %v1082 = vld [vmem:[%s1080 + $0x8] sm:$0xff]
    %v1083 = vld [vmem:[%s1080 + $0x10] sm:$0xff]
    %v1084 = vld [vmem:[%s1080 + $0x18] sm:$0xff]
    %1085 = vmatprep.subr.mxu0 %v210
    %1086 = vmatpush1.msra.mxu0 %v209
    %1087 = vmatprep.subr.mxu0 %v214
    %1088 = vmatpush1.msra.mxu0 %v213
    %1089 = vmatprep.subr.mxu0 %v218
    %1090 = vmatpush1.msra.mxu0 %v217
    %1091 = vmatprep.subr.mxu0 %v222
    %1092 = vmatpush1.msra.mxu0 %v221
    %1093 = vmatprep.subr.mxu0 %v226
    %1094 = vmatpush1.msra.mxu0 %v225
    %1095 = vmatprep.subr.mxu0 %v230
    %1096 = vmatpush1.msra.mxu0 %v229
    %1097 = vmatprep.subr.mxu0 %v234
    %1098 = vmatpush1.msra.mxu0 %v233
    %1099 = vmatprep.subr.mxu0 %v238
    %1100 = vmatpush1.msra.mxu0 %v237
    %1101 = vmatprep.subr.mxu0 %v242
    %1102 = vmatpush1.msra.mxu0 %v241
    %1103 = vmatprep.subr.mxu0 %v246
    %1104 = vmatpush1.msra.mxu0 %v245
    %1105 = vmatprep.subr.mxu0 %v250
    %1106 = vmatpush1.msra.mxu0 %v249
    %1107 = vmatprep.subr.mxu0 %v254
    %1108 = vmatpush1.msra.mxu0 %v253
    %1109 = vmatprep.subr.mxu0 %v258
    %1110 = vmatpush1.msra.mxu0 %v257
    %1111 = vmatprep.subr.mxu0 %v262
    %1112 = vmatpush1.msra.mxu0 %v261
    %1113 = vmatprep.subr.mxu0 %v266
    %1114 = vmatpush1.msra.mxu0 %v265
    %1115 = vmatprep.subr.mxu0 %v270
    %1116 = vmatpush1.msra.mxu0 %v269
    %1117 = vmatprep.subr.mxu0 0.0
    %1118 = vmatpush1.msra.mxu0 0.0
    %1119 = vmatprep.subr.mxu0 0.0
    %1120 = vmatpush1.msra.mxu0 0.0
    %1121 = vmatprep.subr.mxu0 0.0
    %1122 = vmatpush1.msra.mxu0 0.0
    %1123 = vmatprep.subr.mxu0 0.0
    %1124 = vmatpush1.msra.mxu0 0.0
    %1125 = vmatprep.subr.mxu0 0.0
    %1126 = vmatpush1.msra.mxu0 0.0
    %1127 = vmatprep.subr.mxu0 0.0
    %1128 = vmatpush1.msra.mxu0 0.0
    %1129 = vmatprep.subr.mxu0 0.0
    %1130 = vmatpush1.msra.mxu0 0.0
    %1131 = vmatprep.subr.mxu0 0.0
    %1132 = vmatpush1.msra.mxu0 0.0
    %1133 = vmatprep.subr.mxu0 0.0
    %1134 = vmatpush1.msra.mxu0 0.0
    %1135 = vmatprep.subr.mxu0 0.0
    %1136 = vmatpush1.msra.mxu0 0.0
    %1137 = vmatprep.subr.mxu0 0.0
    %1138 = vmatpush1.msra.mxu0 0.0
    %1139 = vmatprep.subr.mxu0 0.0
    %1140 = vmatpush1.msra.mxu0 0.0
    %1141 = vmatprep.subr.mxu0 0.0
    %1142 = vmatpush1.msra.mxu0 0.0
    %1143 = vmatprep.subr.mxu0 0.0
    %1144 = vmatpush1.msra.mxu0 0.0
    %1145 = vmatprep.subr.mxu0 0.0
    %1146 = vmatpush1.msra.mxu0 0.0
    %1147 = vmatprep.subr.mxu0 0.0
    %1148 = vmatpush1.msra.mxu0 0.0
    %1149 = vmatprep.mubr.f32.mxu0 0.0
    %1150 = vmatmul.mubr.f32.gmra.mrb[0].mxu0 %v1075
    %v1151 = vpop.f32.mrb[0].mxu0
    %v1152 = vadd.f32 0.0, %v1151
    %v1153 = vpop.f32.mrb[0].mxu0
    %v1154 = vadd.f32 0.0, %v1153
    %1155 = vdwg.mxu0
    %1156 = vmatprep.subr.mxu0 %v212
    %1157 = vmatpush1.msra.mxu0 %v211
    %1158 = vmatprep.subr.mxu0 %v216
    %1159 = vmatpush1.msra.mxu0 %v215
    %1160 = vmatprep.subr.mxu0 %v220
    %1161 = vmatpush1.msra.mxu0 %v219
    %1162 = vmatprep.subr.mxu0 %v224
    %1163 = vmatpush1.msra.mxu0 %v223
    %1164 = vmatprep.subr.mxu0 %v228
    %1165 = vmatpush1.msra.mxu0 %v227
    %1166 = vmatprep.subr.mxu0 %v232
    %1167 = vmatpush1.msra.mxu0 %v231
    %1168 = vmatprep.subr.mxu0 %v236
    %1169 = vmatpush1.msra.mxu0 %v235
    %1170 = vmatprep.subr.mxu0 %v240
    %1171 = vmatpush1.msra.mxu0 %v239
    %1172 = vmatprep.subr.mxu0 %v244
    %1173 = vmatpush1.msra.mxu0 %v243
    %1174 = vmatprep.subr.mxu0 %v248
    %1175 = vmatpush1.msra.mxu0 %v247
    %1176 = vmatprep.subr.mxu0 %v252
    %1177 = vmatpush1.msra.mxu0 %v251
    %1178 = vmatprep.subr.mxu0 %v256
    %1179 = vmatpush1.msra.mxu0 %v255
    %1180 = vmatprep.subr.mxu0 %v260
    %1181 = vmatpush1.msra.mxu0 %v259
    %1182 = vmatprep.subr.mxu0 %v264
    %1183 = vmatpush1.msra.mxu0 %v263
    %1184 = vmatprep.subr.mxu0 %v268
    %1185 = vmatpush1.msra.mxu0 %v267
    %1186 = vmatprep.subr.mxu0 %v272
    %1187 = vmatpush1.msra.mxu0 %v271
    %1188 = vmatprep.subr.mxu0 0.0
    %1189 = vmatpush1.msra.mxu0 0.0
    %1190 = vmatprep.subr.mxu0 0.0
    %1191 = vmatpush1.msra.mxu0 0.0
    %1192 = vmatprep.subr.mxu0 0.0
    %1193 = vmatpush1.msra.mxu0 0.0
    %1194 = vmatprep.subr.mxu0 0.0
    %1195 = vmatpush1.msra.mxu0 0.0
    %1196 = vmatprep.subr.mxu0 0.0
    %1197 = vmatpush1.msra.mxu0 0.0
    %1198 = vmatprep.subr.mxu0 0.0
    %1199 = vmatpush1.msra.mxu0 0.0
    %1200 = vmatprep.subr.mxu0 0.0
    %1201 = vmatpush1.msra.mxu0 0.0
    %1202 = vmatprep.subr.mxu0 0.0
    %1203 = vmatpush1.msra.mxu0 0.0
    %1204 = vmatprep.subr.mxu0 0.0
    %1205 = vmatpush1.msra.mxu0 0.0
    %1206 = vmatprep.subr.mxu0 0.0
    %1207 = vmatpush1.msra.mxu0 0.0
    %1208 = vmatprep.subr.mxu0 0.0
    %1209 = vmatpush1.msra.mxu0 0.0
    %1210 = vmatprep.subr.mxu0 0.0
    %1211 = vmatpush1.msra.mxu0 0.0
    %1212 = vmatprep.subr.mxu0 0.0
    %1213 = vmatpush1.msra.mxu0 0.0
    %1214 = vmatprep.subr.mxu0 0.0
    %1215 = vmatpush1.msra.mxu0 0.0
    %1216 = vmatprep.subr.mxu0 0.0
    %1217 = vmatpush1.msra.mxu0 0.0
    %1218 = vmatprep.subr.mxu0 0.0
    %1219 = vmatpush1.msra.mxu0 0.0
    %1220 = vmatprep.mubr.f32.mxu0 0.0
    %1221 = vmatmul.mubr.f32.gmra.mrb[0].mxu0 %v1075
    %v1222 = vpop.f32.mrb[0].mxu0
    %v1223 = vadd.f32 0.0, %v1222
    %v1224 = vpop.f32.mrb[0].mxu0
    %v1225 = vadd.f32 0.0, %v1224
    %1226 = vdwg.mxu0
    %v1227 = vadd.f32 %v1081, %v1152
    %v1228 = vadd.f32 %v1082, %v1154
    %v1229 = vadd.f32 %v1083, %v1223
    %v1230 = vadd.f32 %v1084, %v1225
    %v1231 = vtanh.pop %v1227
    %v1232 = vtanh.pop %v1228
    %v1233 = vtanh.pop %v1229
    %v1234 = vtanh.pop %v1230
    %v1235 = vmul.f32 %v1231, %v106
    %v1236 = vmul.f32 %v1232, %v110
    %v1237 = vmul.f32 %v1233, %v114
    %v1238 = vmul.f32 %v1234, %v118
    %v1239 = vadd.f32 %v1235, %v128
    %v1240 = vadd.f32 %v1236, %v132
    %v1241 = vadd.f32 %v1237, %v136
    %v1242 = vadd.f32 %v1238, %v140
    %v1243 = vmul.f32 %v1240, %v1073
    %v1244 = vmul.f32 %v1239, %v1241
    %v1245 = vadd.f32 %v1243, %v1244
    %v1246 = vtanh.pop %v1245
    %v1247 = vmul.f32 %v1242, %v1246
    %s1248 = scalar_lea.vmem [#allocation5], 24
    %1249 = vst [vmem:[%s1248] sm:$0xff] %v1247
    %s1250 = smul.u32 4, 4
    %s1251 = smul.addr %s1250, 8
    %s1252 = scalar_lea.vmem [#allocation4], %s1251
    %v1253 = vld [vmem:[%s1252] sm:$0xff]
    %v1254 = vld [vmem:[%s1252 + $0x8] sm:$0xff]
    %v1255 = vld [vmem:[%s1252 + $0x10] sm:$0xff]
    %v1256 = vld [vmem:[%s1252 + $0x18] sm:$0xff]
    %1257 = vmatprep.subr.mxu0 %v210
    %1258 = vmatpush1.msra.mxu0 %v209
    %1259 = vmatprep.subr.mxu0 %v214
    %1260 = vmatpush1.msra.mxu0 %v213
    %1261 = vmatprep.subr.mxu0 %v218
    %1262 = vmatpush1.msra.mxu0 %v217
    %1263 = vmatprep.subr.mxu0 %v222
    %1264 = vmatpush1.msra.mxu0 %v221
    %1265 = vmatprep.subr.mxu0 %v226
    %1266 = vmatpush1.msra.mxu0 %v225
    %1267 = vmatprep.subr.mxu0 %v230
    %1268 = vmatpush1.msra.mxu0 %v229
    %1269 = vmatprep.subr.mxu0 %v234
    %1270 = vmatpush1.msra.mxu0 %v233
    %1271 = vmatprep.subr.mxu0 %v238
    %1272 = vmatpush1.msra.mxu0 %v237
    %1273 = vmatprep.subr.mxu0 %v242
    %1274 = vmatpush1.msra.mxu0 %v241
    %1275 = vmatprep.subr.mxu0 %v246
    %1276 = vmatpush1.msra.mxu0 %v245
    %1277 = vmatprep.subr.mxu0 %v250
    %1278 = vmatpush1.msra.mxu0 %v249
    %1279 = vmatprep.subr.mxu0 %v254
    %1280 = vmatpush1.msra.mxu0 %v253
    %1281 = vmatprep.subr.mxu0 %v258
    %1282 = vmatpush1.msra.mxu0 %v257
    %1283 = vmatprep.subr.mxu0 %v262
    %1284 = vmatpush1.msra.mxu0 %v261
    %1285 = vmatprep.subr.mxu0 %v266
    %1286 = vmatpush1.msra.mxu0 %v265
    %1287 = vmatprep.subr.mxu0 %v270
    %1288 = vmatpush1.msra.mxu0 %v269
    %1289 = vmatprep.subr.mxu0 0.0
    %1290 = vmatpush1.msra.mxu0 0.0
    %1291 = vmatprep.subr.mxu0 0.0
    %1292 = vmatpush1.msra.mxu0 0.0
    %1293 = vmatprep.subr.mxu0 0.0
    %1294 = vmatpush1.msra.mxu0 0.0
    %1295 = vmatprep.subr.mxu0 0.0
    %1296 = vmatpush1.msra.mxu0 0.0
    %1297 = vmatprep.subr.mxu0 0.0
    %1298 = vmatpush1.msra.mxu0 0.0
    %1299 = vmatprep.subr.mxu0 0.0
    %1300 = vmatpush1.msra.mxu0 0.0
    %1301 = vmatprep.subr.mxu0 0.0
    %1302 = vmatpush1.msra.mxu0 0.0
    %1303 = vmatprep.subr.mxu0 0.0
    %1304 = vmatpush1.msra.mxu0 0.0
    %1305 = vmatprep.subr.mxu0 0.0
    %1306 = vmatpush1.msra.mxu0 0.0
    %1307 = vmatprep.subr.mxu0 0.0
    %1308 = vmatpush1.msra.mxu0 0.0
    %1309 = vmatprep.subr.mxu0 0.0
    %1310 = vmatpush1.msra.mxu0 0.0
    %1311 = vmatprep.subr.mxu0 0.0
    %1312 = vmatpush1.msra.mxu0 0.0
    %1313 = vmatprep.subr.mxu0 0.0
    %1314 = vmatpush1.msra.mxu0 0.0
    %1315 = vmatprep.subr.mxu0 0.0
    %1316 = vmatpush1.msra.mxu0 0.0
    %1317 = vmatprep.subr.mxu0 0.0
    %1318 = vmatpush1.msra.mxu0 0.0
    %1319 = vmatprep.subr.mxu0 0.0
    %1320 = vmatpush1.msra.mxu0 0.0
    %1321 = vmatprep.mubr.f32.mxu0 0.0
    %1322 = vmatmul.mubr.f32.gmra.mrb[0].mxu0 %v1247
    %v1323 = vpop.f32.mrb[0].mxu0
    %v1324 = vadd.f32 0.0, %v1323
    %v1325 = vpop.f32.mrb[0].mxu0
    %v1326 = vadd.f32 0.0, %v1325
    %1327 = vdwg.mxu0
    %1328 = vmatprep.subr.mxu0 %v212
    %1329 = vmatpush1.msra.mxu0 %v211
    %1330 = vmatprep.subr.mxu0 %v216
    %1331 = vmatpush1.msra.mxu0 %v215
    %1332 = vmatprep.subr.mxu0 %v220
    %1333 = vmatpush1.msra.mxu0 %v219
    %1334 = vmatprep.subr.mxu0 %v224
    %1335 = vmatpush1.msra.mxu0 %v223
    %1336 = vmatprep.subr.mxu0 %v228
    %1337 = vmatpush1.msra.mxu0 %v227
    %1338 = vmatprep.subr.mxu0 %v232
    %1339 = vmatpush1.msra.mxu0 %v231
    %1340 = vmatprep.subr.mxu0 %v236
    %1341 = vmatpush1.msra.mxu0 %v235
    %1342 = vmatprep.subr.mxu0 %v240
    %1343 = vmatpush1.msra.mxu0 %v239
    %1344 = vmatprep.subr.mxu0 %v244
    %1345 = vmatpush1.msra.mxu0 %v243
    %1346 = vmatprep.subr.mxu0 %v248
    %1347 = vmatpush1.msra.mxu0 %v247
    %1348 = vmatprep.subr.mxu0 %v252
    %1349 = vmatpush1.msra.mxu0 %v251
    %1350 = vmatprep.subr.mxu0 %v256
    %1351 = vmatpush1.msra.mxu0 %v255
    %1352 = vmatprep.subr.mxu0 %v260
    %1353 = vmatpush1.msra.mxu0 %v259
    %1354 = vmatprep.subr.mxu0 %v264
    %1355 = vmatpush1.msra.mxu0 %v263
    %1356 = vmatprep.subr.mxu0 %v268
    %1357 = vmatpush1.msra.mxu0 %v267
    %1358 = vmatprep.subr.mxu0 %v272
    %1359 = vmatpush1.msra.mxu0 %v271
    %1360 = vmatprep.subr.mxu0 0.0
    %1361 = vmatpush1.msra.mxu0 0.0
    %1362 = vmatprep.subr.mxu0 0.0
    %1363 = vmatpush1.msra.mxu0 0.0
    %1364 = vmatprep.subr.mxu0 0.0
    %1365 = vmatpush1.msra.mxu0 0.0
    %1366 = vmatprep.subr.mxu0 0.0
    %1367 = vmatpush1.msra.mxu0 0.0
    %1368 = vmatprep.subr.mxu0 0.0
    %1369 = vmatpush1.msra.mxu0 0.0
    %1370 = vmatprep.subr.mxu0 0.0
    %1371 = vmatpush1.msra.mxu0 0.0
    %1372 = vmatprep.subr.mxu0 0.0
    %1373 = vmatpush1.msra.mxu0 0.0
    %1374 = vmatprep.subr.mxu0 0.0
    %1375 = vmatpush1.msra.mxu0 0.0
    %1376 = vmatprep.subr.mxu0 0.0
    %1377 = vmatpush1.msra.mxu0 0.0
    %1378 = vmatprep.subr.mxu0 0.0
    %1379 = vmatpush1.msra.mxu0 0.0
    %1380 = vmatprep.subr.mxu0 0.0
    %1381 = vmatpush1.msra.mxu0 0.0
    %1382 = vmatprep.subr.mxu0 0.0
    %1383 = vmatpush1.msra.mxu0 0.0
    %1384 = vmatprep.subr.mxu0 0.0
    %1385 = vmatpush1.msra.mxu0 0.0
    %1386 = vmatprep.subr.mxu0 0.0
    %1387 = vmatpush1.msra.mxu0 0.0
    %1388 = vmatprep.subr.mxu0 0.0
    %1389 = vmatpush1.msra.mxu0 0.0
    %1390 = vmatprep.subr.mxu0 0.0
    %1391 = vmatpush1.msra.mxu0 0.0
    %1392 = vmatprep.mubr.f32.mxu0 0.0
    %1393 = vmatmul.mubr.f32.gmra.mrb[0].mxu0 %v1247
    %v1394 = vpop.f32.mrb[0].mxu0
    %v1395 = vadd.f32 0.0, %v1394
    %v1396 = vpop.f32.mrb[0].mxu0
    %v1397 = vadd.f32 0.0, %v1396
    %1398 = vdwg.mxu0
    %v1399 = vadd.f32 %v1253, %v1324
    %v1400 = vadd.f32 %v1254, %v1326
    %v1401 = vadd.f32 %v1255, %v1395
    %v1402 = vadd.f32 %v1256, %v1397
    %v1403 = vtanh.pop %v1399
    %v1404 = vtanh.pop %v1400
    %v1405 = vtanh.pop %v1401
    %v1406 = vtanh.pop %v1402
    %v1407 = vmul.f32 %v1403, %v106
    %v1408 = vmul.f32 %v1404, %v110
    %v1409 = vmul.f32 %v1405, %v114
    %v1410 = vmul.f32 %v1406, %v118
    %v1411 = vadd.f32 %v1407, %v128
    %v1412 = vadd.f32 %v1408, %v132
    %v1413 = vadd.f32 %v1409, %v136
    %v1414 = vadd.f32 %v1410, %v140
    %v1415 = vmul.f32 %v1412, %v1245
    %v1416 = vmul.f32 %v1411, %v1413
    %v1417 = vadd.f32 %v1415, %v1416
    %v1418 = vtanh.pop %v1417
    %v1419 = vmul.f32 %v1414, %v1418
    %s1420 = scalar_lea.vmem [#allocation5], 32
    %1421 = vst [vmem:[%s1420] sm:$0xff] %v1419
    %s1422 = smul.u32 5, 4
    %s1423 = smul.addr %s1422, 8
    %s1424 = scalar_lea.vmem [#allocation4], %s1423
    %v1425 = vld [vmem:[%s1424] sm:$0xff]
    %v1426 = vld [vmem:[%s1424 + $0x8] sm:$0xff]
    %v1427 = vld [vmem:[%s1424 + $0x10] sm:$0xff]
    %v1428 = vld [vmem:[%s1424 + $0x18] sm:$0xff]
    %1429 = vmatprep.subr.mxu0 %v210
    %1430 = vmatpush1.msra.mxu0 %v209
    %1431 = vmatprep.subr.mxu0 %v214
    %1432 = vmatpush1.msra.mxu0 %v213
    %1433 = vmatprep.subr.mxu0 %v218
    %1434 = vmatpush1.msra.mxu0 %v217
    %1435 = vmatprep.subr.mxu0 %v222
    %1436 = vmatpush1.msra.mxu0 %v221
    %1437 = vmatprep.subr.mxu0 %v226
    %1438 = vmatpush1.msra.mxu0 %v225
    %1439 = vmatprep.subr.mxu0 %v230
    %1440 = vmatpush1.msra.mxu0 %v229
    %1441 = vmatprep.subr.mxu0 %v234
    %1442 = vmatpush1.msra.mxu0 %v233
    %1443 = vmatprep.subr.mxu0 %v238
    %1444 = vmatpush1.msra.mxu0 %v237
    %1445 = vmatprep.subr.mxu0 %v242
    %1446 = vmatpush1.msra.mxu0 %v241
    %1447 = vmatprep.subr.mxu0 %v246
    %1448 = vmatpush1.msra.mxu0 %v245
    %1449 = vmatprep.subr.mxu0 %v250
    %1450 = vmatpush1.msra.mxu0 %v249
    %1451 = vmatprep.subr.mxu0 %v254
    %1452 = vmatpush1.msra.mxu0 %v253
    %1453 = vmatprep.subr.mxu0 %v258
    %1454 = vmatpush1.msra.mxu0 %v257
    %1455 = vmatprep.subr.mxu0 %v262
    %1456 = vmatpush1.msra.mxu0 %v261
    %1457 = vmatprep.subr.mxu0 %v266
    %1458 = vmatpush1.msra.mxu0 %v265
    %1459 = vmatprep.subr.mxu0 %v270
    %1460 = vmatpush1.msra.mxu0 %v269
    %1461 = vmatprep.subr.mxu0 0.0
    %1462 = vmatpush1.msra.mxu0 0.0
    %1463 = vmatprep.subr.mxu0 0.0
    %1464 = vmatpush1.msra.mxu0 0.0
    %1465 = vmatprep.subr.mxu0 0.0
    %1466 = vmatpush1.msra.mxu0 0.0
    %1467 = vmatprep.subr.mxu0 0.0
    %1468 = vmatpush1.msra.mxu0 0.0
    %1469 = vmatprep.subr.mxu0 0.0
    %1470 = vmatpush1.msra.mxu0 0.0
    %1471 = vmatprep.subr.mxu0 0.0
    %1472 = vmatpush1.msra.mxu0 0.0
    %1473 = vmatprep.subr.mxu0 0.0
    %1474 = vmatpush1.msra.mxu0 0.0
    %1475 = vmatprep.subr.mxu0 0.0
    %1476 = vmatpush1.msra.mxu0 0.0
    %1477 = vmatprep.subr.mxu0 0.0
    %1478 = vmatpush1.msra.mxu0 0.0
    %1479 = vmatprep.subr.mxu0 0.0
    %1480 = vmatpush1.msra.mxu0 0.0
    %1481 = vmatprep.subr.mxu0 0.0
    %1482 = vmatpush1.msra.mxu0 0.0
    %1483 = vmatprep.subr.mxu0 0.0
    %1484 = vmatpush1.msra.mxu0 0.0
    %1485 = vmatprep.subr.mxu0 0.0
    %1486 = vmatpush1.msra.mxu0 0.0
    %1487 = vmatprep.subr.mxu0 0.0
    %1488 = vmatpush1.msra.mxu0 0.0
    %1489 = vmatprep.subr.mxu0 0.0
    %1490 = vmatpush1.msra.mxu0 0.0
    %1491 = vmatprep.subr.mxu0 0.0
    %1492 = vmatpush1.msra.mxu0 0.0
    %1493 = vmatprep.mubr.f32.mxu0 0.0
    %1494 = vmatmul.mubr.f32.gmra.mrb[0].mxu0 %v1419
    %v1495 = vpop.f32.mrb[0].mxu0
    %v1496 = vadd.f32 0.0, %v1495
    %v1497 = vpop.f32.mrb[0].mxu0
    %v1498 = vadd.f32 0.0, %v1497
    %1499 = vdwg.mxu0
    %1500 = vmatprep.subr.mxu0 %v212
    %1501 = vmatpush1.msra.mxu0 %v211
    %1502 = vmatprep.subr.mxu0 %v216
    %1503 = vmatpush1.msra.mxu0 %v215
    %1504 = vmatprep.subr.mxu0 %v220
    %1505 = vmatpush1.msra.mxu0 %v219
    %1506 = vmatprep.subr.mxu0 %v224
    %1507 = vmatpush1.msra.mxu0 %v223
    %1508 = vmatprep.subr.mxu0 %v228
    %1509 = vmatpush1.msra.mxu0 %v227
    %1510 = vmatprep.subr.mxu0 %v232
    %1511 = vmatpush1.msra.mxu0 %v231
    %1512 = vmatprep.subr.mxu0 %v236
    %1513 = vmatpush1.msra.mxu0 %v235
    %1514 = vmatprep.subr.mxu0 %v240
    %1515 = vmatpush1.msra.mxu0 %v239
    %1516 = vmatprep.subr.mxu0 %v244
    %1517 = vmatpush1.msra.mxu0 %v243
    %1518 = vmatprep.subr.mxu0 %v248
    %1519 = vmatpush1.msra.mxu0 %v247
    %1520 = vmatprep.subr.mxu0 %v252
    %1521 = vmatpush1.msra.mxu0 %v251
    %1522 = vmatprep.subr.mxu0 %v256
    %1523 = vmatpush1.msra.mxu0 %v255
    %1524 = vmatprep.subr.mxu0 %v260
    %1525 = vmatpush1.msra.mxu0 %v259
    %1526 = vmatprep.subr.mxu0 %v264
    %1527 = vmatpush1.msra.mxu0 %v263
    %1528 = vmatprep.subr.mxu0 %v268
    %1529 = vmatpush1.msra.mxu0 %v267
    %1530 = vmatprep.subr.mxu0 %v272
    %1531 = vmatpush1.msra.mxu0 %v271
    %1532 = vmatprep.subr.mxu0 0.0
    %1533 = vmatpush1.msra.mxu0 0.0
    %1534 = vmatprep.subr.mxu0 0.0
    %1535 = vmatpush1.msra.mxu0 0.0
    %1536 = vmatprep.subr.mxu0 0.0
    %1537 = vmatpush1.msra.mxu0 0.0
    %1538 = vmatprep.subr.mxu0 0.0
    %1539 = vmatpush1.msra.mxu0 0.0
    %1540 = vmatprep.subr.mxu0 0.0
    %1541 = vmatpush1.msra.mxu0 0.0
    %1542 = vmatprep.subr.mxu0 0.0
    %1543 = vmatpush1.msra.mxu0 0.0
    %1544 = vmatprep.subr.mxu0 0.0
    %1545 = vmatpush1.msra.mxu0 0.0
    %1546 = vmatprep.subr.mxu0 0.0
    %1547 = vmatpush1.msra.mxu0 0.0
    %1548 = vmatprep.subr.mxu0 0.0
    %1549 = vmatpush1.msra.mxu0 0.0
    %1550 = vmatprep.subr.mxu0 0.0
    %1551 = vmatpush1.msra.mxu0 0.0
    %1552 = vmatprep.subr.mxu0 0.0
    %1553 = vmatpush1.msra.mxu0 0.0
    %1554 = vmatprep.subr.mxu0 0.0
    %1555 = vmatpush1.msra.mxu0 0.0
    %1556 = vmatprep.subr.mxu0 0.0
    %1557 = vmatpush1.msra.mxu0 0.0
    %1558 = vmatprep.subr.mxu0 0.0
    %1559 = vmatpush1.msra.mxu0 0.0
    %1560 = vmatprep.subr.mxu0 0.0
    %1561 = vmatpush1.msra.mxu0 0.0
    %1562 = vmatprep.subr.mxu0 0.0
    %1563 = vmatpush1.msra.mxu0 0.0
    %1564 = vmatprep.mubr.f32.mxu0 0.0
    %1565 = vmatmul.mubr.f32.gmra.mrb[0].mxu0 %v1419
    %v1566 = vpop.f32.mrb[0].mxu0
    %v1567 = vadd.f32 0.0, %v1566
    %v1568 = vpop.f32.mrb[0].mxu0
    %v1569 = vadd.f32 0.0, %v1568
    %1570 = vdwg.mxu0
    %v1571 = vadd.f32 %v1425, %v1496
    %v1572 = vadd.f32 %v1426, %v1498
    %v1573 = vadd.f32 %v1427, %v1567
    %v1574 = vadd.f32 %v1428, %v1569
    %v1575 = vtanh.pop %v1571
    %v1576 = vtanh.pop %v1572
    %v1577 = vtanh.pop %v1573
    %v1578 = vtanh.pop %v1574
    %v1579 = vmul.f32 %v1575, %v106
    %v1580 = vmul.f32 %v1576, %v110
    %v1581 = vmul.f32 %v1577, %v114
    %v1582 = vmul.f32 %v1578, %v118
    %v1583 = vadd.f32 %v1579, %v128
    %v1584 = vadd.f32 %v1580, %v132
    %v1585 = vadd.f32 %v1581, %v136
    %v1586 = vadd.f32 %v1582, %v140
    %v1587 = vmul.f32 %v1584, %v1417
    %v1588 = vmul.f32 %v1583, %v1585
    %v1589 = vadd.f32 %v1587, %v1588
    %v1590 = vtanh.pop %v1589
    %v1591 = vmul.f32 %v1586, %v1590
    %s1592 = scalar_lea.vmem [#allocation5], 40
    %1593 = vst [vmem:[%s1592] sm:$0xff] %v1591
    %s1594 = smul.u32 6, 4
    %s1595 = smul.addr %s1594, 8
    %s1596 = scalar_lea.vmem [#allocation4], %s1595
    %v1597 = vld [vmem:[%s1596] sm:$0xff]
    %v1598 = vld [vmem:[%s1596 + $0x8] sm:$0xff]
    %v1599 = vld [vmem:[%s1596 + $0x10] sm:$0xff]
    %v1600 = vld [vmem:[%s1596 + $0x18] sm:$0xff]
    %1601 = vmatprep.subr.mxu0 %v210
    %1602 = vmatpush1.msra.mxu0 %v209
    %1603 = vmatprep.subr.mxu0 %v214
    %1604 = vmatpush1.msra.mxu0 %v213
    %1605 = vmatprep.subr.mxu0 %v218
    %1606 = vmatpush1.msra.mxu0 %v217
    %1607 = vmatprep.subr.mxu0 %v222
    %1608 = vmatpush1.msra.mxu0 %v221
    %1609 = vmatprep.subr.mxu0 %v226
    %1610 = vmatpush1.msra.mxu0 %v225
    %1611 = vmatprep.subr.mxu0 %v230
    %1612 = vmatpush1.msra.mxu0 %v229
    %1613 = vmatprep.subr.mxu0 %v234
    %1614 = vmatpush1.msra.mxu0 %v233
    %1615 = vmatprep.subr.mxu0 %v238
    %1616 = vmatpush1.msra.mxu0 %v237
    %1617 = vmatprep.subr.mxu0 %v242
    %1618 = vmatpush1.msra.mxu0 %v241
    %1619 = vmatprep.subr.mxu0 %v246
    %1620 = vmatpush1.msra.mxu0 %v245
    %1621 = vmatprep.subr.mxu0 %v250
    %1622 = vmatpush1.msra.mxu0 %v249
    %1623 = vmatprep.subr.mxu0 %v254
    %1624 = vmatpush1.msra.mxu0 %v253
    %1625 = vmatprep.subr.mxu0 %v258
    %1626 = vmatpush1.msra.mxu0 %v257
    %1627 = vmatprep.subr.mxu0 %v262
    %1628 = vmatpush1.msra.mxu0 %v261
    %1629 = vmatprep.subr.mxu0 %v266
    %1630 = vmatpush1.msra.mxu0 %v265
    %1631 = vmatprep.subr.mxu0 %v270
    %1632 = vmatpush1.msra.mxu0 %v269
    %1633 = vmatprep.subr.mxu0 0.0
    %1634 = vmatpush1.msra.mxu0 0.0
    %1635 = vmatprep.subr.mxu0 0.0
    %1636 = vmatpush1.msra.mxu0 0.0
    %1637 = vmatprep.subr.mxu0 0.0
    %1638 = vmatpush1.msra.mxu0 0.0
    %1639 = vmatprep.subr.mxu0 0.0
    %1640 = vmatpush1.msra.mxu0 0.0
    %1641 = vmatprep.subr.mxu0 0.0
    %1642 = vmatpush1.msra.mxu0 0.0
    %1643 = vmatprep.subr.mxu0 0.0
    %1644 = vmatpush1.msra.mxu0 0.0
    %1645 = vmatprep.subr.mxu0 0.0
    %1646 = vmatpush1.msra.mxu0 0.0
    %1647 = vmatprep.subr.mxu0 0.0
    %1648 = vmatpush1.msra.mxu0 0.0
    %1649 = vmatprep.subr.mxu0 0.0
    %1650 = vmatpush1.msra.mxu0 0.0
    %1651 = vmatprep.subr.mxu0 0.0
    %1652 = vmatpush1.msra.mxu0 0.0
    %1653 = vmatprep.subr.mxu0 0.0
    %1654 = vmatpush1.msra.mxu0 0.0
    %1655 = vmatprep.subr.mxu0 0.0
    %1656 = vmatpush1.msra.mxu0 0.0
    %1657 = vmatprep.subr.mxu0 0.0
    %1658 = vmatpush1.msra.mxu0 0.0
    %1659 = vmatprep.subr.mxu0 0.0
    %1660 = vmatpush1.msra.mxu0 0.0
    %1661 = vmatprep.subr.mxu0 0.0
    %1662 = vmatpush1.msra.mxu0 0.0
    %1663 = vmatprep.subr.mxu0 0.0
    %1664 = vmatpush1.msra.mxu0 0.0
    %1665 = vmatprep.mubr.f32.mxu0 0.0
    %1666 = vmatmul.mubr.f32.gmra.mrb[0].mxu0 %v1591
    %v1667 = vpop.f32.mrb[0].mxu0
    %v1668 = vadd.f32 0.0, %v1667
    %v1669 = vpop.f32.mrb[0].mxu0
    %v1670 = vadd.f32 0.0, %v1669
    %1671 = vdwg.mxu0
    %1672 = vmatprep.subr.mxu0 %v212
    %1673 = vmatpush1.msra.mxu0 %v211
    %1674 = vmatprep.subr.mxu0 %v216
    %1675 = vmatpush1.msra.mxu0 %v215
    %1676 = vmatprep.subr.mxu0 %v220
    %1677 = vmatpush1.msra.mxu0 %v219
    %1678 = vmatprep.subr.mxu0 %v224
    %1679 = vmatpush1.msra.mxu0 %v223
    %1680 = vmatprep.subr.mxu0 %v228
    %1681 = vmatpush1.msra.mxu0 %v227
    %1682 = vmatprep.subr.mxu0 %v232
    %1683 = vmatpush1.msra.mxu0 %v231
    %1684 = vmatprep.subr.mxu0 %v236
    %1685 = vmatpush1.msra.mxu0 %v235
    %1686 = vmatprep.subr.mxu0 %v240
    %1687 = vmatpush1.msra.mxu0 %v239
    %1688 = vmatprep.subr.mxu0 %v244
    %1689 = vmatpush1.msra.mxu0 %v243
    %1690 = vmatprep.subr.mxu0 %v248
    %1691 = vmatpush1.msra.mxu0 %v247
    %1692 = vmatprep.subr.mxu0 %v252
    %1693 = vmatpush1.msra.mxu0 %v251
    %1694 = vmatprep.subr.mxu0 %v256
    %1695 = vmatpush1.msra.mxu0 %v255
    %1696 = vmatprep.subr.mxu0 %v260
    %1697 = vmatpush1.msra.mxu0 %v259
    %1698 = vmatprep.subr.mxu0 %v264
    %1699 = vmatpush1.msra.mxu0 %v263
    %1700 = vmatprep.subr.mxu0 %v268
    %1701 = vmatpush1.msra.mxu0 %v267
    %1702 = vmatprep.subr.mxu0 %v272
    %1703 = vmatpush1.msra.mxu0 %v271
    %1704 = vmatprep.subr.mxu0 0.0
    %1705 = vmatpush1.msra.mxu0 0.0
    %1706 = vmatprep.subr.mxu0 0.0
    %1707 = vmatpush1.msra.mxu0 0.0
    %1708 = vmatprep.subr.mxu0 0.0
    %1709 = vmatpush1.msra.mxu0 0.0
    %1710 = vmatprep.subr.mxu0 0.0
    %1711 = vmatpush1.msra.mxu0 0.0
    %1712 = vmatprep.subr.mxu0 0.0
    %1713 = vmatpush1.msra.mxu0 0.0
    %1714 = vmatprep.subr.mxu0 0.0
    %1715 = vmatpush1.msra.mxu0 0.0
    %1716 = vmatprep.subr.mxu0 0.0
    %1717 = vmatpush1.msra.mxu0 0.0
    %1718 = vmatprep.subr.mxu0 0.0
    %1719 = vmatpush1.msra.mxu0 0.0
    %1720 = vmatprep.subr.mxu0 0.0
    %1721 = vmatpush1.msra.mxu0 0.0
    %1722 = vmatprep.subr.mxu0 0.0
    %1723 = vmatpush1.msra.mxu0 0.0
    %1724 = vmatprep.subr.mxu0 0.0
    %1725 = vmatpush1.msra.mxu0 0.0
    %1726 = vmatprep.subr.mxu0 0.0
    %1727 = vmatpush1.msra.mxu0 0.0
    %1728 = vmatprep.subr.mxu0 0.0
    %1729 = vmatpush1.msra.mxu0 0.0
    %1730 = vmatprep.subr.mxu0 0.0
    %1731 = vmatpush1.msra.mxu0 0.0
    %1732 = vmatprep.subr.mxu0 0.0
    %1733 = vmatpush1.msra.mxu0 0.0
    %1734 = vmatprep.subr.mxu0 0.0
    %1735 = vmatpush1.msra.mxu0 0.0
    %1736 = vmatprep.mubr.f32.mxu0 0.0
    %1737 = vmatmul.mubr.f32.gmra.mrb[0].mxu0 %v1591
    %v1738 = vpop.f32.mrb[0].mxu0
    %v1739 = vadd.f32 0.0, %v1738
    %v1740 = vpop.f32.mrb[0].mxu0
    %v1741 = vadd.f32 0.0, %v1740
    %1742 = vdwg.mxu0
    %v1743 = vadd.f32 %v1597, %v1668
    %v1744 = vadd.f32 %v1598, %v1670
    %v1745 = vadd.f32 %v1599, %v1739
    %v1746 = vadd.f32 %v1600, %v1741
    %v1747 = vtanh.pop %v1743
    %v1748 = vtanh.pop %v1744
    %v1749 = vtanh.pop %v1745
    %v1750 = vtanh.pop %v1746
    %v1751 = vmul.f32 %v1747, %v106
    %v1752 = vmul.f32 %v1748, %v110
    %v1753 = vmul.f32 %v1749, %v114
    %v1754 = vmul.f32 %v1750, %v118
    %v1755 = vadd.f32 %v1751, %v128
    %v1756 = vadd.f32 %v1752, %v132
    %v1757 = vadd.f32 %v1753, %v136
    %v1758 = vadd.f32 %v1754, %v140
    %v1759 = vmul.f32 %v1756, %v1589
    %v1760 = vmul.f32 %v1755, %v1757
    %v1761 = vadd.f32 %v1759, %v1760
    %v1762 = vtanh.pop %v1761
    %v1763 = vmul.f32 %v1758, %v1762
    %s1764 = scalar_lea.vmem [#allocation5], 48
    %1765 = vst [vmem:[%s1764] sm:$0xff] %v1763
    %s1766 = smul.u32 7, 4
    %s1767 = smul.addr %s1766, 8
    %s1768 = scalar_lea.vmem [#allocation4], %s1767
    %v1769 = vld [vmem:[%s1768] sm:$0xff]
    %v1770 = vld [vmem:[%s1768 + $0x8] sm:$0xff]
    %v1771 = vld [vmem:[%s1768 + $0x10] sm:$0xff]
    %v1772 = vld [vmem:[%s1768 + $0x18] sm:$0xff]
    %1773 = vmatprep.subr.mxu0 %v210
    %1774 = vmatpush1.msra.mxu0 %v209
    %1775 = vmatprep.subr.mxu0 %v214
    %1776 = vmatpush1.msra.mxu0 %v213
    %1777 = vmatprep.subr.mxu0 %v218
    %1778 = vmatpush1.msra.mxu0 %v217
    %1779 = vmatprep.subr.mxu0 %v222
    %1780 = vmatpush1.msra.mxu0 %v221
    %1781 = vmatprep.subr.mxu0 %v226
    %1782 = vmatpush1.msra.mxu0 %v225
    %1783 = vmatprep.subr.mxu0 %v230
    %1784 = vmatpush1.msra.mxu0 %v229
    %1785 = vmatprep.subr.mxu0 %v234
    %1786 = vmatpush1.msra.mxu0 %v233
    %1787 = vmatprep.subr.mxu0 %v238
    %1788 = vmatpush1.msra.mxu0 %v237
    %1789 = vmatprep.subr.mxu0 %v242
    %1790 = vmatpush1.msra.mxu0 %v241
    %1791 = vmatprep.subr.mxu0 %v246
    %1792 = vmatpush1.msra.mxu0 %v245
    %1793 = vmatprep.subr.mxu0 %v250
    %1794 = vmatpush1.msra.mxu0 %v249
    %1795 = vmatprep.subr.mxu0 %v254
    %1796 = vmatpush1.msra.mxu0 %v253
    %1797 = vmatprep.subr.mxu0 %v258
    %1798 = vmatpush1.msra.mxu0 %v257
    %1799 = vmatprep.subr.mxu0 %v262
    %1800 = vmatpush1.msra.mxu0 %v261
    %1801 = vmatprep.subr.mxu0 %v266
    %1802 = vmatpush1.msra.mxu0 %v265
    %1803 = vmatprep.subr.mxu0 %v270
    %1804 = vmatpush1.msra.mxu0 %v269
    %1805 = vmatprep.subr.mxu0 0.0
    %1806 = vmatpush1.msra.mxu0 0.0
    %1807 = vmatprep.subr.mxu0 0.0
    %1808 = vmatpush1.msra.mxu0 0.0
    %1809 = vmatprep.subr.mxu0 0.0
    %1810 = vmatpush1.msra.mxu0 0.0
    %1811 = vmatprep.subr.mxu0 0.0
    %1812 = vmatpush1.msra.mxu0 0.0
    %1813 = vmatprep.subr.mxu0 0.0
    %1814 = vmatpush1.msra.mxu0 0.0
    %1815 = vmatprep.subr.mxu0 0.0
    %1816 = vmatpush1.msra.mxu0 0.0
    %1817 = vmatprep.subr.mxu0 0.0
    %1818 = vmatpush1.msra.mxu0 0.0
    %1819 = vmatprep.subr.mxu0 0.0
    %1820 = vmatpush1.msra.mxu0 0.0
    %1821 = vmatprep.subr.mxu0 0.0
    %1822 = vmatpush1.msra.mxu0 0.0
    %1823 = vmatprep.subr.mxu0 0.0
    %1824 = vmatpush1.msra.mxu0 0.0
    %1825 = vmatprep.subr.mxu0 0.0
    %1826 = vmatpush1.msra.mxu0 0.0
    %1827 = vmatprep.subr.mxu0 0.0
    %1828 = vmatpush1.msra.mxu0 0.0
    %1829 = vmatprep.subr.mxu0 0.0
    %1830 = vmatpush1.msra.mxu0 0.0
    %1831 = vmatprep.subr.mxu0 0.0
    %1832 = vmatpush1.msra.mxu0 0.0
    %1833 = vmatprep.subr.mxu0 0.0
    %1834 = vmatpush1.msra.mxu0 0.0
    %1835 = vmatprep.subr.mxu0 0.0
    %1836 = vmatpush1.msra.mxu0 0.0
    %1837 = vmatprep.mubr.f32.mxu0 0.0
    %1838 = vmatmul.mubr.f32.gmra.mrb[0].mxu0 %v1763
    %v1839 = vpop.f32.mrb[0].mxu0
    %v1840 = vadd.f32 0.0, %v1839
    %v1841 = vpop.f32.mrb[0].mxu0
    %v1842 = vadd.f32 0.0, %v1841
    %1843 = vdwg.mxu0
    %1844 = vmatprep.subr.mxu0 %v212
    %1845 = vmatpush1.msra.mxu0 %v211
    %1846 = vmatprep.subr.mxu0 %v216
    %1847 = vmatpush1.msra.mxu0 %v215
    %1848 = vmatprep.subr.mxu0 %v220
    %1849 = vmatpush1.msra.mxu0 %v219
    %1850 = vmatprep.subr.mxu0 %v224
    %1851 = vmatpush1.msra.mxu0 %v223
    %1852 = vmatprep.subr.mxu0 %v228
    %1853 = vmatpush1.msra.mxu0 %v227
    %1854 = vmatprep.subr.mxu0 %v232
    %1855 = vmatpush1.msra.mxu0 %v231
    %1856 = vmatprep.subr.mxu0 %v236
    %1857 = vmatpush1.msra.mxu0 %v235
    %1858 = vmatprep.subr.mxu0 %v240
    %1859 = vmatpush1.msra.mxu0 %v239
    %1860 = vmatprep.subr.mxu0 %v244
    %1861 = vmatpush1.msra.mxu0 %v243
    %1862 = vmatprep.subr.mxu0 %v248
    %1863 = vmatpush1.msra.mxu0 %v247
    %1864 = vmatprep.subr.mxu0 %v252
    %1865 = vmatpush1.msra.mxu0 %v251
    %1866 = vmatprep.subr.mxu0 %v256
    %1867 = vmatpush1.msra.mxu0 %v255
    %1868 = vmatprep.subr.mxu0 %v260
    %1869 = vmatpush1.msra.mxu0 %v259
    %1870 = vmatprep.subr.mxu0 %v264
    %1871 = vmatpush1.msra.mxu0 %v263
    %1872 = vmatprep.subr.mxu0 %v268
    %1873 = vmatpush1.msra.mxu0 %v267
    %1874 = vmatprep.subr.mxu0 %v272
    %1875 = vmatpush1.msra.mxu0 %v271
    %1876 = vmatprep.subr.mxu0 0.0
    %1877 = vmatpush1.msra.mxu0 0.0
    %1878 = vmatprep.subr.mxu0 0.0
    %1879 = vmatpush1.msra.mxu0 0.0
    %1880 = vmatprep.subr.mxu0 0.0
    %1881 = vmatpush1.msra.mxu0 0.0
    %1882 = vmatprep.subr.mxu0 0.0
    %1883 = vmatpush1.msra.mxu0 0.0
    %1884 = vmatprep.subr.mxu0 0.0
    %1885 = vmatpush1.msra.mxu0 0.0
    %1886 = vmatprep.subr.mxu0 0.0
    %1887 = vmatpush1.msra.mxu0 0.0
    %1888 = vmatprep.subr.mxu0 0.0
    %1889 = vmatpush1.msra.mxu0 0.0
    %1890 = vmatprep.subr.mxu0 0.0
    %1891 = vmatpush1.msra.mxu0 0.0
    %1892 = vmatprep.subr.mxu0 0.0
    %1893 = vmatpush1.msra.mxu0 0.0
    %1894 = vmatprep.subr.mxu0 0.0
    %1895 = vmatpush1.msra.mxu0 0.0
    %1896 = vmatprep.subr.mxu0 0.0
    %1897 = vmatpush1.msra.mxu0 0.0
    %1898 = vmatprep.subr.mxu0 0.0
    %1899 = vmatpush1.msra.mxu0 0.0
    %1900 = vmatprep.subr.mxu0 0.0
    %1901 = vmatpush1.msra.mxu0 0.0
    %1902 = vmatprep.subr.mxu0 0.0
    %1903 = vmatpush1.msra.mxu0 0.0
    %1904 = vmatprep.subr.mxu0 0.0
    %1905 = vmatpush1.msra.mxu0 0.0
    %1906 = vmatprep.subr.mxu0 0.0
    %1907 = vmatpush1.msra.mxu0 0.0
    %1908 = vmatprep.mubr.f32.mxu0 0.0
    %1909 = vmatmul.mubr.f32.gmra.mrb[0].mxu0 %v1763
    %v1910 = vpop.f32.mrb[0].mxu0
    %v1911 = vadd.f32 0.0, %v1910
    %v1912 = vpop.f32.mrb[0].mxu0
    %v1913 = vadd.f32 0.0, %v1912
    %1914 = vdwg.mxu0
    %v1915 = vadd.f32 %v1769, %v1840
    %v1916 = vadd.f32 %v1770, %v1842
    %v1917 = vadd.f32 %v1771, %v1911
    %v1918 = vadd.f32 %v1772, %v1913
    %v1919 = vtanh.pop %v1915
    %v1920 = vtanh.pop %v1916
    %v1921 = vtanh.pop %v1917
    %v1922 = vtanh.pop %v1918
    %v1923 = vmul.f32 %v1919, %v106
    %v1924 = vmul.f32 %v1920, %v110
    %v1925 = vmul.f32 %v1921, %v114
    %v1926 = vmul.f32 %v1922, %v118
    %v1927 = vadd.f32 %v1923, %v128
    %v1928 = vadd.f32 %v1924, %v132
    %v1929 = vadd.f32 %v1925, %v136
    %v1930 = vadd.f32 %v1926, %v140
    %v1931 = vmul.f32 %v1928, %v1761
    %v1932 = vmul.f32 %v1927, %v1929
    %v1933 = vadd.f32 %v1931, %v1932
    %v1934 = vtanh.pop %v1933
    %v1935 = vmul.f32 %v1930, %v1934
    %s1936 = scalar_lea.vmem [#allocation5], 56
    %1937 = vst [vmem:[%s1936] sm:$0xff] %v1935
    %1938 = vst [vmem:[#allocation2] sm:$0xff] %v1935
    %1939 = vst [vmem:[#allocation3] sm:$0xff] %v1933
    %v1940 = vld [vmem:[#allocation10] sm:$0xff]
    %v1941 = vld [vmem:[#allocation10 + $0x8] sm:$0xff]
    %v1942 = vld [vmem:[#allocation10 + $0x10] sm:$0xff]
    %v1943 = vld [vmem:[#allocation10 + $0x18] sm:$0xff]
    %v1944 = vld [vmem:[#allocation10 + $0x20] sm:$0xff]
    %v1945 = vld [vmem:[#allocation10 + $0x28] sm:$0xff]
    %v1946 = vld [vmem:[#allocation10 + $0x30] sm:$0xff]
    %v1947 = vld [vmem:[#allocation10 + $0x38] sm:$0xff]
    %v1948 = vld [vmem:[#allocation10 + $0x40] sm:$0xff]
    %v1949 = vld [vmem:[#allocation10 + $0x48] sm:$0xff]
    %v1950 = vld [vmem:[#allocation10 + $0x50] sm:$0xff]
    %v1951 = vld [vmem:[#allocation10 + $0x58] sm:$0xff]
    %v1952 = vld [vmem:[#allocation10 + $0x60] sm:$0xff]
    %v1953 = vld [vmem:[#allocation10 + $0x68] sm:$0xff]
    %v1954 = vld [vmem:[#allocation10 + $0x70] sm:$0xff]
    %v1955 = vld [vmem:[#allocation10 + $0x78] sm:$0xff]
    %v1956 = vld [vmem:[#allocation10 + $0x80] sm:$0xff]
    %v1957 = vld [vmem:[#allocation10 + $0x88] sm:$0xff]
    %v1958 = vld [vmem:[#allocation10 + $0x90] sm:$0xff]
    %v1959 = vld [vmem:[#allocation10 + $0x98] sm:$0xff]
    %v1960 = vld [vmem:[#allocation10 + $0xa0] sm:$0xff]
    %v1961 = vld [vmem:[#allocation10 + $0xa8] sm:$0xff]
    %v1962 = vld [vmem:[#allocation10 + $0xb0] sm:$0xff]
    %v1963 = vld [vmem:[#allocation10 + $0xb8] sm:$0xff]
    %v1964 = vld [vmem:[#allocation10 + $0xc0] sm:$0xff]
    %v1965 = vld [vmem:[#allocation10 + $0xc8] sm:$0xff]
    %v1966 = vld [vmem:[#allocation10 + $0xd0] sm:$0xff]
    %v1967 = vld [vmem:[#allocation10 + $0xd8] sm:$0xff]
    %v1968 = vld [vmem:[#allocation10 + $0xe0] sm:$0xff]
    %v1969 = vld [vmem:[#allocation10 + $0xe8] sm:$0xff]
    %v1970 = vld [vmem:[#allocation10 + $0xf0] sm:$0xff]
    %v1971 = vld [vmem:[#allocation10 + $0xf8] sm:$0xff]
    %v1972 = vld [vmem:[#allocation10 + $0x100] sm:$0xff]
    %v1973 = vld [vmem:[#allocation10 + $0x108] sm:$0xff]
    %v1974 = vld [vmem:[#allocation10 + $0x110] sm:$0xff]
    %v1975 = vld [vmem:[#allocation10 + $0x118] sm:$0xff]
    %v1976 = vld [vmem:[#allocation10 + $0x120] sm:$0xff]
    %v1977 = vld [vmem:[#allocation10 + $0x128] sm:$0xff]
    %v1978 = vld [vmem:[#allocation10 + $0x130] sm:$0xff]
    %v1979 = vld [vmem:[#allocation10 + $0x138] sm:$0xff]
    %v1980 = vld [vmem:[#allocation10 + $0x140] sm:$0xff]
    %v1981 = vld [vmem:[#allocation10 + $0x148] sm:$0xff]
    %v1982 = vld [vmem:[#allocation10 + $0x150] sm:$0xff]
    %v1983 = vld [vmem:[#allocation10 + $0x158] sm:$0xff]
    %v1984 = vld [vmem:[#allocation10 + $0x160] sm:$0xff]
    %v1985 = vld [vmem:[#allocation10 + $0x168] sm:$0xff]
    %v1986 = vld [vmem:[#allocation10 + $0x170] sm:$0xff]
    %v1987 = vld [vmem:[#allocation10 + $0x178] sm:$0xff]
    %v1988 = vld [vmem:[#allocation10 + $0x180] sm:$0xff]
    %v1989 = vld [vmem:[#allocation10 + $0x188] sm:$0xff]
    %v1990 = vld [vmem:[#allocation10 + $0x190] sm:$0xff]
    %v1991 = vld [vmem:[#allocation10 + $0x198] sm:$0xff]
    %v1992 = vld [vmem:[#allocation10 + $0x1a0] sm:$0xff]
    %v1993 = vld [vmem:[#allocation10 + $0x1a8] sm:$0xff]
    %v1994 = vld [vmem:[#allocation10 + $0x1b0] sm:$0xff]
    %v1995 = vld [vmem:[#allocation10 + $0x1b8] sm:$0xff]
    %v1996 = vld [vmem:[#allocation10 + $0x1c0] sm:$0xff]
    %v1997 = vld [vmem:[#allocation10 + $0x1c8] sm:$0xff]
    %v1998 = vld [vmem:[#allocation10 + $0x1d0] sm:$0xff]
    %v1999 = vld [vmem:[#allocation10 + $0x1d8] sm:$0xff]
    %v2000 = vld [vmem:[#allocation10 + $0x1e0] sm:$0xff]
    %v2001 = vld [vmem:[#allocation10 + $0x1e8] sm:$0xff]
    %v2002 = vld [vmem:[#allocation10 + $0x1f0] sm:$0xff]
    %v2003 = vld [vmem:[#allocation10 + $0x1f8] sm:$0xff]
    %v2004 = vld [vmem:[#allocation11] sm:$0xff]
    %v2005 = vld [vmem:[#allocation11 + $0x8] sm:$0xff]
    %v2006 = vld [vmem:[#allocation11 + $0x10] sm:$0xff]
    %v2007 = vld [vmem:[#allocation11 + $0x18] sm:$0xff]
    %v2008 = vld [vmem:[#allocation11 + $0x20] sm:$0xff]
    %v2009 = vld [vmem:[#allocation11 + $0x28] sm:$0xff]
    %v2010 = vld [vmem:[#allocation11 + $0x30] sm:$0xff]
    %v2011 = vld [vmem:[#allocation11 + $0x38] sm:$0xff]
    %v2012 = vld [vmem:[#allocation11 + $0x40] sm:$0xff]
    %v2013 = vld [vmem:[#allocation11 + $0x48] sm:$0xff]
    %v2014 = vld [vmem:[#allocation11 + $0x50] sm:$0xff]
    %v2015 = vld [vmem:[#allocation11 + $0x58] sm:$0xff]
    %v2016 = vld [vmem:[#allocation11 + $0x60] sm:$0xff]
    %v2017 = vld [vmem:[#allocation11 + $0x68] sm:$0xff]
    %v2018 = vld [vmem:[#allocation11 + $0x70] sm:$0xff]
    %v2019 = vld [vmem:[#allocation11 + $0x78] sm:$0xff]
    %v2020 = vld [vmem:[#allocation11 + $0x80] sm:$0xff]
    %v2021 = vld [vmem:[#allocation11 + $0x88] sm:$0xff]
    %v2022 = vld [vmem:[#allocation11 + $0x90] sm:$0xff]
    %v2023 = vld [vmem:[#allocation11 + $0x98] sm:$0xff]
    %v2024 = vld [vmem:[#allocation11 + $0xa0] sm:$0xff]
    %v2025 = vld [vmem:[#allocation11 + $0xa8] sm:$0xff]
    %v2026 = vld [vmem:[#allocation11 + $0xb0] sm:$0xff]
    %v2027 = vld [vmem:[#allocation11 + $0xb8] sm:$0xff]
    %v2028 = vld [vmem:[#allocation11 + $0xc0] sm:$0xff]
    %v2029 = vld [vmem:[#allocation11 + $0xc8] sm:$0xff]
    %v2030 = vld [vmem:[#allocation11 + $0xd0] sm:$0xff]
    %v2031 = vld [vmem:[#allocation11 + $0xd8] sm:$0xff]
    %v2032 = vld [vmem:[#allocation11 + $0xe0] sm:$0xff]
    %v2033 = vld [vmem:[#allocation11 + $0xe8] sm:$0xff]
    %v2034 = vld [vmem:[#allocation11 + $0xf0] sm:$0xff]
    %v2035 = vld [vmem:[#allocation11 + $0xf8] sm:$0xff]
    %v2036 = vld [vmem:[#allocation11 + $0x100] sm:$0xff]
    %v2037 = vld [vmem:[#allocation11 + $0x108] sm:$0xff]
    %v2038 = vld [vmem:[#allocation11 + $0x110] sm:$0xff]
    %v2039 = vld [vmem:[#allocation11 + $0x118] sm:$0xff]
    %v2040 = vld [vmem:[#allocation11 + $0x120] sm:$0xff]
    %v2041 = vld [vmem:[#allocation11 + $0x128] sm:$0xff]
    %v2042 = vld [vmem:[#allocation11 + $0x130] sm:$0xff]
    %v2043 = vld [vmem:[#allocation11 + $0x138] sm:$0xff]
    %v2044 = vld [vmem:[#allocation11 + $0x140] sm:$0xff]
    %v2045 = vld [vmem:[#allocation11 + $0x148] sm:$0xff]
    %v2046 = vld [vmem:[#allocation11 + $0x150] sm:$0xff]
    %v2047 = vld [vmem:[#allocation11 + $0x158] sm:$0xff]
    %v2048 = vld [vmem:[#allocation11 + $0x160] sm:$0xff]
    %v2049 = vld [vmem:[#allocation11 + $0x168] sm:$0xff]
    %v2050 = vld [vmem:[#allocation11 + $0x170] sm:$0xff]
    %v2051 = vld [vmem:[#allocation11 + $0x178] sm:$0xff]
    %v2052 = vld [vmem:[#allocation11 + $0x180] sm:$0xff]
    %v2053 = vld [vmem:[#allocation11 + $0x188] sm:$0xff]
    %v2054 = vld [vmem:[#allocation11 + $0x190] sm:$0xff]
    %v2055 = vld [vmem:[#allocation11 + $0x198] sm:$0xff]
    %v2056 = vld [vmem:[#allocation11 + $0x1a0] sm:$0xff]
    %v2057 = vld [vmem:[#allocation11 + $0x1a8] sm:$0xff]
    %v2058 = vld [vmem:[#allocation11 + $0x1b0] sm:$0xff]
    %v2059 = vld [vmem:[#allocation11 + $0x1b8] sm:$0xff]
    %v2060 = vld [vmem:[#allocation11 + $0x1c0] sm:$0xff]
    %v2061 = vld [vmem:[#allocation11 + $0x1c8] sm:$0xff]
    %v2062 = vld [vmem:[#allocation11 + $0x1d0] sm:$0xff]
    %v2063 = vld [vmem:[#allocation11 + $0x1d8] sm:$0xff]
    %v2064 = vld [vmem:[#allocation11 + $0x1e0] sm:$0xff]
    %v2065 = vld [vmem:[#allocation11 + $0x1e8] sm:$0xff]
    %v2066 = vld [vmem:[#allocation11 + $0x1f0] sm:$0xff]
    %v2067 = vld [vmem:[#allocation11 + $0x1f8] sm:$0xff]
    %v2068 = vld [vmem:[#allocation5] sm:$0xff]
    %v2069 = vld [vmem:[#allocation5 + $0x8] sm:$0xff]
    %v2070 = vld [vmem:[#allocation5 + $0x10] sm:$0xff]
    %v2071 = vld [vmem:[#allocation5 + $0x18] sm:$0xff]
    %v2072 = vld [vmem:[#allocation5 + $0x20] sm:$0xff]
    %v2073 = vld [vmem:[#allocation5 + $0x28] sm:$0xff]
    %v2074 = vld [vmem:[#allocation5 + $0x30] sm:$0xff]
    %v2075 = vld [vmem:[#allocation5 + $0x38] sm:$0xff]
    %v2076 = vld [vmem:[%s6] sm:$0xf]
    %v2078 = vlaneseq
    %v2079 = vshrl.u32 %v2078, 7
    %v2080 = vsub.s32 0, %v2079
    %v2081 = vrot.slane %v2076, %v2080
    %v2082 = vlaneseq
    %v2083 = vshrl.u32 %v2082, 7
    %v2084 = vsub.s32 1, %v2083
    %v2085 = vrot.slane %v2076, %v2084
    %v2086 = vlaneseq
    %v2087 = vshrl.u32 %v2086, 7
    %v2088 = vsub.s32 2, %v2087
    %v2089 = vrot.slane %v2076, %v2088
    %v2090 = vlaneseq
    %v2091 = vshrl.u32 %v2090, 7
    %v2092 = vsub.s32 3, %v2091
    %v2093 = vrot.slane %v2076, %v2092
    %2098 = vmatprep.subr.mxu0 %v1941
    %2099 = vmatpush1.msra.mxu0 %v1940
    %2100 = vmatprep.subr.mxu0 %v1945
    %2101 = vmatpush1.msra.mxu0 %v1944
    %2102 = vmatprep.subr.mxu0 %v1949
    %2103 = vmatpush1.msra.mxu0 %v1948
    %2104 = vmatprep.subr.mxu0 %v1953
    %2105 = vmatpush1.msra.mxu0 %v1952
    %2106 = vmatprep.subr.mxu0 %v1957
    %2107 = vmatpush1.msra.mxu0 %v1956
    %2108 = vmatprep.subr.mxu0 %v1961
    %2109 = vmatpush1.msra.mxu0 %v1960
    %2110 = vmatprep.subr.mxu0 %v1965
    %2111 = vmatpush1.msra.mxu0 %v1964
    %2112 = vmatprep.subr.mxu0 %v1969
    %2113 = vmatpush1.msra.mxu0 %v1968
    %2114 = vmatprep.subr.mxu0 %v1973
    %2115 = vmatpush1.msra.mxu0 %v1972
    %2116 = vmatprep.subr.mxu0 %v1977
    %2117 = vmatpush1.msra.mxu0 %v1976
    %2118 = vmatprep.subr.mxu0 %v1981
    %2119 = vmatpush1.msra.mxu0 %v1980
    %2120 = vmatprep.subr.mxu0 %v1985
    %2121 = vmatpush1.msra.mxu0 %v1984
    %2122 = vmatprep.subr.mxu0 %v1989
    %2123 = vmatpush1.msra.mxu0 %v1988
    %2124 = vmatprep.subr.mxu0 %v1993
    %2125 = vmatpush1.msra.mxu0 %v1992
    %2126 = vmatprep.subr.mxu0 %v1997
    %2127 = vmatpush1.msra.mxu0 %v1996
    %2128 = vmatprep.subr.mxu0 %v2001
    %2129 = vmatpush1.msra.mxu0 %v2000
    %2130 = vmatprep.subr.mxu0 0.0
    %2131 = vmatpush1.msra.mxu0 0.0
    %2132 = vmatprep.subr.mxu0 0.0
    %2133 = vmatpush1.msra.mxu0 0.0
    %2134 = vmatprep.subr.mxu0 0.0
    %2135 = vmatpush1.msra.mxu0 0.0
    %2136 = vmatprep.subr.mxu0 0.0
    %2137 = vmatpush1.msra.mxu0 0.0
    %2138 = vmatprep.subr.mxu0 0.0
    %2139 = vmatpush1.msra.mxu0 0.0
    %2140 = vmatprep.subr.mxu0 0.0
    %2141 = vmatpush1.msra.mxu0 0.0
    %2142 = vmatprep.subr.mxu0 0.0
    %2143 = vmatpush1.msra.mxu0 0.0
    %2144 = vmatprep.subr.mxu0 0.0
    %2145 = vmatpush1.msra.mxu0 0.0
    %2146 = vmatprep.subr.mxu0 0.0
    %2147 = vmatpush1.msra.mxu0 0.0
    %2148 = vmatprep.subr.mxu0 0.0
    %2149 = vmatpush1.msra.mxu0 0.0
    %2150 = vmatprep.subr.mxu0 0.0
    %2151 = vmatpush1.msra.mxu0 0.0
    %2152 = vmatprep.subr.mxu0 0.0
    %2153 = vmatpush1.msra.mxu0 0.0
    %2154 = vmatprep.subr.mxu0 0.0
    %2155 = vmatpush1.msra.mxu0 0.0
    %2156 = vmatprep.subr.mxu0 0.0
    %2157 = vmatpush1.msra.mxu0 0.0
    %2158 = vmatprep.subr.mxu0 0.0
    %2159 = vmatpush1.msra.mxu0 0.0
    %2160 = vmatprep.subr.mxu0 0.0
    %2161 = vmatpush1.msra.mxu0 0.0
    %2162 = vmatprep.mubr.f32.mxu0 0.0
    %2163 = vmatmul.mubr.f32.gmra.mrb[0].mxu0 %v2068
    %v2164 = vpop.f32.mrb[0].mxu0
    %v2165 = vadd.f32 %v2081, %v2164
    %v2166 = vpop.f32.mrb[0].mxu0
    %v2167 = vadd.f32 %v2085, %v2166
    %2168 = vmatprep.mubr.f32.mxu0 0.0
    %2169 = vmatmul.mubr.f32.gmra.mrb[0].mxu0 %v2069
    %v2170 = vpop.f32.mrb[0].mxu0
    %v2171 = vadd.f32 %v2081, %v2170
    %v2172 = vpop.f32.mrb[0].mxu0
    %v2173 = vadd.f32 %v2085, %v2172
    %2174 = vmatprep.mubr.f32.mxu0 0.0
    %2175 = vmatmul.mubr.f32.gmra.mrb[0].mxu0 %v2070
    %v2176 = vpop.f32.mrb[0].mxu0
    %v2177 = vadd.f32 %v2081, %v2176
    %v2178 = vpop.f32.mrb[0].mxu0
    %v2179 = vadd.f32 %v2085, %v2178
    %2180 = vmatprep.mubr.f32.mxu0 0.0
    %2181 = vmatmul.mubr.f32.gmra.mrb[0].mxu0 %v2071
    %v2182 = vpop.f32.mrb[0].mxu0
    %v2183 = vadd.f32 %v2081, %v2182
    %v2184 = vpop.f32.mrb[0].mxu0
    %v2185 = vadd.f32 %v2085, %v2184
    %2186 = vmatprep.mubr.f32.mxu0 0.0
    %2187 = vmatmul.mubr.f32.gmra.mrb[0].mxu0 %v2072
    %v2188 = vpop.f32.mrb[0].mxu0
    %v2189 = vadd.f32 %v2081, %v2188
    %v2190 = vpop.f32.mrb[0].mxu0
    %v2191 = vadd.f32 %v2085, %v2190
    %2192 = vmatprep.mubr.f32.mxu0 0.0
    %2193 = vmatmul.mubr.f32.gmra.mrb[0].mxu0 %v2073
    %v2194 = vpop.f32.mrb[0].mxu0
    %v2195 = vadd.f32 %v2081, %v2194
    %v2196 = vpop.f32.mrb[0].mxu0
    %v2197 = vadd.f32 %v2085, %v2196
    %2198 = vmatprep.mubr.f32.mxu0 0.0
    %2199 = vmatmul.mubr.f32.gmra.mrb[0].mxu0 %v2074
    %v2200 = vpop.f32.mrb[0].mxu0
    %v2201 = vadd.f32 %v2081, %v2200
    %v2202 = vpop.f32.mrb[0].mxu0
    %v2203 = vadd.f32 %v2085, %v2202
    %2204 = vmatprep.mubr.f32.mxu0 0.0
    %2205 = vmatmul.mubr.f32.gmra.mrb[0].mxu0 %v2075
    %v2206 = vpop.f32.mrb[0].mxu0
    %v2207 = vadd.f32 %v2081, %v2206
    %v2208 = vpop.f32.mrb[0].mxu0
    %v2209 = vadd.f32 %v2085, %v2208
    %2210 = vdwg.mxu0
    %2211 = vmatprep.subr.mxu0 %v1943
    %2212 = vmatpush1.msra.mxu0 %v1942
    %2213 = vmatprep.subr.mxu0 %v1947
    %2214 = vmatpush1.msra.mxu0 %v1946
    %2215 = vmatprep.subr.mxu0 %v1951
    %2216 = vmatpush1.msra.mxu0 %v1950
    %2217 = vmatprep.subr.mxu0 %v1955
    %2218 = vmatpush1.msra.mxu0 %v1954
    %2219 = vmatprep.subr.mxu0 %v1959
    %2220 = vmatpush1.msra.mxu0 %v1958
    %2221 = vmatprep.subr.mxu0 %v1963
    %2222 = vmatpush1.msra.mxu0 %v1962
    %2223 = vmatprep.subr.mxu0 %v1967
    %2224 = vmatpush1.msra.mxu0 %v1966
    %2225 = vmatprep.subr.mxu0 %v1971
    %2226 = vmatpush1.msra.mxu0 %v1970
    %2227 = vmatprep.subr.mxu0 %v1975
    %2228 = vmatpush1.msra.mxu0 %v1974
    %2229 = vmatprep.subr.mxu0 %v1979
    %2230 = vmatpush1.msra.mxu0 %v1978
    %2231 = vmatprep.subr.mxu0 %v1983
    %2232 = vmatpush1.msra.mxu0 %v1982
    %2233 = vmatprep.subr.mxu0 %v1987
    %2234 = vmatpush1.msra.mxu0 %v1986
    %2235 = vmatprep.subr.mxu0 %v1991
    %2236 = vmatpush1.msra.mxu0 %v1990
    %2237 = vmatprep.subr.mxu0 %v1995
    %2238 = vmatpush1.msra.mxu0 %v1994
    %2239 = vmatprep.subr.mxu0 %v1999
    %2240 = vmatpush1.msra.mxu0 %v1998
    %2241 = vmatprep.subr.mxu0 %v2003
    %2242 = vmatpush1.msra.mxu0 %v2002
    %2243 = vmatprep.subr.mxu0 0.0
    %2244 = vmatpush1.msra.mxu0 0.0
    %2245 = vmatprep.subr.mxu0 0.0
    %2246 = vmatpush1.msra.mxu0 0.0
    %2247 = vmatprep.subr.mxu0 0.0
    %2248 = vmatpush1.msra.mxu0 0.0
    %2249 = vmatprep.subr.mxu0 0.0
    %2250 = vmatpush1.msra.mxu0 0.0
    %2251 = vmatprep.subr.mxu0 0.0
    %2252 = vmatpush1.msra.mxu0 0.0
    %2253 = vmatprep.subr.mxu0 0.0
    %2254 = vmatpush1.msra.mxu0 0.0
    %2255 = vmatprep.subr.mxu0 0.0
    %2256 = vmatpush1.msra.mxu0 0.0
    %2257 = vmatprep.subr.mxu0 0.0
    %2258 = vmatpush1.msra.mxu0 0.0
    %2259 = vmatprep.subr.mxu0 0.0
    %2260 = vmatpush1.msra.mxu0 0.0
    %2261 = vmatprep.subr.mxu0 0.0
    %2262 = vmatpush1.msra.mxu0 0.0
    %2263 = vmatprep.subr.mxu0 0.0
    %2264 = vmatpush1.msra.mxu0 0.0
    %2265 = vmatprep.subr.mxu0 0.0
    %2266 = vmatpush1.msra.mxu0 0.0
    %2267 = vmatprep.subr.mxu0 0.0
    %2268 = vmatpush1.msra.mxu0 0.0
    %2269 = vmatprep.subr.mxu0 0.0
    %2270 = vmatpush1.msra.mxu0 0.0
    %2271 = vmatprep.subr.mxu0 0.0
    %2272 = vmatpush1.msra.mxu0 0.0
    %2273 = vmatprep.subr.mxu0 0.0
    %2274 = vmatpush1.msra.mxu0 0.0
    %2275 = vmatprep.mubr.f32.mxu0 0.0
    %2276 = vmatmul.mubr.f32.gmra.mrb[0].mxu0 %v2068
    %v2277 = vpop.f32.mrb[0].mxu0
    %v2278 = vadd.f32 %v2089, %v2277
    %v2279 = vpop.f32.mrb[0].mxu0
    %v2280 = vadd.f32 %v2093, %v2279
    %2281 = vmatprep.mubr.f32.mxu0 0.0
    %2282 = vmatmul.mubr.f32.gmra.mrb[0].mxu0 %v2069
    %v2283 = vpop.f32.mrb[0].mxu0
    %v2284 = vadd.f32 %v2089, %v2283
    %v2285 = vpop.f32.mrb[0].mxu0
    %v2286 = vadd.f32 %v2093, %v2285
    %2287 = vmatprep.mubr.f32.mxu0 0.0
    %2288 = vmatmul.mubr.f32.gmra.mrb[0].mxu0 %v2070
    %v2289 = vpop.f32.mrb[0].mxu0
    %v2290 = vadd.f32 %v2089, %v2289
    %v2291 = vpop.f32.mrb[0].mxu0
    %v2292 = vadd.f32 %v2093, %v2291
    %2293 = vmatprep.mubr.f32.mxu0 0.0
    %2294 = vmatmul.mubr.f32.gmra.mrb[0].mxu0 %v2071
    %v2295 = vpop.f32.mrb[0].mxu0
    %v2296 = vadd.f32 %v2089, %v2295
    %v2297 = vpop.f32.mrb[0].mxu0
    %v2298 = vadd.f32 %v2093, %v2297
    %2299 = vmatprep.mubr.f32.mxu0 0.0
    %2300 = vmatmul.mubr.f32.gmra.mrb[0].mxu0 %v2072
    %v2301 = vpop.f32.mrb[0].mxu0
    %v2302 = vadd.f32 %v2089, %v2301
    %v2303 = vpop.f32.mrb[0].mxu0
    %v2304 = vadd.f32 %v2093, %v2303
    %2305 = vmatprep.mubr.f32.mxu0 0.0
    %2306 = vmatmul.mubr.f32.gmra.mrb[0].mxu0 %v2073
    %v2307 = vpop.f32.mrb[0].mxu0
    %v2308 = vadd.f32 %v2089, %v2307
    %v2309 = vpop.f32.mrb[0].mxu0
    %v2310 = vadd.f32 %v2093, %v2309
    %2311 = vmatprep.mubr.f32.mxu0 0.0
    %2312 = vmatmul.mubr.f32.gmra.mrb[0].mxu0 %v2074
    %v2313 = vpop.f32.mrb[0].mxu0
    %v2314 = vadd.f32 %v2089, %v2313
    %v2315 = vpop.f32.mrb[0].mxu0
    %v2316 = vadd.f32 %v2093, %v2315
    %2317 = vmatprep.mubr.f32.mxu0 0.0
    %2318 = vmatmul.mubr.f32.gmra.mrb[0].mxu0 %v2075
    %v2319 = vpop.f32.mrb[0].mxu0
    %v2320 = vadd.f32 %v2089, %v2319
    %v2321 = vpop.f32.mrb[0].mxu0
    %v2322 = vadd.f32 %v2093, %v2321
    %2323 = vdwg.mxu0
    %2324 = vst [vmem:[#allocation4] sm:$0xff] %v2165
    %2325 = vst [vmem:[#allocation4 + $0x8] sm:$0xff] %v2167
    %2326 = vst [vmem:[#allocation4 + $0x10] sm:$0xff] %v2278
    %2327 = vst [vmem:[#allocation4 + $0x18] sm:$0xff] %v2280
    %2328 = vst [vmem:[#allocation4 + $0x20] sm:$0xff] %v2171
    %2329 = vst [vmem:[#allocation4 + $0x28] sm:$0xff] %v2173
    %2330 = vst [vmem:[#allocation4 + $0x30] sm:$0xff] %v2284
    %2331 = vst [vmem:[#allocation4 + $0x38] sm:$0xff] %v2286
    %2332 = vst [vmem:[#allocation4 + $0x40] sm:$0xff] %v2177
    %2333 = vst [vmem:[#allocation4 + $0x48] sm:$0xff] %v2179
    %2334 = vst [vmem:[#allocation4 + $0x50] sm:$0xff] %v2290
    %2335 = vst [vmem:[#allocation4 + $0x58] sm:$0xff] %v2292
    %2336 = vst [vmem:[#allocation4 + $0x60] sm:$0xff] %v2183
    %2337 = vst [vmem:[#allocation4 + $0x68] sm:$0xff] %v2185
    %2338 = vst [vmem:[#allocation4 + $0x70] sm:$0xff] %v2296
    %2339 = vst [vmem:[#allocation4 + $0x78] sm:$0xff] %v2298
    %2340 = vst [vmem:[#allocation4 + $0x80] sm:$0xff] %v2189
    %2341 = vst [vmem:[#allocation4 + $0x88] sm:$0xff] %v2191
    %2342 = vst [vmem:[#allocation4 + $0x90] sm:$0xff] %v2302
    %2343 = vst [vmem:[#allocation4 + $0x98] sm:$0xff] %v2304
    %2344 = vst [vmem:[#allocation4 + $0xa0] sm:$0xff] %v2195
    %2345 = vst [vmem:[#allocation4 + $0xa8] sm:$0xff] %v2197
    %2346 = vst [vmem:[#allocation4 + $0xb0] sm:$0xff] %v2308
    %2347 = vst [vmem:[#allocation4 + $0xb8] sm:$0xff] %v2310
    %2348 = vst [vmem:[#allocation4 + $0xc0] sm:$0xff] %v2201
    %2349 = vst [vmem:[#allocation4 + $0xc8] sm:$0xff] %v2203
    %2350 = vst [vmem:[#allocation4 + $0xd0] sm:$0xff] %v2314
    %2351 = vst [vmem:[#allocation4 + $0xd8] sm:$0xff] %v2316
    %2352 = vst [vmem:[#allocation4 + $0xe0] sm:$0xff] %v2207
    %2353 = vst [vmem:[#allocation4 + $0xe8] sm:$0xff] %v2209
    %2354 = vst [vmem:[#allocation4 + $0xf0] sm:$0xff] %v2320
    %2355 = vst [vmem:[#allocation4 + $0xf8] sm:$0xff] %v2322
    %s2356 = scalar_lea.vmem [#allocation2], 8
    %v2357 = vld [vmem:[%s2356] sm:$0xff]
    %s2358 = scalar_lea.vmem [#allocation3], 8
    %v2359 = vld [vmem:[%s2358] sm:$0xff]
    %v2360 = vld [vmem:[%s565] sm:$0xff]
    %v2361 = vld [vmem:[%s565 + $0x8] sm:$0xff]
    %v2362 = vld [vmem:[%s565 + $0x10] sm:$0xff]
    %v2363 = vld [vmem:[%s565 + $0x18] sm:$0xff]
    %2364 = vmatprep.subr.mxu0 %v2005
    %2365 = vmatpush1.msra.mxu0 %v2004
    %2366 = vmatprep.subr.mxu0 %v2009
    %2367 = vmatpush1.msra.mxu0 %v2008
    %2368 = vmatprep.subr.mxu0 %v2013
    %2369 = vmatpush1.msra.mxu0 %v2012
    %2370 = vmatprep.subr.mxu0 %v2017
    %2371 = vmatpush1.msra.mxu0 %v2016
    %2372 = vmatprep.subr.mxu0 %v2021
    %2373 = vmatpush1.msra.mxu0 %v2020
    %2374 = vmatprep.subr.mxu0 %v2025
    %2375 = vmatpush1.msra.mxu0 %v2024
    %2376 = vmatprep.subr.mxu0 %v2029
    %2377 = vmatpush1.msra.mxu0 %v2028
    %2378 = vmatprep.subr.mxu0 %v2033
    %2379 = vmatpush1.msra.mxu0 %v2032
    %2380 = vmatprep.subr.mxu0 %v2037
    %2381 = vmatpush1.msra.mxu0 %v2036
    %2382 = vmatprep.subr.mxu0 %v2041
    %2383 = vmatpush1.msra.mxu0 %v2040
    %2384 = vmatprep.subr.mxu0 %v2045
    %2385 = vmatpush1.msra.mxu0 %v2044
    %2386 = vmatprep.subr.mxu0 %v2049
    %2387 = vmatpush1.msra.mxu0 %v2048
    %2388 = vmatprep.subr.mxu0 %v2053
    %2389 = vmatpush1.msra.mxu0 %v2052
    %2390 = vmatprep.subr.mxu0 %v2057
    %2391 = vmatpush1.msra.mxu0 %v2056
    %2392 = vmatprep.subr.mxu0 %v2061
    %2393 = vmatpush1.msra.mxu0 %v2060
    %2394 = vmatprep.subr.mxu0 %v2065
    %2395 = vmatpush1.msra.mxu0 %v2064
    %2396 = vmatprep.subr.mxu0 0.0
    %2397 = vmatpush1.msra.mxu0 0.0
    %2398 = vmatprep.subr.mxu0 0.0
    %2399 = vmatpush1.msra.mxu0 0.0
    %2400 = vmatprep.subr.mxu0 0.0
    %2401 = vmatpush1.msra.mxu0 0.0
    %2402 = vmatprep.subr.mxu0 0.0
    %2403 = vmatpush1.msra.mxu0 0.0
    %2404 = vmatprep.subr.mxu0 0.0
    %2405 = vmatpush1.msra.mxu0 0.0
    %2406 = vmatprep.subr.mxu0 0.0
    %2407 = vmatpush1.msra.mxu0 0.0
    %2408 = vmatprep.subr.mxu0 0.0
    %2409 = vmatpush1.msra.mxu0 0.0
    %2410 = vmatprep.subr.mxu0 0.0
    %2411 = vmatpush1.msra.mxu0 0.0
    %2412 = vmatprep.subr.mxu0 0.0
    %2413 = vmatpush1.msra.mxu0 0.0
    %2414 = vmatprep.subr.mxu0 0.0
    %2415 = vmatpush1.msra.mxu0 0.0
    %2416 = vmatprep.subr.mxu0 0.0
    %2417 = vmatpush1.msra.mxu0 0.0
    %2418 = vmatprep.subr.mxu0 0.0
    %2419 = vmatpush1.msra.mxu0 0.0
    %2420 = vmatprep.subr.mxu0 0.0
    %2421 = vmatpush1.msra.mxu0 0.0
    %2422 = vmatprep.subr.mxu0 0.0
    %2423 = vmatpush1.msra.mxu0 0.0
    %2424 = vmatprep.subr.mxu0 0.0
    %2425 = vmatpush1.msra.mxu0 0.0
    %2426 = vmatprep.subr.mxu0 0.0
    %2427 = vmatpush1.msra.mxu0 0.0
    %2428 = vmatprep.mubr.f32.mxu0 0.0
    %2429 = vmatmul.mubr.f32.gmra.mrb[0].mxu0 %v2357
    %v2430 = vpop.f32.mrb[0].mxu0
    %v2431 = vadd.f32 0.0, %v2430
    %v2432 = vpop.f32.mrb[0].mxu0
    %v2433 = vadd.f32 0.0, %v2432
    %2434 = vdwg.mxu0
    %2435 = vmatprep.subr.mxu0 %v2007
    %2436 = vmatpush1.msra.mxu0 %v2006
    %2437 = vmatprep.subr.mxu0 %v2011
    %2438 = vmatpush1.msra.mxu0 %v2010
    %2439 = vmatprep.subr.mxu0 %v2015
    %2440 = vmatpush1.msra.mxu0 %v2014
    %2441 = vmatprep.subr.mxu0 %v2019
    %2442 = vmatpush1.msra.mxu0 %v2018
    %2443 = vmatprep.subr.mxu0 %v2023
    %2444 = vmatpush1.msra.mxu0 %v2022
    %2445 = vmatprep.subr.mxu0 %v2027
    %2446 = vmatpush1.msra.mxu0 %v2026
    %2447 = vmatprep.subr.mxu0 %v2031
    %2448 = vmatpush1.msra.mxu0 %v2030
    %2449 = vmatprep.subr.mxu0 %v2035
    %2450 = vmatpush1.msra.mxu0 %v2034
    %2451 = vmatprep.subr.mxu0 %v2039
    %2452 = vmatpush1.msra.mxu0 %v2038
    %2453 = vmatprep.subr.mxu0 %v2043
    %2454 = vmatpush1.msra.mxu0 %v2042
    %2455 = vmatprep.subr.mxu0 %v2047
    %2456 = vmatpush1.msra.mxu0 %v2046
    %2457 = vmatprep.subr.mxu0 %v2051
    %2458 = vmatpush1.msra.mxu0 %v2050
    %2459 = vmatprep.subr.mxu0 %v2055
    %2460 = vmatpush1.msra.mxu0 %v2054
    %2461 = vmatprep.subr.mxu0 %v2059
    %2462 = vmatpush1.msra.mxu0 %v2058
    %2463 = vmatprep.subr.mxu0 %v2063
    %2464 = vmatpush1.msra.mxu0 %v2062
    %2465 = vmatprep.subr.mxu0 %v2067
    %2466 = vmatpush1.msra.mxu0 %v2066
    %2467 = vmatprep.subr.mxu0 0.0
    %2468 = vmatpush1.msra.mxu0 0.0
    %2469 = vmatprep.subr.mxu0 0.0
    %2470 = vmatpush1.msra.mxu0 0.0
    %2471 = vmatprep.subr.mxu0 0.0
    %2472 = vmatpush1.msra.mxu0 0.0
    %2473 = vmatprep.subr.mxu0 0.0
    %2474 = vmatpush1.msra.mxu0 0.0
    %2475 = vmatprep.subr.mxu0 0.0
    %2476 = vmatpush1.msra.mxu0 0.0
    %2477 = vmatprep.subr.mxu0 0.0
    %2478 = vmatpush1.msra.mxu0 0.0
    %2479 = vmatprep.subr.mxu0 0.0
    %2480 = vmatpush1.msra.mxu0 0.0
    %2481 = vmatprep.subr.mxu0 0.0
    %2482 = vmatpush1.msra.mxu0 0.0
    %2483 = vmatprep.subr.mxu0 0.0
    %2484 = vmatpush1.msra.mxu0 0.0
    %2485 = vmatprep.subr.mxu0 0.0
    %2486 = vmatpush1.msra.mxu0 0.0
    %2487 = vmatprep.subr.mxu0 0.0
    %2488 = vmatpush1.msra.mxu0 0.0
    %2489 = vmatprep.subr.mxu0 0.0
    %2490 = vmatpush1.msra.mxu0 0.0
    %2491 = vmatprep.subr.mxu0 0.0
    %2492 = vmatpush1.msra.mxu0 0.0
    %2493 = vmatprep.subr.mxu0 0.0
    %2494 = vmatpush1.msra.mxu0 0.0
    %2495 = vmatprep.subr.mxu0 0.0
    %2496 = vmatpush1.msra.mxu0 0.0
    %2497 = vmatprep.subr.mxu0 0.0
    %2498 = vmatpush1.msra.mxu0 0.0
    %2499 = vmatprep.mubr.f32.mxu0 0.0
    %2500 = vmatmul.mubr.f32.gmra.mrb[0].mxu0 %v2357
    %v2501 = vpop.f32.mrb[0].mxu0
    %v2502 = vadd.f32 0.0, %v2501
    %v2503 = vpop.f32.mrb[0].mxu0
    %v2504 = vadd.f32 0.0, %v2503
    %2505 = vdwg.mxu0
    %v2506 = vadd.f32 %v2360, %v2431
    %v2507 = vadd.f32 %v2361, %v2433
    %v2508 = vadd.f32 %v2362, %v2502
    %v2509 = vadd.f32 %v2363, %v2504
    %v2510 = vtanh.pop %v2506
    %v2511 = vtanh.pop %v2507
    %v2512 = vtanh.pop %v2508
    %v2513 = vtanh.pop %v2509
    %v2514 = vmul.f32 %v2510, %v106
    %v2515 = vmul.f32 %v2511, %v110
    %v2516 = vmul.f32 %v2512, %v114
    %v2517 = vmul.f32 %v2513, %v118
    %v2518 = vadd.f32 %v2514, %v128
    %v2519 = vadd.f32 %v2515, %v132
    %v2520 = vadd.f32 %v2516, %v136
    %v2521 = vadd.f32 %v2517, %v140
    %v2522 = vmul.f32 %v2519, %v2359
    %v2523 = vmul.f32 %v2518, %v2520
    %v2524 = vadd.f32 %v2522, %v2523
    %v2525 = vtanh.pop %v2524
    %v2526 = vmul.f32 %v2521, %v2525
    %v2527 = vld [vmem:[%s736] sm:$0xff]
    %v2528 = vld [vmem:[%s736 + $0x8] sm:$0xff]
    %v2529 = vld [vmem:[%s736 + $0x10] sm:$0xff]
    %v2530 = vld [vmem:[%s736 + $0x18] sm:$0xff]
    %2531 = vmatprep.subr.mxu0 %v2005
    %2532 = vmatpush1.msra.mxu0 %v2004
    %2533 = vmatprep.subr.mxu0 %v2009
    %2534 = vmatpush1.msra.mxu0 %v2008
    %2535 = vmatprep.subr.mxu0 %v2013
    %2536 = vmatpush1.msra.mxu0 %v2012
    %2537 = vmatprep.subr.mxu0 %v2017
    %2538 = vmatpush1.msra.mxu0 %v2016
    %2539 = vmatprep.subr.mxu0 %v2021
    %2540 = vmatpush1.msra.mxu0 %v2020
    %2541 = vmatprep.subr.mxu0 %v2025
    %2542 = vmatpush1.msra.mxu0 %v2024
    %2543 = vmatprep.subr.mxu0 %v2029
    %2544 = vmatpush1.msra.mxu0 %v2028
    %2545 = vmatprep.subr.mxu0 %v2033
    %2546 = vmatpush1.msra.mxu0 %v2032
    %2547 = vmatprep.subr.mxu0 %v2037
    %2548 = vmatpush1.msra.mxu0 %v2036
    %2549 = vmatprep.subr.mxu0 %v2041
    %2550 = vmatpush1.msra.mxu0 %v2040
    %2551 = vmatprep.subr.mxu0 %v2045
    %2552 = vmatpush1.msra.mxu0 %v2044
    %2553 = vmatprep.subr.mxu0 %v2049
    %2554 = vmatpush1.msra.mxu0 %v2048
    %2555 = vmatprep.subr.mxu0 %v2053
    %2556 = vmatpush1.msra.mxu0 %v2052
    %2557 = vmatprep.subr.mxu0 %v2057
    %2558 = vmatpush1.msra.mxu0 %v2056
    %2559 = vmatprep.subr.mxu0 %v2061
    %2560 = vmatpush1.msra.mxu0 %v2060
    %2561 = vmatprep.subr.mxu0 %v2065
    %2562 = vmatpush1.msra.mxu0 %v2064
    %2563 = vmatprep.subr.mxu0 0.0
    %2564 = vmatpush1.msra.mxu0 0.0
    %2565 = vmatprep.subr.mxu0 0.0
    %2566 = vmatpush1.msra.mxu0 0.0
    %2567 = vmatprep.subr.mxu0 0.0
    %2568 = vmatpush1.msra.mxu0 0.0
    %2569 = vmatprep.subr.mxu0 0.0
    %2570 = vmatpush1.msra.mxu0 0.0
    %2571 = vmatprep.subr.mxu0 0.0
    %2572 = vmatpush1.msra.mxu0 0.0
    %2573 = vmatprep.subr.mxu0 0.0
    %2574 = vmatpush1.msra.mxu0 0.0
    %2575 = vmatprep.subr.mxu0 0.0
    %2576 = vmatpush1.msra.mxu0 0.0
    %2577 = vmatprep.subr.mxu0 0.0
    %2578 = vmatpush1.msra.mxu0 0.0
    %2579 = vmatprep.subr.mxu0 0.0
    %2580 = vmatpush1.msra.mxu0 0.0
    %2581 = vmatprep.subr.mxu0 0.0
    %2582 = vmatpush1.msra.mxu0 0.0
    %2583 = vmatprep.subr.mxu0 0.0
    %2584 = vmatpush1.msra.mxu0 0.0
    %2585 = vmatprep.subr.mxu0 0.0
    %2586 = vmatpush1.msra.mxu0 0.0
    %2587 = vmatprep.subr.mxu0 0.0
    %2588 = vmatpush1.msra.mxu0 0.0
    %2589 = vmatprep.subr.mxu0 0.0
    %2590 = vmatpush1.msra.mxu0 0.0
    %2591 = vmatprep.subr.mxu0 0.0
    %2592 = vmatpush1.msra.mxu0 0.0
    %2593 = vmatprep.subr.mxu0 0.0
    %2594 = vmatpush1.msra.mxu0 0.0
    %2595 = vmatprep.mubr.f32.mxu0 0.0
    %2596 = vmatmul.mubr.f32.gmra.mrb[0].mxu0 %v2526
    %v2597 = vpop.f32.mrb[0].mxu0
    %v2598 = vadd.f32 0.0, %v2597
    %v2599 = vpop.f32.mrb[0].mxu0
    %v2600 = vadd.f32 0.0, %v2599
    %2601 = vdwg.mxu0
    %2602 = vmatprep.subr.mxu0 %v2007
    %2603 = vmatpush1.msra.mxu0 %v2006
    %2604 = vmatprep.subr.mxu0 %v2011
    %2605 = vmatpush1.msra.mxu0 %v2010
    %2606 = vmatprep.subr.mxu0 %v2015
    %2607 = vmatpush1.msra.mxu0 %v2014
    %2608 = vmatprep.subr.mxu0 %v2019
    %2609 = vmatpush1.msra.mxu0 %v2018
    %2610 = vmatprep.subr.mxu0 %v2023
    %2611 = vmatpush1.msra.mxu0 %v2022
    %2612 = vmatprep.subr.mxu0 %v2027
    %2613 = vmatpush1.msra.mxu0 %v2026
    %2614 = vmatprep.subr.mxu0 %v2031
    %2615 = vmatpush1.msra.mxu0 %v2030
    %2616 = vmatprep.subr.mxu0 %v2035
    %2617 = vmatpush1.msra.mxu0 %v2034
    %2618 = vmatprep.subr.mxu0 %v2039
    %2619 = vmatpush1.msra.mxu0 %v2038
    %2620 = vmatprep.subr.mxu0 %v2043
    %2621 = vmatpush1.msra.mxu0 %v2042
    %2622 = vmatprep.subr.mxu0 %v2047
    %2623 = vmatpush1.msra.mxu0 %v2046
    %2624 = vmatprep.subr.mxu0 %v2051
    %2625 = vmatpush1.msra.mxu0 %v2050
    %2626 = vmatprep.subr.mxu0 %v2055
    %2627 = vmatpush1.msra.mxu0 %v2054
    %2628 = vmatprep.subr.mxu0 %v2059
    %2629 = vmatpush1.msra.mxu0 %v2058
    %2630 = vmatprep.subr.mxu0 %v2063
    %2631 = vmatpush1.msra.mxu0 %v2062
    %2632 = vmatprep.subr.mxu0 %v2067
    %2633 = vmatpush1.msra.mxu0 %v2066
    %2634 = vmatprep.subr.mxu0 0.0
    %2635 = vmatpush1.msra.mxu0 0.0
    %2636 = vmatprep.subr.mxu0 0.0
    %2637 = vmatpush1.msra.mxu0 0.0
    %2638 = vmatprep.subr.mxu0 0.0
    %2639 = vmatpush1.msra.mxu0 0.0
    %2640 = vmatprep.subr.mxu0 0.0
    %2641 = vmatpush1.msra.mxu0 0.0
    %2642 = vmatprep.subr.mxu0 0.0
    %2643 = vmatpush1.msra.mxu0 0.0
    %2644 = vmatprep.subr.mxu0 0.0
    %2645 = vmatpush1.msra.mxu0 0.0
    %2646 = vmatprep.subr.mxu0 0.0
    %2647 = vmatpush1.msra.mxu0 0.0
    %2648 = vmatprep.subr.mxu0 0.0
    %2649 = vmatpush1.msra.mxu0 0.0
    %2650 = vmatprep.subr.mxu0 0.0
    %2651 = vmatpush1.msra.mxu0 0.0
    %2652 = vmatprep.subr.mxu0 0.0
    %2653 = vmatpush1.msra.mxu0 0.0
    %2654 = vmatprep.subr.mxu0 0.0
    %2655 = vmatpush1.msra.mxu0 0.0
    %2656 = vmatprep.subr.mxu0 0.0
    %2657 = vmatpush1.msra.mxu0 0.0
    %2658 = vmatprep.subr.mxu0 0.0
    %2659 = vmatpush1.msra.mxu0 0.0
    %2660 = vmatprep.subr.mxu0 0.0
    %2661 = vmatpush1.msra.mxu0 0.0
    %2662 = vmatprep.subr.mxu0 0.0
    %2663 = vmatpush1.msra.mxu0 0.0
    %2664 = vmatprep.subr.mxu0 0.0
    %2665 = vmatpush1.msra.mxu0 0.0
    %2666 = vmatprep.mubr.f32.mxu0 0.0
    %2667 = vmatmul.mubr.f32.gmra.mrb[0].mxu0 %v2526
    %v2668 = vpop.f32.mrb[0].mxu0
    %v2669 = vadd.f32 0.0, %v2668
    %v2670 = vpop.f32.mrb[0].mxu0
    %v2671 = vadd.f32 0.0, %v2670
    %2672 = vdwg.mxu0
    %v2673 = vadd.f32 %v2527, %v2598
    %v2674 = vadd.f32 %v2528, %v2600
    %v2675 = vadd.f32 %v2529, %v2669
    %v2676 = vadd.f32 %v2530, %v2671
    %v2677 = vtanh.pop %v2673
    %v2678 = vtanh.pop %v2674
    %v2679 = vtanh.pop %v2675
    %v2680 = vtanh.pop %v2676
    %v2681 = vmul.f32 %v2677, %v106
    %v2682 = vmul.f32 %v2678, %v110
    %v2683 = vmul.f32 %v2679, %v114
    %v2684 = vmul.f32 %v2680, %v118
    %v2685 = vadd.f32 %v2681, %v128
    %v2686 = vadd.f32 %v2682, %v132
    %v2687 = vadd.f32 %v2683, %v136
    %v2688 = vadd.f32 %v2684, %v140
    %v2689 = vmul.f32 %v2686, %v2524
    %v2690 = vmul.f32 %v2685, %v2687
    %v2691 = vadd.f32 %v2689, %v2690
    %v2692 = vtanh.pop %v2691
    %v2693 = vmul.f32 %v2688, %v2692
    %v2694 = vld [vmem:[%s908] sm:$0xff]
    %v2695 = vld [vmem:[%s908 + $0x8] sm:$0xff]
    %v2696 = vld [vmem:[%s908 + $0x10] sm:$0xff]
    %v2697 = vld [vmem:[%s908 + $0x18] sm:$0xff]
    %2698 = vmatprep.subr.mxu0 %v2005
    %2699 = vmatpush1.msra.mxu0 %v2004
    %2700 = vmatprep.subr.mxu0 %v2009
    %2701 = vmatpush1.msra.mxu0 %v2008
    %2702 = vmatprep.subr.mxu0 %v2013
    %2703 = vmatpush1.msra.mxu0 %v2012
    %2704 = vmatprep.subr.mxu0 %v2017
    %2705 = vmatpush1.msra.mxu0 %v2016
    %2706 = vmatprep.subr.mxu0 %v2021
    %2707 = vmatpush1.msra.mxu0 %v2020
    %2708 = vmatprep.subr.mxu0 %v2025
    %2709 = vmatpush1.msra.mxu0 %v2024
    %2710 = vmatprep.subr.mxu0 %v2029
    %2711 = vmatpush1.msra.mxu0 %v2028
    %2712 = vmatprep.subr.mxu0 %v2033
    %2713 = vmatpush1.msra.mxu0 %v2032
    %2714 = vmatprep.subr.mxu0 %v2037
    %2715 = vmatpush1.msra.mxu0 %v2036
    %2716 = vmatprep.subr.mxu0 %v2041
    %2717 = vmatpush1.msra.mxu0 %v2040
    %2718 = vmatprep.subr.mxu0 %v2045
    %2719 = vmatpush1.msra.mxu0 %v2044
    %2720 = vmatprep.subr.mxu0 %v2049
    %2721 = vmatpush1.msra.mxu0 %v2048
    %2722 = vmatprep.subr.mxu0 %v2053
    %2723 = vmatpush1.msra.mxu0 %v2052
    %2724 = vmatprep.subr.mxu0 %v2057
    %2725 = vmatpush1.msra.mxu0 %v2056
    %2726 = vmatprep.subr.mxu0 %v2061
    %2727 = vmatpush1.msra.mxu0 %v2060
    %2728 = vmatprep.subr.mxu0 %v2065
    %2729 = vmatpush1.msra.mxu0 %v2064
    %2730 = vmatprep.subr.mxu0 0.0
    %2731 = vmatpush1.msra.mxu0 0.0
    %2732 = vmatprep.subr.mxu0 0.0
    %2733 = vmatpush1.msra.mxu0 0.0
    %2734 = vmatprep.subr.mxu0 0.0
    %2735 = vmatpush1.msra.mxu0 0.0
    %2736 = vmatprep.subr.mxu0 0.0
    %2737 = vmatpush1.msra.mxu0 0.0
    %2738 = vmatprep.subr.mxu0 0.0
    %2739 = vmatpush1.msra.mxu0 0.0
    %2740 = vmatprep.subr.mxu0 0.0
    %2741 = vmatpush1.msra.mxu0 0.0
    %2742 = vmatprep.subr.mxu0 0.0
    %2743 = vmatpush1.msra.mxu0 0.0
    %2744 = vmatprep.subr.mxu0 0.0
    %2745 = vmatpush1.msra.mxu0 0.0
    %2746 = vmatprep.subr.mxu0 0.0
    %2747 = vmatpush1.msra.mxu0 0.0
    %2748 = vmatprep.subr.mxu0 0.0
    %2749 = vmatpush1.msra.mxu0 0.0
    %2750 = vmatprep.subr.mxu0 0.0
    %2751 = vmatpush1.msra.mxu0 0.0
    %2752 = vmatprep.subr.mxu0 0.0
    %2753 = vmatpush1.msra.mxu0 0.0
    %2754 = vmatprep.subr.mxu0 0.0
    %2755 = vmatpush1.msra.mxu0 0.0
    %2756 = vmatprep.subr.mxu0 0.0
    %2757 = vmatpush1.msra.mxu0 0.0
    %2758 = vmatprep.subr.mxu0 0.0
    %2759 = vmatpush1.msra.mxu0 0.0
    %2760 = vmatprep.subr.mxu0 0.0
    %2761 = vmatpush1.msra.mxu0 0.0
    %2762 = vmatprep.mubr.f32.mxu0 0.0
    %2763 = vmatmul.mubr.f32.gmra.mrb[0].mxu0 %v2693
    %v2764 = vpop.f32.mrb[0].mxu0
    %v2765 = vadd.f32 0.0, %v2764
    %v2766 = vpop.f32.mrb[0].mxu0
    %v2767 = vadd.f32 0.0, %v2766
    %2768 = vdwg.mxu0
    %2769 = vmatprep.subr.mxu0 %v2007
    %2770 = vmatpush1.msra.mxu0 %v2006
    %2771 = vmatprep.subr.mxu0 %v2011
    %2772 = vmatpush1.msra.mxu0 %v2010
    %2773 = vmatprep.subr.mxu0 %v2015
    %2774 = vmatpush1.msra.mxu0 %v2014
    %2775 = vmatprep.subr.mxu0 %v2019
    %2776 = vmatpush1.msra.mxu0 %v2018
    %2777 = vmatprep.subr.mxu0 %v2023
    %2778 = vmatpush1.msra.mxu0 %v2022
    %2779 = vmatprep.subr.mxu0 %v2027
    %2780 = vmatpush1.msra.mxu0 %v2026
    %2781 = vmatprep.subr.mxu0 %v2031
    %2782 = vmatpush1.msra.mxu0 %v2030
    %2783 = vmatprep.subr.mxu0 %v2035
    %2784 = vmatpush1.msra.mxu0 %v2034
    %2785 = vmatprep.subr.mxu0 %v2039
    %2786 = vmatpush1.msra.mxu0 %v2038
    %2787 = vmatprep.subr.mxu0 %v2043
    %2788 = vmatpush1.msra.mxu0 %v2042
    %2789 = vmatprep.subr.mxu0 %v2047
    %2790 = vmatpush1.msra.mxu0 %v2046
    %2791 = vmatprep.subr.mxu0 %v2051
    %2792 = vmatpush1.msra.mxu0 %v2050
    %2793 = vmatprep.subr.mxu0 %v2055
    %2794 = vmatpush1.msra.mxu0 %v2054
    %2795 = vmatprep.subr.mxu0 %v2059
    %2796 = vmatpush1.msra.mxu0 %v2058
    %2797 = vmatprep.subr.mxu0 %v2063
    %2798 = vmatpush1.msra.mxu0 %v2062
    %2799 = vmatprep.subr.mxu0 %v2067
    %2800 = vmatpush1.msra.mxu0 %v2066
    %2801 = vmatprep.subr.mxu0 0.0
    %2802 = vmatpush1.msra.mxu0 0.0
    %2803 = vmatprep.subr.mxu0 0.0
    %2804 = vmatpush1.msra.mxu0 0.0
    %2805 = vmatprep.subr.mxu0 0.0
    %2806 = vmatpush1.msra.mxu0 0.0
    %2807 = vmatprep.subr.mxu0 0.0
    %2808 = vmatpush1.msra.mxu0 0.0
    %2809 = vmatprep.subr.mxu0 0.0
    %2810 = vmatpush1.msra.mxu0 0.0
    %2811 = vmatprep.subr.mxu0 0.0
    %2812 = vmatpush1.msra.mxu0 0.0
    %2813 = vmatprep.subr.mxu0 0.0
    %2814 = vmatpush1.msra.mxu0 0.0
    %2815 = vmatprep.subr.mxu0 0.0
    %2816 = vmatpush1.msra.mxu0 0.0
    %2817 = vmatprep.subr.mxu0 0.0
    %2818 = vmatpush1.msra.mxu0 0.0
    %2819 = vmatprep.subr.mxu0 0.0
    %2820 = vmatpush1.msra.mxu0 0.0
    %2821 = vmatprep.subr.mxu0 0.0
    %2822 = vmatpush1.msra.mxu0 0.0
    %2823 = vmatprep.subr.mxu0 0.0
    %2824 = vmatpush1.msra.mxu0 0.0
    %2825 = vmatprep.subr.mxu0 0.0
    %2826 = vmatpush1.msra.mxu0 0.0
    %2827 = vmatprep.subr.mxu0 0.0
    %2828 = vmatpush1.msra.mxu0 0.0
    %2829 = vmatprep.subr.mxu0 0.0
    %2830 = vmatpush1.msra.mxu0 0.0
    %2831 = vmatprep.subr.mxu0 0.0
    %2832 = vmatpush1.msra.mxu0 0.0
    %2833 = vmatprep.mubr.f32.mxu0 0.0
    %2834 = vmatmul.mubr.f32.gmra.mrb[0].mxu0 %v2693
    %v2835 = vpop.f32.mrb[0].mxu0
    %v2836 = vadd.f32 0.0, %v2835
    %v2837 = vpop.f32.mrb[0].mxu0
    %v2838 = vadd.f32 0.0, %v2837
    %2839 = vdwg.mxu0
    %v2840 = vadd.f32 %v2694, %v2765
    %v2841 = vadd.f32 %v2695, %v2767
    %v2842 = vadd.f32 %v2696, %v2836
    %v2843 = vadd.f32 %v2697, %v2838
    %v2844 = vtanh.pop %v2840
    %v2845 = vtanh.pop %v2841
    %v2846 = vtanh.pop %v2842
    %v2847 = vtanh.pop %v2843
    %v2848 = vmul.f32 %v2844, %v106
    %v2849 = vmul.f32 %v2845, %v110
    %v2850 = vmul.f32 %v2846, %v114
    %v2851 = vmul.f32 %v2847, %v118
    %v2852 = vadd.f32 %v2848, %v128
    %v2853 = vadd.f32 %v2849, %v132
    %v2854 = vadd.f32 %v2850, %v136
    %v2855 = vadd.f32 %v2851, %v140
    %v2856 = vmul.f32 %v2853, %v2691
    %v2857 = vmul.f32 %v2852, %v2854
    %v2858 = vadd.f32 %v2856, %v2857
    %v2859 = vtanh.pop %v2858
    %v2860 = vmul.f32 %v2855, %v2859
    %v2861 = vld [vmem:[%s1080] sm:$0xff]
    %v2862 = vld [vmem:[%s1080 + $0x8] sm:$0xff]
    %v2863 = vld [vmem:[%s1080 + $0x10] sm:$0xff]
    %v2864 = vld [vmem:[%s1080 + $0x18] sm:$0xff]
    %2865 = vmatprep.subr.mxu0 %v2005
    %2866 = vmatpush1.msra.mxu0 %v2004
    %2867 = vmatprep.subr.mxu0 %v2009
    %2868 = vmatpush1.msra.mxu0 %v2008
    %2869 = vmatprep.subr.mxu0 %v2013
    %2870 = vmatpush1.msra.mxu0 %v2012
    %2871 = vmatprep.subr.mxu0 %v2017
    %2872 = vmatpush1.msra.mxu0 %v2016
    %2873 = vmatprep.subr.mxu0 %v2021
    %2874 = vmatpush1.msra.mxu0 %v2020
    %2875 = vmatprep.subr.mxu0 %v2025
    %2876 = vmatpush1.msra.mxu0 %v2024
    %2877 = vmatprep.subr.mxu0 %v2029
    %2878 = vmatpush1.msra.mxu0 %v2028
    %2879 = vmatprep.subr.mxu0 %v2033
    %2880 = vmatpush1.msra.mxu0 %v2032
    %2881 = vmatprep.subr.mxu0 %v2037
    %2882 = vmatpush1.msra.mxu0 %v2036
    %2883 = vmatprep.subr.mxu0 %v2041
    %2884 = vmatpush1.msra.mxu0 %v2040
    %2885 = vmatprep.subr.mxu0 %v2045
    %2886 = vmatpush1.msra.mxu0 %v2044
    %2887 = vmatprep.subr.mxu0 %v2049
    %2888 = vmatpush1.msra.mxu0 %v2048
    %2889 = vmatprep.subr.mxu0 %v2053
    %2890 = vmatpush1.msra.mxu0 %v2052
    %2891 = vmatprep.subr.mxu0 %v2057
    %2892 = vmatpush1.msra.mxu0 %v2056
    %2893 = vmatprep.subr.mxu0 %v2061
    %2894 = vmatpush1.msra.mxu0 %v2060
    %2895 = vmatprep.subr.mxu0 %v2065
    %2896 = vmatpush1.msra.mxu0 %v2064
    %2897 = vmatprep.subr.mxu0 0.0
    %2898 = vmatpush1.msra.mxu0 0.0
    %2899 = vmatprep.subr.mxu0 0.0
    %2900 = vmatpush1.msra.mxu0 0.0
    %2901 = vmatprep.subr.mxu0 0.0
    %2902 = vmatpush1.msra.mxu0 0.0
    %2903 = vmatprep.subr.mxu0 0.0
    %2904 = vmatpush1.msra.mxu0 0.0
    %2905 = vmatprep.subr.mxu0 0.0
    %2906 = vmatpush1.msra.mxu0 0.0
    %2907 = vmatprep.subr.mxu0 0.0
    %2908 = vmatpush1.msra.mxu0 0.0
    %2909 = vmatprep.subr.mxu0 0.0
    %2910 = vmatpush1.msra.mxu0 0.0
    %2911 = vmatprep.subr.mxu0 0.0
    %2912 = vmatpush1.msra.mxu0 0.0
    %2913 = vmatprep.subr.mxu0 0.0
    %2914 = vmatpush1.msra.mxu0 0.0
    %2915 = vmatprep.subr.mxu0 0.0
    %2916 = vmatpush1.msra.mxu0 0.0
    %2917 = vmatprep.subr.mxu0 0.0
    %2918 = vmatpush1.msra.mxu0 0.0
    %2919 = vmatprep.subr.mxu0 0.0
    %2920 = vmatpush1.msra.mxu0 0.0
    %2921 = vmatprep.subr.mxu0 0.0
    %2922 = vmatpush1.msra.mxu0 0.0
    %2923 = vmatprep.subr.mxu0 0.0
    %2924 = vmatpush1.msra.mxu0 0.0
    %2925 = vmatprep.subr.mxu0 0.0
    %2926 = vmatpush1.msra.mxu0 0.0
    %2927 = vmatprep.subr.mxu0 0.0
    %2928 = vmatpush1.msra.mxu0 0.0
    %2929 = vmatprep.mubr.f32.mxu0 0.0
    %2930 = vmatmul.mubr.f32.gmra.mrb[0].mxu0 %v2860
    %v2931 = vpop.f32.mrb[0].mxu0
    %v2932 = vadd.f32 0.0, %v2931
    %v2933 = vpop.f32.mrb[0].mxu0
    %v2934 = vadd.f32 0.0, %v2933
    %2935 = vdwg.mxu0
    %2936 = vmatprep.subr.mxu0 %v2007
    %2937 = vmatpush1.msra.mxu0 %v2006
    %2938 = vmatprep.subr.mxu0 %v2011
    %2939 = vmatpush1.msra.mxu0 %v2010
    %2940 = vmatprep.subr.mxu0 %v2015
    %2941 = vmatpush1.msra.mxu0 %v2014
    %2942 = vmatprep.subr.mxu0 %v2019
    %2943 = vmatpush1.msra.mxu0 %v2018
    %2944 = vmatprep.subr.mxu0 %v2023
    %2945 = vmatpush1.msra.mxu0 %v2022
    %2946 = vmatprep.subr.mxu0 %v2027
    %2947 = vmatpush1.msra.mxu0 %v2026
    %2948 = vmatprep.subr.mxu0 %v2031
    %2949 = vmatpush1.msra.mxu0 %v2030
    %2950 = vmatprep.subr.mxu0 %v2035
    %2951 = vmatpush1.msra.mxu0 %v2034
    %2952 = vmatprep.subr.mxu0 %v2039
    %2953 = vmatpush1.msra.mxu0 %v2038
    %2954 = vmatprep.subr.mxu0 %v2043
    %2955 = vmatpush1.msra.mxu0 %v2042
    %2956 = vmatprep.subr.mxu0 %v2047
    %2957 = vmatpush1.msra.mxu0 %v2046
    %2958 = vmatprep.subr.mxu0 %v2051
    %2959 = vmatpush1.msra.mxu0 %v2050
    %2960 = vmatprep.subr.mxu0 %v2055
    %2961 = vmatpush1.msra.mxu0 %v2054
    %2962 = vmatprep.subr.mxu0 %v2059
    %2963 = vmatpush1.msra.mxu0 %v2058
    %2964 = vmatprep.subr.mxu0 %v2063
    %2965 = vmatpush1.msra.mxu0 %v2062
    %2966 = vmatprep.subr.mxu0 %v2067
    %2967 = vmatpush1.msra.mxu0 %v2066
    %2968 = vmatprep.subr.mxu0 0.0
    %2969 = vmatpush1.msra.mxu0 0.0
    %2970 = vmatprep.subr.mxu0 0.0
    %2971 = vmatpush1.msra.mxu0 0.0
    %2972 = vmatprep.subr.mxu0 0.0
    %2973 = vmatpush1.msra.mxu0 0.0
    %2974 = vmatprep.subr.mxu0 0.0
    %2975 = vmatpush1.msra.mxu0 0.0
    %2976 = vmatprep.subr.mxu0 0.0
    %2977 = vmatpush1.msra.mxu0 0.0
    %2978 = vmatprep.subr.mxu0 0.0
    %2979 = vmatpush1.msra.mxu0 0.0
    %2980 = vmatprep.subr.mxu0 0.0
    %2981 = vmatpush1.msra.mxu0 0.0
    %2982 = vmatprep.subr.mxu0 0.0
    %2983 = vmatpush1.msra.mxu0 0.0
    %2984 = vmatprep.subr.mxu0 0.0
    %2985 = vmatpush1.msra.mxu0 0.0
    %2986 = vmatprep.subr.mxu0 0.0
    %2987 = vmatpush1.msra.mxu0 0.0
    %2988 = vmatprep.subr.mxu0 0.0
    %2989 = vmatpush1.msra.mxu0 0.0
    %2990 = vmatprep.subr.mxu0 0.0
    %2991 = vmatpush1.msra.mxu0 0.0
    %2992 = vmatprep.subr.mxu0 0.0
    %2993 = vmatpush1.msra.mxu0 0.0
    %2994 = vmatprep.subr.mxu0 0.0
    %2995 = vmatpush1.msra.mxu0 0.0
    %2996 = vmatprep.subr.mxu0 0.0
    %2997 = vmatpush1.msra.mxu0 0.0
    %2998 = vmatprep.subr.mxu0 0.0
    %2999 = vmatpush1.msra.mxu0 0.0
    %3000 = vmatprep.mubr.f32.mxu0 0.0
    %3001 = vmatmul.mubr.f32.gmra.mrb[0].mxu0 %v2860
    %v3002 = vpop.f32.mrb[0].mxu0
    %v3003 = vadd.f32 0.0, %v3002
    %v3004 = vpop.f32.mrb[0].mxu0
    %v3005 = vadd.f32 0.0, %v3004
    %3006 = vdwg.mxu0
    %v3007 = vadd.f32 %v2861, %v2932
    %v3008 = vadd.f32 %v2862, %v2934
    %v3009 = vadd.f32 %v2863, %v3003
    %v3010 = vadd.f32 %v2864, %v3005
    %v3011 = vtanh.pop %v3007
    %v3012 = vtanh.pop %v3008
    %v3013 = vtanh.pop %v3009
    %v3014 = vtanh.pop %v3010
    %v3015 = vmul.f32 %v3011, %v106
    %v3016 = vmul.f32 %v3012, %v110
    %v3017 = vmul.f32 %v3013, %v114
    %v3018 = vmul.f32 %v3014, %v118
    %v3019 = vadd.f32 %v3015, %v128
    %v3020 = vadd.f32 %v3016, %v132
    %v3021 = vadd.f32 %v3017, %v136
    %v3022 = vadd.f32 %v3018, %v140
    %v3023 = vmul.f32 %v3020, %v2858
    %v3024 = vmul.f32 %v3019, %v3021
    %v3025 = vadd.f32 %v3023, %v3024
    %v3026 = vtanh.pop %v3025
    %v3027 = vmul.f32 %v3022, %v3026
    %v3028 = vld [vmem:[%s1252] sm:$0xff]
    %v3029 = vld [vmem:[%s1252 + $0x8] sm:$0xff]
    %v3030 = vld [vmem:[%s1252 + $0x10] sm:$0xff]
    %v3031 = vld [vmem:[%s1252 + $0x18] sm:$0xff]
    %3032 = vmatprep.subr.mxu0 %v2005
    %3033 = vmatpush1.msra.mxu0 %v2004
    %3034 = vmatprep.subr.mxu0 %v2009
    %3035 = vmatpush1.msra.mxu0 %v2008
    %3036 = vmatprep.subr.mxu0 %v2013
    %3037 = vmatpush1.msra.mxu0 %v2012
    %3038 = vmatprep.subr.mxu0 %v2017
    %3039 = vmatpush1.msra.mxu0 %v2016
    %3040 = vmatprep.subr.mxu0 %v2021
    %3041 = vmatpush1.msra.mxu0 %v2020
    %3042 = vmatprep.subr.mxu0 %v2025
    %3043 = vmatpush1.msra.mxu0 %v2024
    %3044 = vmatprep.subr.mxu0 %v2029
    %3045 = vmatpush1.msra.mxu0 %v2028
    %3046 = vmatprep.subr.mxu0 %v2033
    %3047 = vmatpush1.msra.mxu0 %v2032
    %3048 = vmatprep.subr.mxu0 %v2037
    %3049 = vmatpush1.msra.mxu0 %v2036
    %3050 = vmatprep.subr.mxu0 %v2041
    %3051 = vmatpush1.msra.mxu0 %v2040
    %3052 = vmatprep.subr.mxu0 %v2045
    %3053 = vmatpush1.msra.mxu0 %v2044
    %3054 = vmatprep.subr.mxu0 %v2049
    %3055 = vmatpush1.msra.mxu0 %v2048
    %3056 = vmatprep.subr.mxu0 %v2053
    %3057 = vmatpush1.msra.mxu0 %v2052
    %3058 = vmatprep.subr.mxu0 %v2057
    %3059 = vmatpush1.msra.mxu0 %v2056
    %3060 = vmatprep.subr.mxu0 %v2061
    %3061 = vmatpush1.msra.mxu0 %v2060
    %3062 = vmatprep.subr.mxu0 %v2065
    %3063 = vmatpush1.msra.mxu0 %v2064
    %3064 = vmatprep.subr.mxu0 0.0
    %3065 = vmatpush1.msra.mxu0 0.0
    %3066 = vmatprep.subr.mxu0 0.0
    %3067 = vmatpush1.msra.mxu0 0.0
    %3068 = vmatprep.subr.mxu0 0.0
    %3069 = vmatpush1.msra.mxu0 0.0
    %3070 = vmatprep.subr.mxu0 0.0
    %3071 = vmatpush1.msra.mxu0 0.0
    %3072 = vmatprep.subr.mxu0 0.0
    %3073 = vmatpush1.msra.mxu0 0.0
    %3074 = vmatprep.subr.mxu0 0.0
    %3075 = vmatpush1.msra.mxu0 0.0
    %3076 = vmatprep.subr.mxu0 0.0
    %3077 = vmatpush1.msra.mxu0 0.0
    %3078 = vmatprep.subr.mxu0 0.0
    %3079 = vmatpush1.msra.mxu0 0.0
    %3080 = vmatprep.subr.mxu0 0.0
    %3081 = vmatpush1.msra.mxu0 0.0
    %3082 = vmatprep.subr.mxu0 0.0
    %3083 = vmatpush1.msra.mxu0 0.0
    %3084 = vmatprep.subr.mxu0 0.0
    %3085 = vmatpush1.msra.mxu0 0.0
    %3086 = vmatprep.subr.mxu0 0.0
    %3087 = vmatpush1.msra.mxu0 0.0
    %3088 = vmatprep.subr.mxu0 0.0
    %3089 = vmatpush1.msra.mxu0 0.0
    %3090 = vmatprep.subr.mxu0 0.0
    %3091 = vmatpush1.msra.mxu0 0.0
    %3092 = vmatprep.subr.mxu0 0.0
    %3093 = vmatpush1.msra.mxu0 0.0
    %3094 = vmatprep.subr.mxu0 0.0
    %3095 = vmatpush1.msra.mxu0 0.0
    %3096 = vmatprep.mubr.f32.mxu0 0.0
    %3097 = vmatmul.mubr.f32.gmra.mrb[0].mxu0 %v3027
    %v3098 = vpop.f32.mrb[0].mxu0
    %v3099 = vadd.f32 0.0, %v3098
    %v3100 = vpop.f32.mrb[0].mxu0
    %v3101 = vadd.f32 0.0, %v3100
    %3102 = vdwg.mxu0
    %3103 = vmatprep.subr.mxu0 %v2007
    %3104 = vmatpush1.msra.mxu0 %v2006
    %3105 = vmatprep.subr.mxu0 %v2011
    %3106 = vmatpush1.msra.mxu0 %v2010
    %3107 = vmatprep.subr.mxu0 %v2015
    %3108 = vmatpush1.msra.mxu0 %v2014
    %3109 = vmatprep.subr.mxu0 %v2019
    %3110 = vmatpush1.msra.mxu0 %v2018
    %3111 = vmatprep.subr.mxu0 %v2023
    %3112 = vmatpush1.msra.mxu0 %v2022
    %3113 = vmatprep.subr.mxu0 %v2027
    %3114 = vmatpush1.msra.mxu0 %v2026
    %3115 = vmatprep.subr.mxu0 %v2031
    %3116 = vmatpush1.msra.mxu0 %v2030
    %3117 = vmatprep.subr.mxu0 %v2035
    %3118 = vmatpush1.msra.mxu0 %v2034
    %3119 = vmatprep.subr.mxu0 %v2039
    %3120 = vmatpush1.msra.mxu0 %v2038
    %3121 = vmatprep.subr.mxu0 %v2043
    %3122 = vmatpush1.msra.mxu0 %v2042
    %3123 = vmatprep.subr.mxu0 %v2047
    %3124 = vmatpush1.msra.mxu0 %v2046
    %3125 = vmatprep.subr.mxu0 %v2051
    %3126 = vmatpush1.msra.mxu0 %v2050
    %3127 = vmatprep.subr.mxu0 %v2055
    %3128 = vmatpush1.msra.mxu0 %v2054
    %3129 = vmatprep.subr.mxu0 %v2059
    %3130 = vmatpush1.msra.mxu0 %v2058
    %3131 = vmatprep.subr.mxu0 %v2063
    %3132 = vmatpush1.msra.mxu0 %v2062
    %3133 = vmatprep.subr.mxu0 %v2067
    %3134 = vmatpush1.msra.mxu0 %v2066
    %3135 = vmatprep.subr.mxu0 0.0
    %3136 = vmatpush1.msra.mxu0 0.0
    %3137 = vmatprep.subr.mxu0 0.0
    %3138 = vmatpush1.msra.mxu0 0.0
    %3139 = vmatprep.subr.mxu0 0.0
    %3140 = vmatpush1.msra.mxu0 0.0
    %3141 = vmatprep.subr.mxu0 0.0
    %3142 = vmatpush1.msra.mxu0 0.0
    %3143 = vmatprep.subr.mxu0 0.0
    %3144 = vmatpush1.msra.mxu0 0.0
    %3145 = vmatprep.subr.mxu0 0.0
    %3146 = vmatpush1.msra.mxu0 0.0
    %3147 = vmatprep.subr.mxu0 0.0
    %3148 = vmatpush1.msra.mxu0 0.0
    %3149 = vmatprep.subr.mxu0 0.0
    %3150 = vmatpush1.msra.mxu0 0.0
    %3151 = vmatprep.subr.mxu0 0.0
    %3152 = vmatpush1.msra.mxu0 0.0
    %3153 = vmatprep.subr.mxu0 0.0
    %3154 = vmatpush1.msra.mxu0 0.0
    %3155 = vmatprep.subr.mxu0 0.0
    %3156 = vmatpush1.msra.mxu0 0.0
    %3157 = vmatprep.subr.mxu0 0.0
    %3158 = vmatpush1.msra.mxu0 0.0
    %3159 = vmatprep.subr.mxu0 0.0
    %3160 = vmatpush1.msra.mxu0 0.0
    %3161 = vmatprep.subr.mxu0 0.0
    %3162 = vmatpush1.msra.mxu0 0.0
    %3163 = vmatprep.subr.mxu0 0.0
    %3164 = vmatpush1.msra.mxu0 0.0
    %3165 = vmatprep.subr.mxu0 0.0
    %3166 = vmatpush1.msra.mxu0 0.0
    %3167 = vmatprep.mubr.f32.mxu0 0.0
    %3168 = vmatmul.mubr.f32.gmra.mrb[0].mxu0 %v3027
    %v3169 = vpop.f32.mrb[0].mxu0
    %v3170 = vadd.f32 0.0, %v3169
    %v3171 = vpop.f32.mrb[0].mxu0
    %v3172 = vadd.f32 0.0, %v3171
    %3173 = vdwg.mxu0
    %v3174 = vadd.f32 %v3028, %v3099
    %v3175 = vadd.f32 %v3029, %v3101
    %v3176 = vadd.f32 %v3030, %v3170
    %v3177 = vadd.f32 %v3031, %v3172
    %v3178 = vtanh.pop %v3174
    %v3179 = vtanh.pop %v3175
    %v3180 = vtanh.pop %v3176
    %v3181 = vtanh.pop %v3177
    %v3182 = vmul.f32 %v3178, %v106
    %v3183 = vmul.f32 %v3179, %v110
    %v3184 = vmul.f32 %v3180, %v114
    %v3185 = vmul.f32 %v3181, %v118
    %v3186 = vadd.f32 %v3182, %v128
    %v3187 = vadd.f32 %v3183, %v132
    %v3188 = vadd.f32 %v3184, %v136
    %v3189 = vadd.f32 %v3185, %v140
    %v3190 = vmul.f32 %v3187, %v3025
    %v3191 = vmul.f32 %v3186, %v3188
    %v3192 = vadd.f32 %v3190, %v3191
    %v3193 = vtanh.pop %v3192
    %v3194 = vmul.f32 %v3189, %v3193
    %v3195 = vld [vmem:[%s1424] sm:$0xff]
    %v3196 = vld [vmem:[%s1424 + $0x8] sm:$0xff]
    %v3197 = vld [vmem:[%s1424 + $0x10] sm:$0xff]
    %v3198 = vld [vmem:[%s1424 + $0x18] sm:$0xff]
    %3199 = vmatprep.subr.mxu0 %v2005
    %3200 = vmatpush1.msra.mxu0 %v2004
    %3201 = vmatprep.subr.mxu0 %v2009
    %3202 = vmatpush1.msra.mxu0 %v2008
    %3203 = vmatprep.subr.mxu0 %v2013
    %3204 = vmatpush1.msra.mxu0 %v2012
    %3205 = vmatprep.subr.mxu0 %v2017
    %3206 = vmatpush1.msra.mxu0 %v2016
    %3207 = vmatprep.subr.mxu0 %v2021
    %3208 = vmatpush1.msra.mxu0 %v2020
    %3209 = vmatprep.subr.mxu0 %v2025
    %3210 = vmatpush1.msra.mxu0 %v2024
    %3211 = vmatprep.subr.mxu0 %v2029
    %3212 = vmatpush1.msra.mxu0 %v2028
    %3213 = vmatprep.subr.mxu0 %v2033
    %3214 = vmatpush1.msra.mxu0 %v2032
    %3215 = vmatprep.subr.mxu0 %v2037
    %3216 = vmatpush1.msra.mxu0 %v2036
    %3217 = vmatprep.subr.mxu0 %v2041
    %3218 = vmatpush1.msra.mxu0 %v2040
    %3219 = vmatprep.subr.mxu0 %v2045
    %3220 = vmatpush1.msra.mxu0 %v2044
    %3221 = vmatprep.subr.mxu0 %v2049
    %3222 = vmatpush1.msra.mxu0 %v2048
    %3223 = vmatprep.subr.mxu0 %v2053
    %3224 = vmatpush1.msra.mxu0 %v2052
    %3225 = vmatprep.subr.mxu0 %v2057
    %3226 = vmatpush1.msra.mxu0 %v2056
    %3227 = vmatprep.subr.mxu0 %v2061
    %3228 = vmatpush1.msra.mxu0 %v2060
    %3229 = vmatprep.subr.mxu0 %v2065
    %3230 = vmatpush1.msra.mxu0 %v2064
    %3231 = vmatprep.subr.mxu0 0.0
    %3232 = vmatpush1.msra.mxu0 0.0
    %3233 = vmatprep.subr.mxu0 0.0
    %3234 = vmatpush1.msra.mxu0 0.0
    %3235 = vmatprep.subr.mxu0 0.0
    %3236 = vmatpush1.msra.mxu0 0.0
    %3237 = vmatprep.subr.mxu0 0.0
    %3238 = vmatpush1.msra.mxu0 0.0
    %3239 = vmatprep.subr.mxu0 0.0
    %3240 = vmatpush1.msra.mxu0 0.0
    %3241 = vmatprep.subr.mxu0 0.0
    %3242 = vmatpush1.msra.mxu0 0.0
    %3243 = vmatprep.subr.mxu0 0.0
    %3244 = vmatpush1.msra.mxu0 0.0
    %3245 = vmatprep.subr.mxu0 0.0
    %3246 = vmatpush1.msra.mxu0 0.0
    %3247 = vmatprep.subr.mxu0 0.0
    %3248 = vmatpush1.msra.mxu0 0.0
    %3249 = vmatprep.subr.mxu0 0.0
    %3250 = vmatpush1.msra.mxu0 0.0
    %3251 = vmatprep.subr.mxu0 0.0
    %3252 = vmatpush1.msra.mxu0 0.0
    %3253 = vmatprep.subr.mxu0 0.0
    %3254 = vmatpush1.msra.mxu0 0.0
    %3255 = vmatprep.subr.mxu0 0.0
    %3256 = vmatpush1.msra.mxu0 0.0
    %3257 = vmatprep.subr.mxu0 0.0
    %3258 = vmatpush1.msra.mxu0 0.0
    %3259 = vmatprep.subr.mxu0 0.0
    %3260 = vmatpush1.msra.mxu0 0.0
    %3261 = vmatprep.subr.mxu0 0.0
    %3262 = vmatpush1.msra.mxu0 0.0
    %3263 = vmatprep.mubr.f32.mxu0 0.0
    %3264 = vmatmul.mubr.f32.gmra.mrb[0].mxu0 %v3194
    %v3265 = vpop.f32.mrb[0].mxu0
    %v3266 = vadd.f32 0.0, %v3265
    %v3267 = vpop.f32.mrb[0].mxu0
    %v3268 = vadd.f32 0.0, %v3267
    %3269 = vdwg.mxu0
    %3270 = vmatprep.subr.mxu0 %v2007
    %3271 = vmatpush1.msra.mxu0 %v2006
    %3272 = vmatprep.subr.mxu0 %v2011
    %3273 = vmatpush1.msra.mxu0 %v2010
    %3274 = vmatprep.subr.mxu0 %v2015
    %3275 = vmatpush1.msra.mxu0 %v2014
    %3276 = vmatprep.subr.mxu0 %v2019
    %3277 = vmatpush1.msra.mxu0 %v2018
    %3278 = vmatprep.subr.mxu0 %v2023
    %3279 = vmatpush1.msra.mxu0 %v2022
    %3280 = vmatprep.subr.mxu0 %v2027
    %3281 = vmatpush1.msra.mxu0 %v2026
    %3282 = vmatprep.subr.mxu0 %v2031
    %3283 = vmatpush1.msra.mxu0 %v2030
    %3284 = vmatprep.subr.mxu0 %v2035
    %3285 = vmatpush1.msra.mxu0 %v2034
    %3286 = vmatprep.subr.mxu0 %v2039
    %3287 = vmatpush1.msra.mxu0 %v2038
    %3288 = vmatprep.subr.mxu0 %v2043
    %3289 = vmatpush1.msra.mxu0 %v2042
    %3290 = vmatprep.subr.mxu0 %v2047
    %3291 = vmatpush1.msra.mxu0 %v2046
    %3292 = vmatprep.subr.mxu0 %v2051
    %3293 = vmatpush1.msra.mxu0 %v2050
    %3294 = vmatprep.subr.mxu0 %v2055
    %3295 = vmatpush1.msra.mxu0 %v2054
    %3296 = vmatprep.subr.mxu0 %v2059
    %3297 = vmatpush1.msra.mxu0 %v2058
    %3298 = vmatprep.subr.mxu0 %v2063
    %3299 = vmatpush1.msra.mxu0 %v2062
    %3300 = vmatprep.subr.mxu0 %v2067
    %3301 = vmatpush1.msra.mxu0 %v2066
    %3302 = vmatprep.subr.mxu0 0.0
    %3303 = vmatpush1.msra.mxu0 0.0
    %3304 = vmatprep.subr.mxu0 0.0
    %3305 = vmatpush1.msra.mxu0 0.0
    %3306 = vmatprep.subr.mxu0 0.0
    %3307 = vmatpush1.msra.mxu0 0.0
    %3308 = vmatprep.subr.mxu0 0.0
    %3309 = vmatpush1.msra.mxu0 0.0
    %3310 = vmatprep.subr.mxu0 0.0
    %3311 = vmatpush1.msra.mxu0 0.0
    %3312 = vmatprep.subr.mxu0 0.0
    %3313 = vmatpush1.msra.mxu0 0.0
    %3314 = vmatprep.subr.mxu0 0.0
    %3315 = vmatpush1.msra.mxu0 0.0
    %3316 = vmatprep.subr.mxu0 0.0
    %3317 = vmatpush1.msra.mxu0 0.0
    %3318 = vmatprep.subr.mxu0 0.0
    %3319 = vmatpush1.msra.mxu0 0.0
    %3320 = vmatprep.subr.mxu0 0.0
    %3321 = vmatpush1.msra.mxu0 0.0
    %3322 = vmatprep.subr.mxu0 0.0
    %3323 = vmatpush1.msra.mxu0 0.0
    %3324 = vmatprep.subr.mxu0 0.0
    %3325 = vmatpush1.msra.mxu0 0.0
    %3326 = vmatprep.subr.mxu0 0.0
    %3327 = vmatpush1.msra.mxu0 0.0
    %3328 = vmatprep.subr.mxu0 0.0
    %3329 = vmatpush1.msra.mxu0 0.0
    %3330 = vmatprep.subr.mxu0 0.0
    %3331 = vmatpush1.msra.mxu0 0.0
    %3332 = vmatprep.subr.mxu0 0.0
    %3333 = vmatpush1.msra.mxu0 0.0
    %3334 = vmatprep.mubr.f32.mxu0 0.0
    %3335 = vmatmul.mubr.f32.gmra.mrb[0].mxu0 %v3194
    %v3336 = vpop.f32.mrb[0].mxu0
    %v3337 = vadd.f32 0.0, %v3336
    %v3338 = vpop.f32.mrb[0].mxu0
    %v3339 = vadd.f32 0.0, %v3338
    %3340 = vdwg.mxu0
    %v3341 = vadd.f32 %v3195, %v3266
    %v3342 = vadd.f32 %v3196, %v3268
    %v3343 = vadd.f32 %v3197, %v3337
    %v3344 = vadd.f32 %v3198, %v3339
    %v3345 = vtanh.pop %v3341
    %v3346 = vtanh.pop %v3342
    %v3347 = vtanh.pop %v3343
    %v3348 = vtanh.pop %v3344
    %v3349 = vmul.f32 %v3345, %v106
    %v3350 = vmul.f32 %v3346, %v110
    %v3351 = vmul.f32 %v3347, %v114
    %v3352 = vmul.f32 %v3348, %v118
    %v3353 = vadd.f32 %v3349, %v128
    %v3354 = vadd.f32 %v3350, %v132
    %v3355 = vadd.f32 %v3351, %v136
    %v3356 = vadd.f32 %v3352, %v140
    %v3357 = vmul.f32 %v3354, %v3192
    %v3358 = vmul.f32 %v3353, %v3355
    %v3359 = vadd.f32 %v3357, %v3358
    %v3360 = vtanh.pop %v3359
    %v3361 = vmul.f32 %v3356, %v3360
    %v3362 = vld [vmem:[%s1596] sm:$0xff]
    %v3363 = vld [vmem:[%s1596 + $0x8] sm:$0xff]
    %v3364 = vld [vmem:[%s1596 + $0x10] sm:$0xff]
    %v3365 = vld [vmem:[%s1596 + $0x18] sm:$0xff]
    %3366 = vmatprep.subr.mxu0 %v2005
    %3367 = vmatpush1.msra.mxu0 %v2004
    %3368 = vmatprep.subr.mxu0 %v2009
    %3369 = vmatpush1.msra.mxu0 %v2008
    %3370 = vmatprep.subr.mxu0 %v2013
    %3371 = vmatpush1.msra.mxu0 %v2012
    %3372 = vmatprep.subr.mxu0 %v2017
    %3373 = vmatpush1.msra.mxu0 %v2016
    %3374 = vmatprep.subr.mxu0 %v2021
    %3375 = vmatpush1.msra.mxu0 %v2020
    %3376 = vmatprep.subr.mxu0 %v2025
    %3377 = vmatpush1.msra.mxu0 %v2024
    %3378 = vmatprep.subr.mxu0 %v2029
    %3379 = vmatpush1.msra.mxu0 %v2028
    %3380 = vmatprep.subr.mxu0 %v2033
    %3381 = vmatpush1.msra.mxu0 %v2032
    %3382 = vmatprep.subr.mxu0 %v2037
    %3383 = vmatpush1.msra.mxu0 %v2036
    %3384 = vmatprep.subr.mxu0 %v2041
    %3385 = vmatpush1.msra.mxu0 %v2040
    %3386 = vmatprep.subr.mxu0 %v2045
    %3387 = vmatpush1.msra.mxu0 %v2044
    %3388 = vmatprep.subr.mxu0 %v2049
    %3389 = vmatpush1.msra.mxu0 %v2048
    %3390 = vmatprep.subr.mxu0 %v2053
    %3391 = vmatpush1.msra.mxu0 %v2052
    %3392 = vmatprep.subr.mxu0 %v2057
    %3393 = vmatpush1.msra.mxu0 %v2056
    %3394 = vmatprep.subr.mxu0 %v2061
    %3395 = vmatpush1.msra.mxu0 %v2060
    %3396 = vmatprep.subr.mxu0 %v2065
    %3397 = vmatpush1.msra.mxu0 %v2064
    %3398 = vmatprep.subr.mxu0 0.0
    %3399 = vmatpush1.msra.mxu0 0.0
    %3400 = vmatprep.subr.mxu0 0.0
    %3401 = vmatpush1.msra.mxu0 0.0
    %3402 = vmatprep.subr.mxu0 0.0
    %3403 = vmatpush1.msra.mxu0 0.0
    %3404 = vmatprep.subr.mxu0 0.0
    %3405 = vmatpush1.msra.mxu0 0.0
    %3406 = vmatprep.subr.mxu0 0.0
    %3407 = vmatpush1.msra.mxu0 0.0
    %3408 = vmatprep.subr.mxu0 0.0
    %3409 = vmatpush1.msra.mxu0 0.0
    %3410 = vmatprep.subr.mxu0 0.0
    %3411 = vmatpush1.msra.mxu0 0.0
    %3412 = vmatprep.subr.mxu0 0.0
    %3413 = vmatpush1.msra.mxu0 0.0
    %3414 = vmatprep.subr.mxu0 0.0
    %3415 = vmatpush1.msra.mxu0 0.0
    %3416 = vmatprep.subr.mxu0 0.0
    %3417 = vmatpush1.msra.mxu0 0.0
    %3418 = vmatprep.subr.mxu0 0.0
    %3419 = vmatpush1.msra.mxu0 0.0
    %3420 = vmatprep.subr.mxu0 0.0
    %3421 = vmatpush1.msra.mxu0 0.0
    %3422 = vmatprep.subr.mxu0 0.0
    %3423 = vmatpush1.msra.mxu0 0.0
    %3424 = vmatprep.subr.mxu0 0.0
    %3425 = vmatpush1.msra.mxu0 0.0
    %3426 = vmatprep.subr.mxu0 0.0
    %3427 = vmatpush1.msra.mxu0 0.0
    %3428 = vmatprep.subr.mxu0 0.0
    %3429 = vmatpush1.msra.mxu0 0.0
    %3430 = vmatprep.mubr.f32.mxu0 0.0
    %3431 = vmatmul.mubr.f32.gmra.mrb[0].mxu0 %v3361
    %v3432 = vpop.f32.mrb[0].mxu0
    %v3433 = vadd.f32 0.0, %v3432
    %v3434 = vpop.f32.mrb[0].mxu0
    %v3435 = vadd.f32 0.0, %v3434
    %3436 = vdwg.mxu0
    %3437 = vmatprep.subr.mxu0 %v2007
    %3438 = vmatpush1.msra.mxu0 %v2006
    %3439 = vmatprep.subr.mxu0 %v2011
    %3440 = vmatpush1.msra.mxu0 %v2010
    %3441 = vmatprep.subr.mxu0 %v2015
    %3442 = vmatpush1.msra.mxu0 %v2014
    %3443 = vmatprep.subr.mxu0 %v2019
    %3444 = vmatpush1.msra.mxu0 %v2018
    %3445 = vmatprep.subr.mxu0 %v2023
    %3446 = vmatpush1.msra.mxu0 %v2022
    %3447 = vmatprep.subr.mxu0 %v2027
    %3448 = vmatpush1.msra.mxu0 %v2026
    %3449 = vmatprep.subr.mxu0 %v2031
    %3450 = vmatpush1.msra.mxu0 %v2030
    %3451 = vmatprep.subr.mxu0 %v2035
    %3452 = vmatpush1.msra.mxu0 %v2034
    %3453 = vmatprep.subr.mxu0 %v2039
    %3454 = vmatpush1.msra.mxu0 %v2038
    %3455 = vmatprep.subr.mxu0 %v2043
    %3456 = vmatpush1.msra.mxu0 %v2042
    %3457 = vmatprep.subr.mxu0 %v2047
    %3458 = vmatpush1.msra.mxu0 %v2046
    %3459 = vmatprep.subr.mxu0 %v2051
    %3460 = vmatpush1.msra.mxu0 %v2050
    %3461 = vmatprep.subr.mxu0 %v2055
    %3462 = vmatpush1.msra.mxu0 %v2054
    %3463 = vmatprep.subr.mxu0 %v2059
    %3464 = vmatpush1.msra.mxu0 %v2058
    %3465 = vmatprep.subr.mxu0 %v2063
    %3466 = vmatpush1.msra.mxu0 %v2062
    %3467 = vmatprep.subr.mxu0 %v2067
    %3468 = vmatpush1.msra.mxu0 %v2066
    %3469 = vmatprep.subr.mxu0 0.0
    %3470 = vmatpush1.msra.mxu0 0.0
    %3471 = vmatprep.subr.mxu0 0.0
    %3472 = vmatpush1.msra.mxu0 0.0
    %3473 = vmatprep.subr.mxu0 0.0
    %3474 = vmatpush1.msra.mxu0 0.0
    %3475 = vmatprep.subr.mxu0 0.0
    %3476 = vmatpush1.msra.mxu0 0.0
    %3477 = vmatprep.subr.mxu0 0.0
    %3478 = vmatpush1.msra.mxu0 0.0
    %3479 = vmatprep.subr.mxu0 0.0
    %3480 = vmatpush1.msra.mxu0 0.0
    %3481 = vmatprep.subr.mxu0 0.0
    %3482 = vmatpush1.msra.mxu0 0.0
    %3483 = vmatprep.subr.mxu0 0.0
    %3484 = vmatpush1.msra.mxu0 0.0
    %3485 = vmatprep.subr.mxu0 0.0
    %3486 = vmatpush1.msra.mxu0 0.0
    %3487 = vmatprep.subr.mxu0 0.0
    %3488 = vmatpush1.msra.mxu0 0.0
    %3489 = vmatprep.subr.mxu0 0.0
    %3490 = vmatpush1.msra.mxu0 0.0
    %3491 = vmatprep.subr.mxu0 0.0
    %3492 = vmatpush1.msra.mxu0 0.0
    %3493 = vmatprep.subr.mxu0 0.0
    %3494 = vmatpush1.msra.mxu0 0.0
    %3495 = vmatprep.subr.mxu0 0.0
    %3496 = vmatpush1.msra.mxu0 0.0
    %3497 = vmatprep.subr.mxu0 0.0
    %3498 = vmatpush1.msra.mxu0 0.0
    %3499 = vmatprep.subr.mxu0 0.0
    %3500 = vmatpush1.msra.mxu0 0.0
    %3501 = vmatprep.mubr.f32.mxu0 0.0
    %3502 = vmatmul.mubr.f32.gmra.mrb[0].mxu0 %v3361
    %v3503 = vpop.f32.mrb[0].mxu0
    %v3504 = vadd.f32 0.0, %v3503
    %v3505 = vpop.f32.mrb[0].mxu0
    %v3506 = vadd.f32 0.0, %v3505
    %3507 = vdwg.mxu0
    %v3508 = vadd.f32 %v3362, %v3433
    %v3509 = vadd.f32 %v3363, %v3435
    %v3510 = vadd.f32 %v3364, %v3504
    %v3511 = vadd.f32 %v3365, %v3506
    %v3512 = vtanh.pop %v3508
    %v3513 = vtanh.pop %v3509
    %v3514 = vtanh.pop %v3510
    %v3515 = vtanh.pop %v3511
    %v3516 = vmul.f32 %v3512, %v106
    %v3517 = vmul.f32 %v3513, %v110
    %v3518 = vmul.f32 %v3514, %v114
    %v3519 = vmul.f32 %v3515, %v118
    %v3520 = vadd.f32 %v3516, %v128
    %v3521 = vadd.f32 %v3517, %v132
    %v3522 = vadd.f32 %v3518, %v136
    %v3523 = vadd.f32 %v3519, %v140
    %v3524 = vmul.f32 %v3521, %v3359
    %v3525 = vmul.f32 %v3520, %v3522
    %v3526 = vadd.f32 %v3524, %v3525
    %v3527 = vtanh.pop %v3526
    %v3528 = vmul.f32 %v3523, %v3527
    %v3529 = vld [vmem:[%s1768] sm:$0xff]
    %v3530 = vld [vmem:[%s1768 + $0x8] sm:$0xff]
    %v3531 = vld [vmem:[%s1768 + $0x10] sm:$0xff]
    %v3532 = vld [vmem:[%s1768 + $0x18] sm:$0xff]
    %3533 = vmatprep.subr.mxu0 %v2005
    %3534 = vmatpush1.msra.mxu0 %v2004
    %3535 = vmatprep.subr.mxu0 %v2009
    %3536 = vmatpush1.msra.mxu0 %v2008
    %3537 = vmatprep.subr.mxu0 %v2013
    %3538 = vmatpush1.msra.mxu0 %v2012
    %3539 = vmatprep.subr.mxu0 %v2017
    %3540 = vmatpush1.msra.mxu0 %v2016
    %3541 = vmatprep.subr.mxu0 %v2021
    %3542 = vmatpush1.msra.mxu0 %v2020
    %3543 = vmatprep.subr.mxu0 %v2025
    %3544 = vmatpush1.msra.mxu0 %v2024
    %3545 = vmatprep.subr.mxu0 %v2029
    %3546 = vmatpush1.msra.mxu0 %v2028
    %3547 = vmatprep.subr.mxu0 %v2033
    %3548 = vmatpush1.msra.mxu0 %v2032
    %3549 = vmatprep.subr.mxu0 %v2037
    %3550 = vmatpush1.msra.mxu0 %v2036
    %3551 = vmatprep.subr.mxu0 %v2041
    %3552 = vmatpush1.msra.mxu0 %v2040
    %3553 = vmatprep.subr.mxu0 %v2045
    %3554 = vmatpush1.msra.mxu0 %v2044
    %3555 = vmatprep.subr.mxu0 %v2049
    %3556 = vmatpush1.msra.mxu0 %v2048
    %3557 = vmatprep.subr.mxu0 %v2053
    %3558 = vmatpush1.msra.mxu0 %v2052
    %3559 = vmatprep.subr.mxu0 %v2057
    %3560 = vmatpush1.msra.mxu0 %v2056
    %3561 = vmatprep.subr.mxu0 %v2061
    %3562 = vmatpush1.msra.mxu0 %v2060
    %3563 = vmatprep.subr.mxu0 %v2065
    %3564 = vmatpush1.msra.mxu0 %v2064
    %3565 = vmatprep.subr.mxu0 0.0
    %3566 = vmatpush1.msra.mxu0 0.0
    %3567 = vmatprep.subr.mxu0 0.0
    %3568 = vmatpush1.msra.mxu0 0.0
    %3569 = vmatprep.subr.mxu0 0.0
    %3570 = vmatpush1.msra.mxu0 0.0
    %3571 = vmatprep.subr.mxu0 0.0
    %3572 = vmatpush1.msra.mxu0 0.0
    %3573 = vmatprep.subr.mxu0 0.0
    %3574 = vmatpush1.msra.mxu0 0.0
    %3575 = vmatprep.subr.mxu0 0.0
    %3576 = vmatpush1.msra.mxu0 0.0
    %3577 = vmatprep.subr.mxu0 0.0
    %3578 = vmatpush1.msra.mxu0 0.0
    %3579 = vmatprep.subr.mxu0 0.0
    %3580 = vmatpush1.msra.mxu0 0.0
    %3581 = vmatprep.subr.mxu0 0.0
    %3582 = vmatpush1.msra.mxu0 0.0
    %3583 = vmatprep.subr.mxu0 0.0
    %3584 = vmatpush1.msra.mxu0 0.0
    %3585 = vmatprep.subr.mxu0 0.0
    %3586 = vmatpush1.msra.mxu0 0.0
    %3587 = vmatprep.subr.mxu0 0.0
    %3588 = vmatpush1.msra.mxu0 0.0
    %3589 = vmatprep.subr.mxu0 0.0
    %3590 = vmatpush1.msra.mxu0 0.0
    %3591 = vmatprep.subr.mxu0 0.0
    %3592 = vmatpush1.msra.mxu0 0.0
    %3593 = vmatprep.subr.mxu0 0.0
    %3594 = vmatpush1.msra.mxu0 0.0
    %3595 = vmatprep.subr.mxu0 0.0
    %3596 = vmatpush1.msra.mxu0 0.0
    %3597 = vmatprep.mubr.f32.mxu0 0.0
    %3598 = vmatmul.mubr.f32.gmra.mrb[0].mxu0 %v3528
    %v3599 = vpop.f32.mrb[0].mxu0
    %v3600 = vadd.f32 0.0, %v3599
    %v3601 = vpop.f32.mrb[0].mxu0
    %v3602 = vadd.f32 0.0, %v3601
    %3603 = vdwg.mxu0
    %3604 = vmatprep.subr.mxu0 %v2007
    %3605 = vmatpush1.msra.mxu0 %v2006
    %3606 = vmatprep.subr.mxu0 %v2011
    %3607 = vmatpush1.msra.mxu0 %v2010
    %3608 = vmatprep.subr.mxu0 %v2015
    %3609 = vmatpush1.msra.mxu0 %v2014
    %3610 = vmatprep.subr.mxu0 %v2019
    %3611 = vmatpush1.msra.mxu0 %v2018
    %3612 = vmatprep.subr.mxu0 %v2023
    %3613 = vmatpush1.msra.mxu0 %v2022
    %3614 = vmatprep.subr.mxu0 %v2027
    %3615 = vmatpush1.msra.mxu0 %v2026
    %3616 = vmatprep.subr.mxu0 %v2031
    %3617 = vmatpush1.msra.mxu0 %v2030
    %3618 = vmatprep.subr.mxu0 %v2035
    %3619 = vmatpush1.msra.mxu0 %v2034
    %3620 = vmatprep.subr.mxu0 %v2039
    %3621 = vmatpush1.msra.mxu0 %v2038
    %3622 = vmatprep.subr.mxu0 %v2043
    %3623 = vmatpush1.msra.mxu0 %v2042
    %3624 = vmatprep.subr.mxu0 %v2047
    %3625 = vmatpush1.msra.mxu0 %v2046
    %3626 = vmatprep.subr.mxu0 %v2051
    %3627 = vmatpush1.msra.mxu0 %v2050
    %3628 = vmatprep.subr.mxu0 %v2055
    %3629 = vmatpush1.msra.mxu0 %v2054
    %3630 = vmatprep.subr.mxu0 %v2059
    %3631 = vmatpush1.msra.mxu0 %v2058
    %3632 = vmatprep.subr.mxu0 %v2063
    %3633 = vmatpush1.msra.mxu0 %v2062
    %3634 = vmatprep.subr.mxu0 %v2067
    %3635 = vmatpush1.msra.mxu0 %v2066
    %3636 = vmatprep.subr.mxu0 0.0
    %3637 = vmatpush1.msra.mxu0 0.0
    %3638 = vmatprep.subr.mxu0 0.0
    %3639 = vmatpush1.msra.mxu0 0.0
    %3640 = vmatprep.subr.mxu0 0.0
    %3641 = vmatpush1.msra.mxu0 0.0
    %3642 = vmatprep.subr.mxu0 0.0
    %3643 = vmatpush1.msra.mxu0 0.0
    %3644 = vmatprep.subr.mxu0 0.0
    %3645 = vmatpush1.msra.mxu0 0.0
    %3646 = vmatprep.subr.mxu0 0.0
    %3647 = vmatpush1.msra.mxu0 0.0
    %3648 = vmatprep.subr.mxu0 0.0
    %3649 = vmatpush1.msra.mxu0 0.0
    %3650 = vmatprep.subr.mxu0 0.0
    %3651 = vmatpush1.msra.mxu0 0.0
    %3652 = vmatprep.subr.mxu0 0.0
    %3653 = vmatpush1.msra.mxu0 0.0
    %3654 = vmatprep.subr.mxu0 0.0
    %3655 = vmatpush1.msra.mxu0 0.0
    %3656 = vmatprep.subr.mxu0 0.0
    %3657 = vmatpush1.msra.mxu0 0.0
    %3658 = vmatprep.subr.mxu0 0.0
    %3659 = vmatpush1.msra.mxu0 0.0
    %3660 = vmatprep.subr.mxu0 0.0
    %3661 = vmatpush1.msra.mxu0 0.0
    %3662 = vmatprep.subr.mxu0 0.0
    %3663 = vmatpush1.msra.mxu0 0.0
    %3664 = vmatprep.subr.mxu0 0.0
    %3665 = vmatpush1.msra.mxu0 0.0
    %3666 = vmatprep.subr.mxu0 0.0
    %3667 = vmatpush1.msra.mxu0 0.0
    %3668 = vmatprep.mubr.f32.mxu0 0.0
    %3669 = vmatmul.mubr.f32.gmra.mrb[0].mxu0 %v3528
    %v3670 = vpop.f32.mrb[0].mxu0
    %v3671 = vadd.f32 0.0, %v3670
    %v3672 = vpop.f32.mrb[0].mxu0
    %v3673 = vadd.f32 0.0, %v3672
    %3674 = vdwg.mxu0
    %v3675 = vadd.f32 %v3529, %v3600
    %v3676 = vadd.f32 %v3530, %v3602
    %v3677 = vadd.f32 %v3531, %v3671
    %v3678 = vadd.f32 %v3532, %v3673
    %v3679 = vtanh.pop %v3675
    %v3680 = vtanh.pop %v3676
    %v3681 = vtanh.pop %v3677
    %v3682 = vtanh.pop %v3678
    %v3683 = vmul.f32 %v3679, %v106
    %v3684 = vmul.f32 %v3680, %v110
    %v3685 = vmul.f32 %v3681, %v114
    %v3686 = vmul.f32 %v3682, %v118
    %v3687 = vadd.f32 %v3683, %v128
    %v3688 = vadd.f32 %v3684, %v132
    %v3689 = vadd.f32 %v3685, %v136
    %v3690 = vadd.f32 %v3686, %v140
    %v3691 = vmul.f32 %v3688, %v3526
    %v3692 = vmul.f32 %v3687, %v3689
    %v3693 = vadd.f32 %v3691, %v3692
    %v3694 = vtanh.pop %v3693
    %v3695 = vmul.f32 %v3690, %v3694
    %3696 = vst [vmem:[%s2356] sm:$0xff] %v3695
    %3697 = vst [vmem:[%s2358] sm:$0xff] %v3693
    // Predicated region
    $region66: #{lstm_model_forward.1} parent=1 // pred_check
      %p3698 = pneg %p93
    $region67: #{lstm_model_forward.1} parent=1 // pred_check_branch
      %3700 = sbr.rel (%p3698) target = $region69
    $region68: #{lstm_model_forward.1} parent=1 // pred_region
      %v3701 = vld [vmem:[%s9] sm:$0xff]
      %v3702 = vld [vmem:[%s9 + $0x8] sm:$0xff]
      %v3703 = vld [vmem:[%s9 + $0x10] sm:$0xff]
      %v3704 = vld [vmem:[%s9 + $0x18] sm:$0xff]
      %v3705 = vld [vmem:[%s9 + $0x20] sm:$0xff]
      %v3706 = vld [vmem:[%s9 + $0x28] sm:$0xff]
      %v3707 = vld [vmem:[%s9 + $0x30] sm:$0xff]
      %v3708 = vld [vmem:[%s9 + $0x38] sm:$0xff]
      %v3709 = vld [vmem:[%s9 + $0x40] sm:$0xff]
      %v3710 = vld [vmem:[%s9 + $0x48] sm:$0xff]
      %v3711 = vld [vmem:[%s9 + $0x50] sm:$0xff]
      %v3712 = vld [vmem:[%s9 + $0x58] sm:$0xff]
      %v3713 = vld [vmem:[%s9 + $0x60] sm:$0xff]
      %v3714 = vld [vmem:[%s9 + $0x68] sm:$0xff]
      %v3715 = vld [vmem:[%s9 + $0x70] sm:$0xff]
      %v3716 = vld [vmem:[%s9 + $0x78] sm:$0xff]
      %v3717 = vld [vmem:[%s10] sm:$0x1]
      %v3719 = vlaneseq
      %v3720 = vshrl.u32 %v3719, 7
      %v3721 = vsub.s32 0, %v3720
      %v3722 = vrot.slane %v3717, %v3721
      %3724 = vmatprep.subr.mxu0 0.0
      %3725 = vmatpush1.msra.mxu0 %v3701
      %3726 = vmatprep.subr.mxu0 0.0
      %3727 = vmatpush1.msra.mxu0 %v3702
      %3728 = vmatprep.subr.mxu0 0.0
      %3729 = vmatpush1.msra.mxu0 %v3703
      %3730 = vmatprep.subr.mxu0 0.0
      %3731 = vmatpush1.msra.mxu0 %v3704
      %3732 = vmatprep.subr.mxu0 0.0
      %3733 = vmatpush1.msra.mxu0 %v3705
      %3734 = vmatprep.subr.mxu0 0.0
      %3735 = vmatpush1.msra.mxu0 %v3706
      %3736 = vmatprep.subr.mxu0 0.0
      %3737 = vmatpush1.msra.mxu0 %v3707
      %3738 = vmatprep.subr.mxu0 0.0
      %3739 = vmatpush1.msra.mxu0 %v3708
      %3740 = vmatprep.subr.mxu0 0.0
      %3741 = vmatpush1.msra.mxu0 %v3709
      %3742 = vmatprep.subr.mxu0 0.0
      %3743 = vmatpush1.msra.mxu0 %v3710
      %3744 = vmatprep.subr.mxu0 0.0
      %3745 = vmatpush1.msra.mxu0 %v3711
      %3746 = vmatprep.subr.mxu0 0.0
      %3747 = vmatpush1.msra.mxu0 %v3712
      %3748 = vmatprep.subr.mxu0 0.0
      %3749 = vmatpush1.msra.mxu0 %v3713
      %3750 = vmatprep.subr.mxu0 0.0
      %3751 = vmatpush1.msra.mxu0 %v3714
      %3752 = vmatprep.subr.mxu0 0.0
      %3753 = vmatpush1.msra.mxu0 %v3715
      %3754 = vmatprep.subr.mxu0 0.0
      %3755 = vmatpush1.msra.mxu0 %v3716
      %3756 = vmatprep.subr.mxu0 0.0
      %3757 = vmatpush1.msra.mxu0 0.0
      %3758 = vmatprep.subr.mxu0 0.0
      %3759 = vmatpush1.msra.mxu0 0.0
      %3760 = vmatprep.subr.mxu0 0.0
      %3761 = vmatpush1.msra.mxu0 0.0
      %3762 = vmatprep.subr.mxu0 0.0
      %3763 = vmatpush1.msra.mxu0 0.0
      %3764 = vmatprep.subr.mxu0 0.0
      %3765 = vmatpush1.msra.mxu0 0.0
      %3766 = vmatprep.subr.mxu0 0.0
      %3767 = vmatpush1.msra.mxu0 0.0
      %3768 = vmatprep.subr.mxu0 0.0
      %3769 = vmatpush1.msra.mxu0 0.0
      %3770 = vmatprep.subr.mxu0 0.0
      %3771 = vmatpush1.msra.mxu0 0.0
      %3772 = vmatprep.subr.mxu0 0.0
      %3773 = vmatpush1.msra.mxu0 0.0
      %3774 = vmatprep.subr.mxu0 0.0
      %3775 = vmatpush1.msra.mxu0 0.0
      %3776 = vmatprep.subr.mxu0 0.0
      %3777 = vmatpush1.msra.mxu0 0.0
      %3778 = vmatprep.subr.mxu0 0.0
      %3779 = vmatpush1.msra.mxu0 0.0
      %3780 = vmatprep.subr.mxu0 0.0
      %3781 = vmatpush1.msra.mxu0 0.0
      %3782 = vmatprep.subr.mxu0 0.0
      %3783 = vmatpush1.msra.mxu0 0.0
      %3784 = vmatprep.subr.mxu0 0.0
      %3785 = vmatpush1.msra.mxu0 0.0
      %3786 = vmatprep.subr.mxu0 0.0
      %3787 = vmatpush1.msra.mxu0 0.0
      %3788 = vmatprep.mubr.f32.mxu0 0.0
      %3789 = vmatmul.mubr.f32.gmra.mrb[0].mxu0 %v3695
      %v3790 = vpop.f32.mrb[0].mxu0
      %v3791 = vadd.f32 %v3722, %v3790
      %v3792 = vpop.f32.mrb[0].mxu0
      %3793 = vdwg.mxu0
      %3794 = vst [vmem:[%s11] sm:$0xff] %v3791
    $region69: #{lstm_model_forward.1} parent=1 // pred_fallthru
      _
    // Predicated region
    $region70: #{lstm_model_forward.1} parent=1 // pred_check
      _
    $region71: #{lstm_model_forward.1} parent=1 // pred_check_branch
      %3796 = sbr.rel (0) target = $region73
    $region72: #{lstm_model_forward.1} parent=1 // pred_region
      _
    $region73: #{lstm_model_forward.1} parent=1 // pred_fallthru
      _
    // Predicated region
    $region74: #{lstm_model_forward.1} parent=1 // pred_check
      _
    $region75: #{lstm_model_forward.1} parent=1 // pred_check_branch
      %3798 = sbr.rel (0) target = $region77
    $region76: #{lstm_model_forward.1} parent=1 // pred_region
      _
    $region77: #{lstm_model_forward.1} parent=1 // pred_fallthru
      _
    %3799 = vsyncpa [#allocation7], 1
    %3800 = vsyncpa [#allocation9], 1
    %3801 = vsyncpa [#allocation12], 1

</llo_original>
